<compile_context>
chip_gen: v7x
topology: tpu7x:2x2x1
jax: 0.10.0
libtpu: 0.0.40
codegen_flags: <defaults>
</compile_context>

<pallas_src>
import jax
import jax.numpy as jnp
from jax.experimental import pallas as pl
from jax.experimental.pallas import tpu as pltpu


def _pick_epilogue_dtype():
    """bf16 epilogue on v6e/v7x (bf16 VALU), f32 on v5e and older."""
    try:
        kind = jax.devices()[0].device_kind.lower()
    except Exception:
        return jnp.float32
    if any(v in kind for v in ("v2", "v3", "v4", "v5")):
        return jnp.float32
    return jnp.bfloat16


def _make_resmlp_kernel(n_before: int, n_after: int, hidden_dim: int,
                        compute_dtype, epilogue_dtype):
    """Kernel body (layers unrolled at trace time).

    Ref order: x [tm, in_dim] f32, w_in(fused) [2H|H, in] bf16, b_in [2H|H, 1] f32,
               (w_b [H,H], b_b [H,1]) * n_before, (w_a [out,H], b_a [out,1]) * n_after,
               out [tm, out_dim].
    Compute is done in the transposed [C, tm] layout (points in lanes).
    """

    def kernel(*refs):
        idx = 0
        x_ref = refs[idx]; idx += 1
        w_in_ref, b_in_ref = refs[idx], refs[idx + 1]; idx += 2
        wb_before = []
        for _ in range(n_before):
            wb_before.append((refs[idx], refs[idx + 1])); idx += 2
        wb_after = []
        for _ in range(n_after):
            wb_after.append((refs[idx], refs[idx + 1])); idx += 2
        o_ref = refs[idx]

        def layer(w_ref, b_ref, v):
            # MXU: bf16 x bf16 -> f32 accumulate; epilogue in epilogue_dtype on VPU.
            acc = jnp.dot(w_ref[...], v.astype(compute_dtype),
                          preferred_element_type=jnp.float32)
            acc = acc.astype(epilogue_dtype) + b_ref[...].astype(epilogue_dtype)
            return jnp.maximum(acc, 0)           # activation_fn = ReLU

        # In-kernel transpose to the [in_dim, tm] compute layout (XLU, cheap);
        # replaces a full-HBM XLA transpose+cast pass in the wrapper.
        x_t = jnp.transpose(x_ref[...])          # [in_dim, tm] f32

        # Fused in_layer (+ skip_proj when n_before > 0): single MXU pass on x.
        h = layer(w_in_ref, b_in_ref, x_t)       # [H or 2H, tm]

        if n_before > 0:
            x = h[:hidden_dim, :]                # in_layer output
            inp_proj = h[hidden_dim:, :]         # skip_proj output (ReLU'd, as in module)
            for w_ref, b_ref in wb_before:
                x = layer(w_ref, b_ref, x)
            x = x + inp_proj                     # residual add
        else:
            x = h

        for w_ref, b_ref in wb_after:
            x = layer(w_ref, b_ref, x)

        # In-kernel transpose back to row-major [tm, out_dim] and store.
        # Last dim 48 < 128 -> masked stores, but byte traffic is minimal and
        # we avoid the full-HBM XLA un-transpose pass entirely.
        o_ref[...] = jnp.transpose(x.astype(o_ref.dtype))

    return kernel


def _pack_params_for_kernel(params, n_before, n_after):
    """Convert [in,out]-weight / [1,out]-bias params to kernel layout:
    bf16 [out,in] weights, f32 [out,1] biases; fuse in_layer + skip_proj."""
    idx = 0
    w_in, b_in = params[idx], params[idx + 1]; idx += 2
    if n_before > 0:
        w_skip, b_skip = params[idx], params[idx + 1]; idx += 2
        w_fused = jnp.concatenate([w_in, w_skip], axis=1)   # [in, 2H]
        b_fused = jnp.concatenate([b_in, b_skip], axis=1)   # [1, 2H]
    else:
        w_fused, b_fused = w_in, b_in

    packed = [w_fused.T.astype(jnp.bfloat16), b_fused.T.astype(jnp.float32)]
    for _ in range(n_before + n_after):
        w, b = params[idx], params[idx + 1]; idx += 2
        packed.append(w.T.astype(jnp.bfloat16))
        packed.append(b.T.astype(jnp.float32))
    return packed


def resmlp_block_pallas(x, packed_params, n_before, n_after, hidden_dim, out_dim,
                        tm=8192, out_dtype=jnp.float32, epilogue_dtype=None):
    """x: [N, in_dim] float32 (row-major). Returns [N, out_dim] in out_dtype."""
    N, in_dim = x.shape
    eff_hidden = hidden_dim if n_after > 0 else out_dim   # matches module __init__
    if epilogue_dtype is None:
        epilogue_dtype = _pick_epilogue_dtype()

    # Large lane tiles (multiple of 128), clamped to the 128-rounded problem
    # size so tiny inputs don't over-allocate.
    tm = max(128, (tm // 128) * 128)
    tm = min(tm, pl.cdiv(N, 128) * 128)
    n_tiles = pl.cdiv(N, tm)   # non-divisible N: edge block is masked by Pallas

    kernel = _make_resmlp_kernel(n_before, n_after, eff_hidden,
                                 jnp.bfloat16, epilogue_dtype)

    x_spec = pl.BlockSpec((tm, in_dim), lambda i: (i, 0))
    # Weights/biases are tiny with constant index_maps -> resident in VMEM
    # across all grid steps.
    param_specs = [pl.BlockSpec(p.shape, lambda i: (0, 0)) for p in packed_params]
    out_spec = pl.BlockSpec((tm, out_dim), lambda i: (i, 0))

    return pl.pallas_call(
        kernel,
        out_shape=jax.ShapeDtypeStruct((N, out_dim), out_dtype),
        grid_spec=pltpu.PrefetchScalarGridSpec(
            num_scalar_prefetch=0,
            grid=(n_tiles,),
            in_specs=[x_spec] + param_specs,
            out_specs=out_spec,
        ),
        compiler_params=pltpu.CompilerParams(
            dimension_semantics=("parallel",)),
    )(x, *packed_params)


def resmlp_block_ref(x, params, n_before, n_after):
    """Pure-JAX f32 reference mirroring the PyTorch forward (un-packed params)."""
    idx = 0
    w_in, b_in = params[idx], params[idx + 1]; idx += 2
    if n_before > 0:
        w_skip, b_skip = params[idx], params[idx + 1]; idx += 2
    wb_before = []
    for _ in range(n_before):
        wb_before.append((params[idx], params[idx + 1])); idx += 2
    wb_after = []
    for _ in range(n_after):
        wb_after.append((params[idx], params[idx + 1])); idx += 2

    act = lambda v: jnp.maximum(v, 0.0)
    h = act(x @ w_in + b_in)
    if n_before > 0:
        for w, b in wb_before:
            h = act(h @ w + b)
        h = h + act(x @ w_skip + b_skip)
    for w, b in wb_after:
        h = act(h @ w + b)
    return h


def _init_params(key, in_dim, hidden_dim, out_dim, n_before, n_after):
    """Deterministic synthetic parameters (shapes match the nn.Module __init__)."""
    hidden = hidden_dim if n_after > 0 else out_dim   # module's hidden_dim rule
    params = []

    def linear(key, fan_in, fan_out):
        kw, kb = jax.random.split(key)
        w = jax.random.normal(kw, (fan_in, fan_out), jnp.float32) * (1.0 / jnp.sqrt(fan_in))
        b = jax.random.normal(kb, (1, fan_out), jnp.float32) * 0.01
        return w, b

    keys = jax.random.split(key, 2 + n_before + n_after)
    ki = 0

    # in_layer: Linear(in_dim, hidden)
    params.extend(linear(keys[ki], in_dim, hidden)); ki += 1
    if n_before > 0:
        # skip_proj: Linear(in_dim, hidden)
        params.extend(linear(keys[ki], in_dim, hidden)); ki += 1
        # before_skip: n_before x Linear(hidden, hidden)
        for _ in range(n_before):
            params.extend(linear(keys[ki], hidden, hidden)); ki += 1
    # after_skip: n_after x Linear(hidden, out_dim)
    for _ in range(n_after):
        params.extend(linear(keys[ki], hidden, out_dim)); ki += 1

    return params


if __name__ == "__main__":
    # Config consistent with the module (activation_fn = ReLU):
    #   in_dim=16, hidden_dim=32, out_dim=48,
    #   num_hidden_layers_before=2, num_hidden_layers_after=1
    in_dim, hidden_dim, out_dim = 16, 32, 48
    n_before, n_after = 2, 1
    N = 1000  # not a multiple of the tile -> exercises the masked edge block

    key = jax.random.PRNGKey(0)
    k_x, k_p = jax.random.split(key)
    x = jax.random.normal(k_x, (N, in_dim), jnp.float32)
    params = _init_params(k_p, in_dim, hidden_dim, out_dim, n_before, n_after)
    packed = _pack_params_for_kernel(params, n_before, n_after)

    out = resmlp_block_pallas(x, packed, n_before, n_after, hidden_dim, out_dim)
    out = jax.block_until_ready(out)

    ref = resmlp_block_ref(x, params, n_before, n_after)
    assert out.shape == (N, out_dim)
    # bf16 MXU operands (+ bf16 epilogue on v6e/v7x) vs f32 reference -> loose tolerance.
    assert jnp.allclose(out, ref, atol=5e-2, rtol=5e-2), "mismatch vs reference"

    print("KERNEL_OK")
</pallas_src>

<mosaic_0001>
module attributes {stable_mosaic.version = 11 : i64} {
  func.func @kernel(%arg0: i32, %arg1: memref<1024x16xf32, #tpu.memory_space<vmem>>, %arg2: memref<64x16xbf16, #tpu.memory_space<vmem>>, %arg3: memref<64x1xf32, #tpu.memory_space<vmem>>, %arg4: memref<32x32xbf16, #tpu.memory_space<vmem>>, %arg5: memref<32x1xf32, #tpu.memory_space<vmem>>, %arg6: memref<32x32xbf16, #tpu.memory_space<vmem>>, %arg7: memref<32x1xf32, #tpu.memory_space<vmem>>, %arg8: memref<48x32xbf16, #tpu.memory_space<vmem>>, %arg9: memref<48x1xf32, #tpu.memory_space<vmem>>, %arg10: memref<1024x48xf32, #tpu.memory_space<vmem>>) attributes {dimension_semantics = [#tpu.dimension_semantics<parallel>], iteration_bounds = array<i64: 1>, scalar_prefetch = 0 : i64, scratch_operands = 0 : i64, tpu.core_type = #tpu.core_type<tc>, window_params = [{transform_indices = @transform_0, window_bounds = array<i64: 1024, 16>}, {pipeline_mode = #tpu.pipeline_mode<synchronous>, transform_indices = @transform_1, window_bounds = array<i64: 64, 16>}, {pipeline_mode = #tpu.pipeline_mode<synchronous>, transform_indices = @transform_2, window_bounds = array<i64: 64, 1>}, {pipeline_mode = #tpu.pipeline_mode<synchronous>, transform_indices = @transform_3, window_bounds = array<i64: 32, 32>}, {pipeline_mode = #tpu.pipeline_mode<synchronous>, transform_indices = @transform_4, window_bounds = array<i64: 32, 1>}, {pipeline_mode = #tpu.pipeline_mode<synchronous>, transform_indices = @transform_5, window_bounds = array<i64: 32, 32>}, {pipeline_mode = #tpu.pipeline_mode<synchronous>, transform_indices = @transform_6, window_bounds = array<i64: 32, 1>}, {pipeline_mode = #tpu.pipeline_mode<synchronous>, transform_indices = @transform_7, window_bounds = array<i64: 48, 32>}, {pipeline_mode = #tpu.pipeline_mode<synchronous>, transform_indices = @transform_8, window_bounds = array<i64: 48, 1>}, {transform_indices = @transform_9, window_bounds = array<i64: 1024, 48>}]} {
    %c0 = arith.constant 0 : index
    %c0_0 = arith.constant 0 : index
    %0 = vector.load %arg1[%c0, %c0_0] : memref<1024x16xf32, #tpu.memory_space<vmem>>, vector<1024x16xf32>
    %1 = tpu.transpose %0, [1, 0] : vector<1024x16xf32> -> vector<16x1024xf32>
    %c0_1 = arith.constant 0 : index
    %c0_2 = arith.constant 0 : index
    %2 = vector.load %arg2[%c0_1, %c0_2] : memref<64x16xbf16, #tpu.memory_space<vmem>>, vector<64x16xbf16>
    %3 = arith.truncf %1 : vector<16x1024xf32> to vector<16x1024xbf16>
    %cst = arith.constant dense<0.000000e+00> : vector<64x1024xf32>
    %4 = tpu.matmul %2, %3, %cst {dimension_numbers = #tpu.dot_dimension_numbers<[1], [0], [0], [1], [0, 0, 1, 1], [], []>} : vector<64x16xbf16>, vector<16x1024xbf16>, vector<64x1024xf32> -> vector<64x1024xf32>
    %5 = arith.truncf %4 : vector<64x1024xf32> to vector<64x1024xbf16>
    %c0_3 = arith.constant 0 : index
    %c0_4 = arith.constant 0 : index
    %6 = vector.load %arg3[%c0_3, %c0_4] : memref<64x1xf32, #tpu.memory_space<vmem>>, vector<64x1xf32>
    %7 = arith.truncf %6 : vector<64x1xf32> to vector<64x1xbf16>
    %8 = vector.broadcast %7 : vector<64x1xbf16> to vector<64x1024xbf16>
    %9 = arith.addf %5, %8 : vector<64x1024xbf16>
    %cst_5 = arith.constant 0.000000e+00 : bf16
    %10 = vector.broadcast %cst_5 : bf16 to vector<64x1024xbf16>
    %11 = arith.maximumf %9, %10 : vector<64x1024xbf16>
    %12 = vector.extract_strided_slice %11 {offsets = [0, 0], sizes = [32, 1024], strides = [1, 1]} : vector<64x1024xbf16> to vector<32x1024xbf16>
    %13 = vector.extract_strided_slice %11 {offsets = [32, 0], sizes = [32, 1024], strides = [1, 1]} : vector<64x1024xbf16> to vector<32x1024xbf16>
    %c0_6 = arith.constant 0 : index
    %c0_7 = arith.constant 0 : index
    %14 = vector.load %arg4[%c0_6, %c0_7] : memref<32x32xbf16, #tpu.memory_space<vmem>>, vector<32x32xbf16>
    %cst_8 = arith.constant dense<0.000000e+00> : vector<32x1024xf32>
    %15 = tpu.matmul %14, %12, %cst_8 {dimension_numbers = #tpu.dot_dimension_numbers<[1], [0], [0], [1], [0, 0, 1, 1], [], []>} : vector<32x32xbf16>, vector<32x1024xbf16>, vector<32x1024xf32> -> vector<32x1024xf32>
    %16 = arith.truncf %15 : vector<32x1024xf32> to vector<32x1024xbf16>
    %c0_9 = arith.constant 0 : index
    %c0_10 = arith.constant 0 : index
    %17 = vector.load %arg5[%c0_9, %c0_10] : memref<32x1xf32, #tpu.memory_space<vmem>>, vector<32x1xf32>
    %18 = arith.truncf %17 : vector<32x1xf32> to vector<32x1xbf16>
    %19 = vector.broadcast %18 : vector<32x1xbf16> to vector<32x1024xbf16>
    %20 = arith.addf %16, %19 : vector<32x1024xbf16>
    %cst_11 = arith.constant 0.000000e+00 : bf16
    %21 = vector.broadcast %cst_11 : bf16 to vector<32x1024xbf16>
    %22 = arith.maximumf %20, %21 : vector<32x1024xbf16>
    %c0_12 = arith.constant 0 : index
    %c0_13 = arith.constant 0 : index
    %23 = vector.load %arg6[%c0_12, %c0_13] : memref<32x32xbf16, #tpu.memory_space<vmem>>, vector<32x32xbf16>
    %cst_14 = arith.constant dense<0.000000e+00> : vector<32x1024xf32>
    %24 = tpu.matmul %23, %22, %cst_14 {dimension_numbers = #tpu.dot_dimension_numbers<[1], [0], [0], [1], [0, 0, 1, 1], [], []>} : vector<32x32xbf16>, vector<32x1024xbf16>, vector<32x1024xf32> -> vector<32x1024xf32>
    %25 = arith.truncf %24 : vector<32x1024xf32> to vector<32x1024xbf16>
    %c0_15 = arith.constant 0 : index
    %c0_16 = arith.constant 0 : index
    %26 = vector.load %arg7[%c0_15, %c0_16] : memref<32x1xf32, #tpu.memory_space<vmem>>, vector<32x1xf32>
    %27 = arith.truncf %26 : vector<32x1xf32> to vector<32x1xbf16>
    %28 = vector.broadcast %27 : vector<32x1xbf16> to vector<32x1024xbf16>
    %29 = arith.addf %25, %28 : vector<32x1024xbf16>
    %cst_17 = arith.constant 0.000000e+00 : bf16
    %30 = vector.broadcast %cst_17 : bf16 to vector<32x1024xbf16>
    %31 = arith.maximumf %29, %30 : vector<32x1024xbf16>
    %32 = arith.addf %31, %13 : vector<32x1024xbf16>
    %c0_18 = arith.constant 0 : index
    %c0_19 = arith.constant 0 : index
    %33 = vector.load %arg8[%c0_18, %c0_19] : memref<48x32xbf16, #tpu.memory_space<vmem>>, vector<48x32xbf16>
    %cst_20 = arith.constant dense<0.000000e+00> : vector<48x1024xf32>
    %34 = tpu.matmul %33, %32, %cst_20 {dimension_numbers = #tpu.dot_dimension_numbers<[1], [0], [0], [1], [0, 0, 1, 1], [], []>} : vector<48x32xbf16>, vector<32x1024xbf16>, vector<48x1024xf32> -> vector<48x1024xf32>
    %35 = arith.truncf %34 : vector<48x1024xf32> to vector<48x1024xbf16>
    %c0_21 = arith.constant 0 : index
    %c0_22 = arith.constant 0 : index
    %36 = vector.load %arg9[%c0_21, %c0_22] : memref<48x1xf32, #tpu.memory_space<vmem>>, vector<48x1xf32>
    %37 = arith.truncf %36 : vector<48x1xf32> to vector<48x1xbf16>
    %38 = vector.broadcast %37 : vector<48x1xbf16> to vector<48x1024xbf16>
    %39 = arith.addf %35, %38 : vector<48x1024xbf16>
    %cst_23 = arith.constant 0.000000e+00 : bf16
    %40 = vector.broadcast %cst_23 : bf16 to vector<48x1024xbf16>
    %41 = arith.maximumf %39, %40 : vector<48x1024xbf16>
    %42 = arith.extf %41 : vector<48x1024xbf16> to vector<48x1024xf32>
    %43 = tpu.transpose %42, [1, 0] : vector<48x1024xf32> -> vector<1024x48xf32>
    %c0_24 = arith.constant 0 : index
    %c0_25 = arith.constant 0 : index
    %44 = vector.load %arg10[%c0_24, %c0_25] : memref<1024x48xf32, #tpu.memory_space<vmem>>, vector<1024x48xf32>
    tpu.vector_store %arg10[%c0_24, %c0_25], %43 {strides = array<i32>} : memref<1024x48xf32, #tpu.memory_space<vmem>>, vector<1024x48xf32>,
    return
  }
  func.func @transform_0(%arg0: i32) -> (i32, i32) {
    %c0_i32 = arith.constant 0 : i32
    %c0_i32_0 = arith.constant 0 : i32
    return %arg0, %c0_i32 : i32, i32
  }
  func.func @transform_1(%arg0: i32) -> (i32, i32) {
    %c0_i32 = arith.constant 0 : i32
    %c0_i32_0 = arith.constant 0 : i32
    %c0_i32_1 = arith.constant 0 : i32
    return %c0_i32, %c0_i32_0 : i32, i32
  }
  func.func @transform_2(%arg0: i32) -> (i32, i32) {
    %c0_i32 = arith.constant 0 : i32
    %c0_i32_0 = arith.constant 0 : i32
    %c0_i32_1 = arith.constant 0 : i32
    return %c0_i32, %c0_i32_0 : i32, i32
  }
  func.func @transform_3(%arg0: i32) -> (i32, i32) {
    %c0_i32 = arith.constant 0 : i32
    %c0_i32_0 = arith.constant 0 : i32
    %c0_i32_1 = arith.constant 0 : i32
    return %c0_i32, %c0_i32_0 : i32, i32
  }
  func.func @transform_4(%arg0: i32) -> (i32, i32) {
    %c0_i32 = arith.constant 0 : i32
    %c0_i32_0 = arith.constant 0 : i32
    %c0_i32_1 = arith.constant 0 : i32
    return %c0_i32, %c0_i32_0 : i32, i32
  }
  func.func @transform_5(%arg0: i32) -> (i32, i32) {
    %c0_i32 = arith.constant 0 : i32
    %c0_i32_0 = arith.constant 0 : i32
    %c0_i32_1 = arith.constant 0 : i32
    return %c0_i32, %c0_i32_0 : i32, i32
  }
  func.func @transform_6(%arg0: i32) -> (i32, i32) {
    %c0_i32 = arith.constant 0 : i32
    %c0_i32_0 = arith.constant 0 : i32
    %c0_i32_1 = arith.constant 0 : i32
    return %c0_i32, %c0_i32_0 : i32, i32
  }
  func.func @transform_7(%arg0: i32) -> (i32, i32) {
    %c0_i32 = arith.constant 0 : i32
    %c0_i32_0 = arith.constant 0 : i32
    %c0_i32_1 = arith.constant 0 : i32
    return %c0_i32, %c0_i32_0 : i32, i32
  }
  func.func @transform_8(%arg0: i32) -> (i32, i32) {
    %c0_i32 = arith.constant 0 : i32
    %c0_i32_0 = arith.constant 0 : i32
    %c0_i32_1 = arith.constant 0 : i32
    return %c0_i32, %c0_i32_0 : i32, i32
  }
  func.func @transform_9(%arg0: i32) -> (i32, i32) {
    %c0_i32 = arith.constant 0 : i32
    %c0_i32_0 = arith.constant 0 : i32
    return %arg0, %c0_i32 : i32, i32
  }
}

</mosaic_0001>

<llo_original>
// kernel: tpu_custom_call.1
$region0: #{tpu_custom_call.1}
  #allocation0 [shape = 'u32[]', space=smem, size = 0x4, offset = 0x4, fixed_abs, tag = 'smem constant byte address 0x4 - core index']
  #allocation1 [shape = 'u32[144,128]{1,0:T(1,128)}', space=vmem, size = 0x12000, scoped, tag = 'internal scratch']
  %s0 = inlined_call_operand.vmem [shape: f32[1000,16], index: 0, kind: input, shape index: {}]
  %s1 = inlined_call_operand.vmem [shape: bf16[64,16], index: 1, kind: input, shape index: {}]
  %s2 = inlined_call_operand.vmem [shape: f32[64,1], index: 2, kind: input, shape index: {}]
  %s3 = inlined_call_operand.vmem [shape: bf16[32,32], index: 3, kind: input, shape index: {}]
  %s4 = inlined_call_operand.vmem [shape: f32[32,1], index: 4, kind: input, shape index: {}]
  %s5 = inlined_call_operand.vmem [shape: bf16[32,32], index: 5, kind: input, shape index: {}]
  %s6 = inlined_call_operand.vmem [shape: f32[32,1], index: 6, kind: input, shape index: {}]
  %s7 = inlined_call_operand.vmem [shape: bf16[48,32], index: 7, kind: input, shape index: {}]
  %s8 = inlined_call_operand.vmem [shape: f32[48,1], index: 8, kind: input, shape index: {}]
  %s9 = inlined_call_operand.vmem [shape: f32[1000,48], index: 9, kind: output, shape index: {}]
  %s10 = sld [smem:[#allocation0]]
  $region80: #{tpu_custom_call.1} parent=0
    _
  %s12 = ssub.s32 1, %s10
  %s13 = scalar_select 0, %s12, %s10
  $region1: #{tpu_custom_call.1} parent=0
    #allocation2 [shape = 'u8[524288]{0}', space=vmem, size = 0x80000, scoped, tag = 'output window, operand 0, single buffered']
    // Predicated region
    $region2: #{tpu_custom_call.1} parent=1 // pred_check
      _
    $region3: #{tpu_custom_call.1} parent=1 // pred_check_branch
      %15 = sbr.rel (0) target = $region5
    $region4: #{tpu_custom_call.1} parent=1 // pred_region
      _
    $region5: #{tpu_custom_call.1} parent=1 // pred_fallthru
      _
    // Predicated region
    $region6: #{tpu_custom_call.1} parent=1 // pred_check
      _
    $region7: #{tpu_custom_call.1} parent=1 // pred_check_branch
      %17 = sbr.rel (0) target = $region9
    $region8: #{tpu_custom_call.1} parent=1 // pred_region
      _
    $region9: #{tpu_custom_call.1} parent=1 // pred_fallthru
      _
    // Predicated region
    $region10: #{tpu_custom_call.1} parent=1 // pred_check
      _
    $region11: #{tpu_custom_call.1} parent=1 // pred_check_branch
      %19 = sbr.rel (0) target = $region13
    $region12: #{tpu_custom_call.1} parent=1 // pred_region
      _
    $region13: #{tpu_custom_call.1} parent=1 // pred_fallthru
      _
    // Predicated region
    $region14: #{tpu_custom_call.1} parent=1 // pred_check
      _
    $region15: #{tpu_custom_call.1} parent=1 // pred_check_branch
      %21 = sbr.rel (0) target = $region17
    $region16: #{tpu_custom_call.1} parent=1 // pred_region
      _
    $region17: #{tpu_custom_call.1} parent=1 // pred_fallthru
      _
    // Predicated region
    $region18: #{tpu_custom_call.1} parent=1 // pred_check
      _
    $region19: #{tpu_custom_call.1} parent=1 // pred_check_branch
      %23 = sbr.rel (0) target = $region21
    $region20: #{tpu_custom_call.1} parent=1 // pred_region
      _
    $region21: #{tpu_custom_call.1} parent=1 // pred_fallthru
      _
    // Predicated region
    $region22: #{tpu_custom_call.1} parent=1 // pred_check
      _
    $region23: #{tpu_custom_call.1} parent=1 // pred_check_branch
      %25 = sbr.rel (0) target = $region25
    $region24: #{tpu_custom_call.1} parent=1 // pred_region
      _
    $region25: #{tpu_custom_call.1} parent=1 // pred_fallthru
      _
    // Predicated region
    $region26: #{tpu_custom_call.1} parent=1 // pred_check
      _
    $region27: #{tpu_custom_call.1} parent=1 // pred_check_branch
      %27 = sbr.rel (0) target = $region29
    $region28: #{tpu_custom_call.1} parent=1 // pred_region
      _
    $region29: #{tpu_custom_call.1} parent=1 // pred_fallthru
      _
    // Predicated region
    $region30: #{tpu_custom_call.1} parent=1 // pred_check
      _
    $region31: #{tpu_custom_call.1} parent=1 // pred_check_branch
      %29 = sbr.rel (0) target = $region33
    $region32: #{tpu_custom_call.1} parent=1 // pred_region
      _
    $region33: #{tpu_custom_call.1} parent=1 // pred_fallthru
      _
    // Predicated region
    $region34: #{tpu_custom_call.1} parent=1 // pred_check
      _
    $region35: #{tpu_custom_call.1} parent=1 // pred_check_branch
      %31 = sbr.rel (0) target = $region37
    $region36: #{tpu_custom_call.1} parent=1 // pred_region
      _
    $region37: #{tpu_custom_call.1} parent=1 // pred_fallthru
      _
    %v33 = vld [vmem:[%s0] sm:$0xff]
    %v34 = vld [vmem:[%s0 + $0x8] sm:$0xff]
    %v35 = vld [vmem:[%s0 + $0x10] sm:$0xff]
    %v36 = vld [vmem:[%s0 + $0x18] sm:$0xff]
    %v37 = vld [vmem:[%s0 + $0x20] sm:$0xff]
    %v38 = vld [vmem:[%s0 + $0x28] sm:$0xff]
    %v39 = vld [vmem:[%s0 + $0x30] sm:$0xff]
    %v40 = vld [vmem:[%s0 + $0x38] sm:$0xff]
    %v41 = vld [vmem:[%s0 + $0x40] sm:$0xff]
    %v42 = vld [vmem:[%s0 + $0x48] sm:$0xff]
    %v43 = vld [vmem:[%s0 + $0x50] sm:$0xff]
    %v44 = vld [vmem:[%s0 + $0x58] sm:$0xff]
    %v45 = vld [vmem:[%s0 + $0x60] sm:$0xff]
    %v46 = vld [vmem:[%s0 + $0x68] sm:$0xff]
    %v47 = vld [vmem:[%s0 + $0x70] sm:$0xff]
    %v48 = vld [vmem:[%s0 + $0x78] sm:$0xff]
    %v49 = vld [vmem:[%s0 + $0x80] sm:$0xff]
    %v50 = vld [vmem:[%s0 + $0x88] sm:$0xff]
    %v51 = vld [vmem:[%s0 + $0x90] sm:$0xff]
    %v52 = vld [vmem:[%s0 + $0x98] sm:$0xff]
    %v53 = vld [vmem:[%s0 + $0xa0] sm:$0xff]
    %v54 = vld [vmem:[%s0 + $0xa8] sm:$0xff]
    %v55 = vld [vmem:[%s0 + $0xb0] sm:$0xff]
    %v56 = vld [vmem:[%s0 + $0xb8] sm:$0xff]
    %v57 = vld [vmem:[%s0 + $0xc0] sm:$0xff]
    %v58 = vld [vmem:[%s0 + $0xc8] sm:$0xff]
    %v59 = vld [vmem:[%s0 + $0xd0] sm:$0xff]
    %v60 = vld [vmem:[%s0 + $0xd8] sm:$0xff]
    %v61 = vld [vmem:[%s0 + $0xe0] sm:$0xff]
    %v62 = vld [vmem:[%s0 + $0xe8] sm:$0xff]
    %v63 = vld [vmem:[%s0 + $0xf0] sm:$0xff]
    %v64 = vld [vmem:[%s0 + $0xf8] sm:$0xff]
    %v65 = vld [vmem:[%s0 + $0x100] sm:$0xff]
    %v66 = vld [vmem:[%s0 + $0x108] sm:$0xff]
    %v67 = vld [vmem:[%s0 + $0x110] sm:$0xff]
    %v68 = vld [vmem:[%s0 + $0x118] sm:$0xff]
    %v69 = vld [vmem:[%s0 + $0x120] sm:$0xff]
    %v70 = vld [vmem:[%s0 + $0x128] sm:$0xff]
    %v71 = vld [vmem:[%s0 + $0x130] sm:$0xff]
    %v72 = vld [vmem:[%s0 + $0x138] sm:$0xff]
    %v73 = vld [vmem:[%s0 + $0x140] sm:$0xff]
    %v74 = vld [vmem:[%s0 + $0x148] sm:$0xff]
    %v75 = vld [vmem:[%s0 + $0x150] sm:$0xff]
    %v76 = vld [vmem:[%s0 + $0x158] sm:$0xff]
    %v77 = vld [vmem:[%s0 + $0x160] sm:$0xff]
    %v78 = vld [vmem:[%s0 + $0x168] sm:$0xff]
    %v79 = vld [vmem:[%s0 + $0x170] sm:$0xff]
    %v80 = vld [vmem:[%s0 + $0x178] sm:$0xff]
    %v81 = vld [vmem:[%s0 + $0x180] sm:$0xff]
    %v82 = vld [vmem:[%s0 + $0x188] sm:$0xff]
    %v83 = vld [vmem:[%s0 + $0x190] sm:$0xff]
    %v84 = vld [vmem:[%s0 + $0x198] sm:$0xff]
    %v85 = vld [vmem:[%s0 + $0x1a0] sm:$0xff]
    %v86 = vld [vmem:[%s0 + $0x1a8] sm:$0xff]
    %v87 = vld [vmem:[%s0 + $0x1b0] sm:$0xff]
    %v88 = vld [vmem:[%s0 + $0x1b8] sm:$0xff]
    %v89 = vld [vmem:[%s0 + $0x1c0] sm:$0xff]
    %v90 = vld [vmem:[%s0 + $0x1c8] sm:$0xff]
    %v91 = vld [vmem:[%s0 + $0x1d0] sm:$0xff]
    %v92 = vld [vmem:[%s0 + $0x1d8] sm:$0xff]
    %v93 = vld [vmem:[%s0 + $0x1e0] sm:$0xff]
    %v94 = vld [vmem:[%s0 + $0x1e8] sm:$0xff]
    %v95 = vld [vmem:[%s0 + $0x1f0] sm:$0xff]
    %v96 = vld [vmem:[%s0 + $0x1f8] sm:$0xff]
    %v97 = vld [vmem:[%s0 + $0x200] sm:$0xff]
    %v98 = vld [vmem:[%s0 + $0x208] sm:$0xff]
    %v99 = vld [vmem:[%s0 + $0x210] sm:$0xff]
    %v100 = vld [vmem:[%s0 + $0x218] sm:$0xff]
    %v101 = vld [vmem:[%s0 + $0x220] sm:$0xff]
    %v102 = vld [vmem:[%s0 + $0x228] sm:$0xff]
    %v103 = vld [vmem:[%s0 + $0x230] sm:$0xff]
    %v104 = vld [vmem:[%s0 + $0x238] sm:$0xff]
    %v105 = vld [vmem:[%s0 + $0x240] sm:$0xff]
    %v106 = vld [vmem:[%s0 + $0x248] sm:$0xff]
    %v107 = vld [vmem:[%s0 + $0x250] sm:$0xff]
    %v108 = vld [vmem:[%s0 + $0x258] sm:$0xff]
    %v109 = vld [vmem:[%s0 + $0x260] sm:$0xff]
    %v110 = vld [vmem:[%s0 + $0x268] sm:$0xff]
    %v111 = vld [vmem:[%s0 + $0x270] sm:$0xff]
    %v112 = vld [vmem:[%s0 + $0x278] sm:$0xff]
    %v113 = vld [vmem:[%s0 + $0x280] sm:$0xff]
    %v114 = vld [vmem:[%s0 + $0x288] sm:$0xff]
    %v115 = vld [vmem:[%s0 + $0x290] sm:$0xff]
    %v116 = vld [vmem:[%s0 + $0x298] sm:$0xff]
    %v117 = vld [vmem:[%s0 + $0x2a0] sm:$0xff]
    %v118 = vld [vmem:[%s0 + $0x2a8] sm:$0xff]
    %v119 = vld [vmem:[%s0 + $0x2b0] sm:$0xff]
    %v120 = vld [vmem:[%s0 + $0x2b8] sm:$0xff]
    %v121 = vld [vmem:[%s0 + $0x2c0] sm:$0xff]
    %v122 = vld [vmem:[%s0 + $0x2c8] sm:$0xff]
    %v123 = vld [vmem:[%s0 + $0x2d0] sm:$0xff]
    %v124 = vld [vmem:[%s0 + $0x2d8] sm:$0xff]
    %v125 = vld [vmem:[%s0 + $0x2e0] sm:$0xff]
    %v126 = vld [vmem:[%s0 + $0x2e8] sm:$0xff]
    %v127 = vld [vmem:[%s0 + $0x2f0] sm:$0xff]
    %v128 = vld [vmem:[%s0 + $0x2f8] sm:$0xff]
    %v129 = vld [vmem:[%s0 + $0x300] sm:$0xff]
    %v130 = vld [vmem:[%s0 + $0x308] sm:$0xff]
    %v131 = vld [vmem:[%s0 + $0x310] sm:$0xff]
    %v132 = vld [vmem:[%s0 + $0x318] sm:$0xff]
    %v133 = vld [vmem:[%s0 + $0x320] sm:$0xff]
    %v134 = vld [vmem:[%s0 + $0x328] sm:$0xff]
    %v135 = vld [vmem:[%s0 + $0x330] sm:$0xff]
    %v136 = vld [vmem:[%s0 + $0x338] sm:$0xff]
    %v137 = vld [vmem:[%s0 + $0x340] sm:$0xff]
    %v138 = vld [vmem:[%s0 + $0x348] sm:$0xff]
    %v139 = vld [vmem:[%s0 + $0x350] sm:$0xff]
    %v140 = vld [vmem:[%s0 + $0x358] sm:$0xff]
    %v141 = vld [vmem:[%s0 + $0x360] sm:$0xff]
    %v142 = vld [vmem:[%s0 + $0x368] sm:$0xff]
    %v143 = vld [vmem:[%s0 + $0x370] sm:$0xff]
    %v144 = vld [vmem:[%s0 + $0x378] sm:$0xff]
    %v145 = vld [vmem:[%s0 + $0x380] sm:$0xff]
    %v146 = vld [vmem:[%s0 + $0x388] sm:$0xff]
    %v147 = vld [vmem:[%s0 + $0x390] sm:$0xff]
    %v148 = vld [vmem:[%s0 + $0x398] sm:$0xff]
    %v149 = vld [vmem:[%s0 + $0x3a0] sm:$0xff]
    %v150 = vld [vmem:[%s0 + $0x3a8] sm:$0xff]
    %v151 = vld [vmem:[%s0 + $0x3b0] sm:$0xff]
    %v152 = vld [vmem:[%s0 + $0x3b8] sm:$0xff]
    %v153 = vld [vmem:[%s0 + $0x3c0] sm:$0xff]
    %v154 = vld [vmem:[%s0 + $0x3c8] sm:$0xff]
    %v155 = vld [vmem:[%s0 + $0x3d0] sm:$0xff]
    %v156 = vld [vmem:[%s0 + $0x3d8] sm:$0xff]
    %v157 = vld [vmem:[%s0 + $0x3e0] sm:$0xff]
    %v158 = vld [vmem:[%s0 + $0x3e8] sm:$0xff]
    %v159 = vld [vmem:[%s0 + $0x3f0] sm:$0xff]
    %v160 = vld [vmem:[%s0 + $0x3f8] sm:$0xff]
    %161 = vxpose.xlu0.b32.start [1/16] %v33, 128
    %162 = vxpose.xlu0.b32.cont [2/16] %v34, 128
    %163 = vxpose.xlu0.b32.cont [3/16] %v35, 128
    %164 = vxpose.xlu0.b32.cont [4/16] %v36, 128
    %165 = vxpose.xlu0.b32.cont [5/16] %v37, 128
    %166 = vxpose.xlu0.b32.cont [6/16] %v38, 128
    %167 = vxpose.xlu0.b32.cont [7/16] %v39, 128
    %168 = vxpose.xlu0.b32.cont [8/16] %v40, 128
    %169 = vxpose.xlu0.b32.cont [9/16] %v41, 128
    %170 = vxpose.xlu0.b32.cont [10/16] %v42, 128
    %171 = vxpose.xlu0.b32.cont [11/16] %v43, 128
    %172 = vxpose.xlu0.b32.cont [12/16] %v44, 128
    %173 = vxpose.xlu0.b32.cont [13/16] %v45, 128
    %174 = vxpose.xlu0.b32.cont [14/16] %v46, 128
    %175 = vxpose.xlu0.b32.cont [15/16] %v47, 128
    %176 = vxpose.xlu0.b32.end [16/16] %v48, 128
    %v177 = vpop.trf.xlu0
    %v178 = vpop.trf.xlu0
    %v179 = vpop.trf.xlu0
    %v180 = vpop.trf.xlu0
    %v181 = vpop.trf.xlu0
    %v182 = vpop.trf.xlu0
    %v183 = vpop.trf.xlu0
    %v184 = vpop.trf.xlu0
    %v185 = vpop.trf.xlu0
    %v186 = vpop.trf.xlu0
    %v187 = vpop.trf.xlu0
    %v188 = vpop.trf.xlu0
    %v189 = vpop.trf.xlu0
    %v190 = vpop.trf.xlu0
    %v191 = vpop.trf.xlu0
    %v192 = vpop.trf.xlu0
    %193 = vxpose.xlu0.b32.start [1/16] %v49, 128
    %194 = vxpose.xlu0.b32.cont [2/16] %v50, 128
    %195 = vxpose.xlu0.b32.cont [3/16] %v51, 128
    %196 = vxpose.xlu0.b32.cont [4/16] %v52, 128
    %197 = vxpose.xlu0.b32.cont [5/16] %v53, 128
    %198 = vxpose.xlu0.b32.cont [6/16] %v54, 128
    %199 = vxpose.xlu0.b32.cont [7/16] %v55, 128
    %200 = vxpose.xlu0.b32.cont [8/16] %v56, 128
    %201 = vxpose.xlu0.b32.cont [9/16] %v57, 128
    %202 = vxpose.xlu0.b32.cont [10/16] %v58, 128
    %203 = vxpose.xlu0.b32.cont [11/16] %v59, 128
    %204 = vxpose.xlu0.b32.cont [12/16] %v60, 128
    %205 = vxpose.xlu0.b32.cont [13/16] %v61, 128
    %206 = vxpose.xlu0.b32.cont [14/16] %v62, 128
    %207 = vxpose.xlu0.b32.cont [15/16] %v63, 128
    %208 = vxpose.xlu0.b32.end [16/16] %v64, 128
    %v209 = vpop.trf.xlu0
    %v210 = vpop.trf.xlu0
    %v211 = vpop.trf.xlu0
    %v212 = vpop.trf.xlu0
    %v213 = vpop.trf.xlu0
    %v214 = vpop.trf.xlu0
    %v215 = vpop.trf.xlu0
    %v216 = vpop.trf.xlu0
    %v217 = vpop.trf.xlu0
    %v218 = vpop.trf.xlu0
    %v219 = vpop.trf.xlu0
    %v220 = vpop.trf.xlu0
    %v221 = vpop.trf.xlu0
    %v222 = vpop.trf.xlu0
    %v223 = vpop.trf.xlu0
    %v224 = vpop.trf.xlu0
    %225 = vxpose.xlu0.b32.start [1/16] %v65, 128
    %226 = vxpose.xlu0.b32.cont [2/16] %v66, 128
    %227 = vxpose.xlu0.b32.cont [3/16] %v67, 128
    %228 = vxpose.xlu0.b32.cont [4/16] %v68, 128
    %229 = vxpose.xlu0.b32.cont [5/16] %v69, 128
    %230 = vxpose.xlu0.b32.cont [6/16] %v70, 128
    %231 = vxpose.xlu0.b32.cont [7/16] %v71, 128
    %232 = vxpose.xlu0.b32.cont [8/16] %v72, 128
    %233 = vxpose.xlu0.b32.cont [9/16] %v73, 128
    %234 = vxpose.xlu0.b32.cont [10/16] %v74, 128
    %235 = vxpose.xlu0.b32.cont [11/16] %v75, 128
    %236 = vxpose.xlu0.b32.cont [12/16] %v76, 128
    %237 = vxpose.xlu0.b32.cont [13/16] %v77, 128
    %238 = vxpose.xlu0.b32.cont [14/16] %v78, 128
    %239 = vxpose.xlu0.b32.cont [15/16] %v79, 128
    %240 = vxpose.xlu0.b32.end [16/16] %v80, 128
    %v241 = vpop.trf.xlu0
    %v242 = vpop.trf.xlu0
    %v243 = vpop.trf.xlu0
    %v244 = vpop.trf.xlu0
    %v245 = vpop.trf.xlu0
    %v246 = vpop.trf.xlu0
    %v247 = vpop.trf.xlu0
    %v248 = vpop.trf.xlu0
    %v249 = vpop.trf.xlu0
    %v250 = vpop.trf.xlu0
    %v251 = vpop.trf.xlu0
    %v252 = vpop.trf.xlu0
    %v253 = vpop.trf.xlu0
    %v254 = vpop.trf.xlu0
    %v255 = vpop.trf.xlu0
    %v256 = vpop.trf.xlu0
    %257 = vxpose.xlu0.b32.start [1/16] %v81, 128
    %258 = vxpose.xlu0.b32.cont [2/16] %v82, 128
    %259 = vxpose.xlu0.b32.cont [3/16] %v83, 128
    %260 = vxpose.xlu0.b32.cont [4/16] %v84, 128
    %261 = vxpose.xlu0.b32.cont [5/16] %v85, 128
    %262 = vxpose.xlu0.b32.cont [6/16] %v86, 128
    %263 = vxpose.xlu0.b32.cont [7/16] %v87, 128
    %264 = vxpose.xlu0.b32.cont [8/16] %v88, 128
    %265 = vxpose.xlu0.b32.cont [9/16] %v89, 128
    %266 = vxpose.xlu0.b32.cont [10/16] %v90, 128
    %267 = vxpose.xlu0.b32.cont [11/16] %v91, 128
    %268 = vxpose.xlu0.b32.cont [12/16] %v92, 128
    %269 = vxpose.xlu0.b32.cont [13/16] %v93, 128
    %270 = vxpose.xlu0.b32.cont [14/16] %v94, 128
    %271 = vxpose.xlu0.b32.cont [15/16] %v95, 128
    %272 = vxpose.xlu0.b32.end [16/16] %v96, 128
    %v273 = vpop.trf.xlu0
    %v274 = vpop.trf.xlu0
    %v275 = vpop.trf.xlu0
    %v276 = vpop.trf.xlu0
    %v277 = vpop.trf.xlu0
    %v278 = vpop.trf.xlu0
    %v279 = vpop.trf.xlu0
    %v280 = vpop.trf.xlu0
    %v281 = vpop.trf.xlu0
    %v282 = vpop.trf.xlu0
    %v283 = vpop.trf.xlu0
    %v284 = vpop.trf.xlu0
    %v285 = vpop.trf.xlu0
    %v286 = vpop.trf.xlu0
    %v287 = vpop.trf.xlu0
    %v288 = vpop.trf.xlu0
    %289 = vxpose.xlu0.b32.start [1/16] %v97, 128
    %290 = vxpose.xlu0.b32.cont [2/16] %v98, 128
    %291 = vxpose.xlu0.b32.cont [3/16] %v99, 128
    %292 = vxpose.xlu0.b32.cont [4/16] %v100, 128
    %293 = vxpose.xlu0.b32.cont [5/16] %v101, 128
    %294 = vxpose.xlu0.b32.cont [6/16] %v102, 128
    %295 = vxpose.xlu0.b32.cont [7/16] %v103, 128
    %296 = vxpose.xlu0.b32.cont [8/16] %v104, 128
    %297 = vxpose.xlu0.b32.cont [9/16] %v105, 128
    %298 = vxpose.xlu0.b32.cont [10/16] %v106, 128
    %299 = vxpose.xlu0.b32.cont [11/16] %v107, 128
    %300 = vxpose.xlu0.b32.cont [12/16] %v108, 128
    %301 = vxpose.xlu0.b32.cont [13/16] %v109, 128
    %302 = vxpose.xlu0.b32.cont [14/16] %v110, 128
    %303 = vxpose.xlu0.b32.cont [15/16] %v111, 128
    %304 = vxpose.xlu0.b32.end [16/16] %v112, 128
    %v305 = vpop.trf.xlu0
    %v306 = vpop.trf.xlu0
    %v307 = vpop.trf.xlu0
    %v308 = vpop.trf.xlu0
    %v309 = vpop.trf.xlu0
    %v310 = vpop.trf.xlu0
    %v311 = vpop.trf.xlu0
    %v312 = vpop.trf.xlu0
    %v313 = vpop.trf.xlu0
    %v314 = vpop.trf.xlu0
    %v315 = vpop.trf.xlu0
    %v316 = vpop.trf.xlu0
    %v317 = vpop.trf.xlu0
    %v318 = vpop.trf.xlu0
    %v319 = vpop.trf.xlu0
    %v320 = vpop.trf.xlu0
    %321 = vxpose.xlu0.b32.start [1/16] %v113, 128
    %322 = vxpose.xlu0.b32.cont [2/16] %v114, 128
    %323 = vxpose.xlu0.b32.cont [3/16] %v115, 128
    %324 = vxpose.xlu0.b32.cont [4/16] %v116, 128
    %325 = vxpose.xlu0.b32.cont [5/16] %v117, 128
    %326 = vxpose.xlu0.b32.cont [6/16] %v118, 128
    %327 = vxpose.xlu0.b32.cont [7/16] %v119, 128
    %328 = vxpose.xlu0.b32.cont [8/16] %v120, 128
    %329 = vxpose.xlu0.b32.cont [9/16] %v121, 128
    %330 = vxpose.xlu0.b32.cont [10/16] %v122, 128
    %331 = vxpose.xlu0.b32.cont [11/16] %v123, 128
    %332 = vxpose.xlu0.b32.cont [12/16] %v124, 128
    %333 = vxpose.xlu0.b32.cont [13/16] %v125, 128
    %334 = vxpose.xlu0.b32.cont [14/16] %v126, 128
    %335 = vxpose.xlu0.b32.cont [15/16] %v127, 128
    %336 = vxpose.xlu0.b32.end [16/16] %v128, 128
    %v337 = vpop.trf.xlu0
    %v338 = vpop.trf.xlu0
    %v339 = vpop.trf.xlu0
    %v340 = vpop.trf.xlu0
    %v341 = vpop.trf.xlu0
    %v342 = vpop.trf.xlu0
    %v343 = vpop.trf.xlu0
    %v344 = vpop.trf.xlu0
    %v345 = vpop.trf.xlu0
    %v346 = vpop.trf.xlu0
    %v347 = vpop.trf.xlu0
    %v348 = vpop.trf.xlu0
    %v349 = vpop.trf.xlu0
    %v350 = vpop.trf.xlu0
    %v351 = vpop.trf.xlu0
    %v352 = vpop.trf.xlu0
    %353 = vxpose.xlu0.b32.start [1/16] %v129, 128
    %354 = vxpose.xlu0.b32.cont [2/16] %v130, 128
    %355 = vxpose.xlu0.b32.cont [3/16] %v131, 128
    %356 = vxpose.xlu0.b32.cont [4/16] %v132, 128
    %357 = vxpose.xlu0.b32.cont [5/16] %v133, 128
    %358 = vxpose.xlu0.b32.cont [6/16] %v134, 128
    %359 = vxpose.xlu0.b32.cont [7/16] %v135, 128
    %360 = vxpose.xlu0.b32.cont [8/16] %v136, 128
    %361 = vxpose.xlu0.b32.cont [9/16] %v137, 128
    %362 = vxpose.xlu0.b32.cont [10/16] %v138, 128
    %363 = vxpose.xlu0.b32.cont [11/16] %v139, 128
    %364 = vxpose.xlu0.b32.cont [12/16] %v140, 128
    %365 = vxpose.xlu0.b32.cont [13/16] %v141, 128
    %366 = vxpose.xlu0.b32.cont [14/16] %v142, 128
    %367 = vxpose.xlu0.b32.cont [15/16] %v143, 128
    %368 = vxpose.xlu0.b32.end [16/16] %v144, 128
    %v369 = vpop.trf.xlu0
    %v370 = vpop.trf.xlu0
    %v371 = vpop.trf.xlu0
    %v372 = vpop.trf.xlu0
    %v373 = vpop.trf.xlu0
    %v374 = vpop.trf.xlu0
    %v375 = vpop.trf.xlu0
    %v376 = vpop.trf.xlu0
    %v377 = vpop.trf.xlu0
    %v378 = vpop.trf.xlu0
    %v379 = vpop.trf.xlu0
    %v380 = vpop.trf.xlu0
    %v381 = vpop.trf.xlu0
    %v382 = vpop.trf.xlu0
    %v383 = vpop.trf.xlu0
    %v384 = vpop.trf.xlu0
    %385 = vxpose.xlu0.b32.start [1/16] %v145, 128
    %386 = vxpose.xlu0.b32.cont [2/16] %v146, 128
    %387 = vxpose.xlu0.b32.cont [3/16] %v147, 128
    %388 = vxpose.xlu0.b32.cont [4/16] %v148, 128
    %389 = vxpose.xlu0.b32.cont [5/16] %v149, 128
    %390 = vxpose.xlu0.b32.cont [6/16] %v150, 128
    %391 = vxpose.xlu0.b32.cont [7/16] %v151, 128
    %392 = vxpose.xlu0.b32.cont [8/16] %v152, 128
    %393 = vxpose.xlu0.b32.cont [9/16] %v153, 128
    %394 = vxpose.xlu0.b32.cont [10/16] %v154, 128
    %395 = vxpose.xlu0.b32.cont [11/16] %v155, 128
    %396 = vxpose.xlu0.b32.cont [12/16] %v156, 128
    %397 = vxpose.xlu0.b32.cont [13/16] %v157, 128
    %398 = vxpose.xlu0.b32.cont [14/16] %v158, 128
    %399 = vxpose.xlu0.b32.cont [15/16] %v159, 128
    %400 = vxpose.xlu0.b32.end [16/16] %v160, 128
    %v401 = vpop.trf.xlu0
    %v402 = vpop.trf.xlu0
    %v403 = vpop.trf.xlu0
    %v404 = vpop.trf.xlu0
    %v405 = vpop.trf.xlu0
    %v406 = vpop.trf.xlu0
    %v407 = vpop.trf.xlu0
    %v408 = vpop.trf.xlu0
    %v409 = vpop.trf.xlu0
    %v410 = vpop.trf.xlu0
    %v411 = vpop.trf.xlu0
    %v412 = vpop.trf.xlu0
    %v413 = vpop.trf.xlu0
    %v414 = vpop.trf.xlu0
    %v415 = vpop.trf.xlu0
    %v416 = vpop.trf.xlu0
    %v417 = vld [vmem:[%s1] sm:$0xf]
    %v418 = vld [vmem:[%s1 + $0x4] sm:$0xf]
    %v419 = vld [vmem:[%s1 + $0x8] sm:$0xf]
    %v420 = vld [vmem:[%s1 + $0xc] sm:$0xf]
    %v421 = vld [vmem:[%s1 + $0x10] sm:$0xf]
    %v422 = vld [vmem:[%s1 + $0x14] sm:$0xf]
    %v423 = vld [vmem:[%s1 + $0x18] sm:$0xf]
    %v424 = vld [vmem:[%s1 + $0x1c] sm:$0xf]
    %v425 = vpack.c.bf16 %v178, %v177
    %v426 = vpack.c.bf16 %v210, %v209
    %v427 = vpack.c.bf16 %v242, %v241
    %v428 = vpack.c.bf16 %v274, %v273
    %v429 = vpack.c.bf16 %v306, %v305
    %v430 = vpack.c.bf16 %v338, %v337
    %v431 = vpack.c.bf16 %v370, %v369
    %v432 = vpack.c.bf16 %v402, %v401
    %v441 = vunpack.c.l.b16 %v417
    %v442 = vunpack.c.l.b16 %v418
    %v443 = vunpack.c.l.b16 %v419
    %v444 = vunpack.c.l.b16 %v420
    %v445 = vunpack.c.l.b16 %v421
    %v446 = vunpack.c.l.b16 %v422
    %v447 = vunpack.c.l.b16 %v423
    %v448 = vunpack.c.l.b16 %v424
    %v449 = vpack.c.b16 %v442, %v441
    %v450 = vpack.c.b16 %v444, %v443
    %v451 = vpack.c.b16 %v446, %v445
    %v452 = vpack.c.b16 %v448, %v447
    %vm453 = vcmask 130048
    %v455 = vsel %vm453, %v449, 0
    %v458 = vsel %vm453, %v450, 0
    %v461 = vsel %vm453, %v451, 0
    %v464 = vsel %vm453, %v452, 0
    %466 = vmatprep.subr.bf16.mxu0 %v426
    %467 = vmatpush1.bf16.msra.mxu0 %v425
    %468 = vmatprep.subr.bf16.mxu0 0
    %469 = vmatpush1.bf16.msra.mxu0 0
    %470 = vmatprep.subr.bf16.mxu0 0
    %471 = vmatpush1.bf16.msra.mxu0 0
    %472 = vmatprep.subr.bf16.mxu0 0
    %473 = vmatpush1.bf16.msra.mxu0 0
    %474 = vmatprep.subr.bf16.mxu0 0
    %475 = vmatpush1.bf16.msra.mxu0 0
    %476 = vmatprep.subr.bf16.mxu0 0
    %477 = vmatpush1.bf16.msra.mxu0 0
    %478 = vmatprep.subr.bf16.mxu0 0
    %479 = vmatpush1.bf16.msra.mxu0 0
    %480 = vmatprep.subr.bf16.mxu0 0
    %481 = vmatpush1.bf16.msra.mxu0 0
    %482 = vmatprep.subr.bf16.mxu0 0
    %483 = vmatpush1.bf16.msra.mxu0 0
    %484 = vmatprep.subr.bf16.mxu0 0
    %485 = vmatpush1.bf16.msra.mxu0 0
    %486 = vmatprep.subr.bf16.mxu0 0
    %487 = vmatpush1.bf16.msra.mxu0 0
    %488 = vmatprep.subr.bf16.mxu0 0
    %489 = vmatpush1.bf16.msra.mxu0 0
    %490 = vmatprep.subr.bf16.mxu0 0
    %491 = vmatpush1.bf16.msra.mxu0 0
    %492 = vmatprep.subr.bf16.mxu0 0
    %493 = vmatpush1.bf16.msra.mxu0 0
    %494 = vmatprep.subr.bf16.mxu0 0
    %495 = vmatpush1.bf16.msra.mxu0 0
    %496 = vmatprep.subr.bf16.mxu0 0
    %497 = vmatpush1.bf16.msra.mxu0 0
    %498 = vmatprep.mubr.bf16.mxu0 0
    %499 = vmatmul.mubr.bf16.gmra.mrb[0].mxu0 %v455
    %v500 = vpop.f32.mrb[0].mxu0
    %v501 = vadd.f32 0.0, %v500
    %v502 = vpop.f32.mrb[0].mxu0
    %v503 = vadd.f32 0.0, %v502
    %v504 = vpop.f32.mrb[0].mxu0
    %v505 = vadd.f32 0.0, %v504
    %v506 = vpop.f32.mrb[0].mxu0
    %v507 = vadd.f32 0.0, %v506
    %508 = vmatprep.mubr.bf16.mxu0 0
    %509 = vmatmul.mubr.bf16.gmra.mrb[0].mxu0 %v458
    %v510 = vpop.f32.mrb[0].mxu0
    %v511 = vadd.f32 0.0, %v510
    %v512 = vpop.f32.mrb[0].mxu0
    %v513 = vadd.f32 0.0, %v512
    %v514 = vpop.f32.mrb[0].mxu0
    %v515 = vadd.f32 0.0, %v514
    %v516 = vpop.f32.mrb[0].mxu0
    %v517 = vadd.f32 0.0, %v516
    %518 = vmatprep.mubr.bf16.mxu0 0
    %519 = vmatmul.mubr.bf16.gmra.mrb[0].mxu0 %v461
    %v520 = vpop.f32.mrb[0].mxu0
    %v521 = vadd.f32 0.0, %v520
    %v522 = vpop.f32.mrb[0].mxu0
    %v523 = vadd.f32 0.0, %v522
    %v524 = vpop.f32.mrb[0].mxu0
    %v525 = vadd.f32 0.0, %v524
    %v526 = vpop.f32.mrb[0].mxu0
    %v527 = vadd.f32 0.0, %v526
    %528 = vmatprep.mubr.bf16.mxu0 0
    %529 = vmatmul.mubr.bf16.gmra.mrb[0].mxu0 %v464
    %v530 = vpop.f32.mrb[0].mxu0
    %v531 = vadd.f32 0.0, %v530
    %v532 = vpop.f32.mrb[0].mxu0
    %v533 = vadd.f32 0.0, %v532
    %v534 = vpop.f32.mrb[0].mxu0
    %v535 = vadd.f32 0.0, %v534
    %v536 = vpop.f32.mrb[0].mxu0
    %v537 = vadd.f32 0.0, %v536
    %538 = vdwg.mxu0
    %539 = vmatprep.subr.bf16.mxu0 %v428
    %540 = vmatpush1.bf16.msra.mxu0 %v427
    %541 = vmatprep.subr.bf16.mxu0 0
    %542 = vmatpush1.bf16.msra.mxu0 0
    %543 = vmatprep.subr.bf16.mxu0 0
    %544 = vmatpush1.bf16.msra.mxu0 0
    %545 = vmatprep.subr.bf16.mxu0 0
    %546 = vmatpush1.bf16.msra.mxu0 0
    %547 = vmatprep.subr.bf16.mxu0 0
    %548 = vmatpush1.bf16.msra.mxu0 0
    %549 = vmatprep.subr.bf16.mxu0 0
    %550 = vmatpush1.bf16.msra.mxu0 0
    %551 = vmatprep.subr.bf16.mxu0 0
    %552 = vmatpush1.bf16.msra.mxu0 0
    %553 = vmatprep.subr.bf16.mxu0 0
    %554 = vmatpush1.bf16.msra.mxu0 0
    %555 = vmatprep.subr.bf16.mxu0 0
    %556 = vmatpush1.bf16.msra.mxu0 0
    %557 = vmatprep.subr.bf16.mxu0 0
    %558 = vmatpush1.bf16.msra.mxu0 0
    %559 = vmatprep.subr.bf16.mxu0 0
    %560 = vmatpush1.bf16.msra.mxu0 0
    %561 = vmatprep.subr.bf16.mxu0 0
    %562 = vmatpush1.bf16.msra.mxu0 0
    %563 = vmatprep.subr.bf16.mxu0 0
    %564 = vmatpush1.bf16.msra.mxu0 0
    %565 = vmatprep.subr.bf16.mxu0 0
    %566 = vmatpush1.bf16.msra.mxu0 0
    %567 = vmatprep.subr.bf16.mxu0 0
    %568 = vmatpush1.bf16.msra.mxu0 0
    %569 = vmatprep.subr.bf16.mxu0 0
    %570 = vmatpush1.bf16.msra.mxu0 0
    %571 = vmatprep.mubr.bf16.mxu0 0
    %572 = vmatmul.mubr.bf16.gmra.mrb[0].mxu0 %v455
    %v573 = vpop.f32.mrb[0].mxu0
    %v574 = vadd.f32 0.0, %v573
    %v575 = vpop.f32.mrb[0].mxu0
    %v576 = vadd.f32 0.0, %v575
    %v577 = vpop.f32.mrb[0].mxu0
    %v578 = vadd.f32 0.0, %v577
    %v579 = vpop.f32.mrb[0].mxu0
    %v580 = vadd.f32 0.0, %v579
    %581 = vmatprep.mubr.bf16.mxu0 0
    %582 = vmatmul.mubr.bf16.gmra.mrb[0].mxu0 %v458
    %v583 = vpop.f32.mrb[0].mxu0
    %v584 = vadd.f32 0.0, %v583
    %v585 = vpop.f32.mrb[0].mxu0
    %v586 = vadd.f32 0.0, %v585
    %v587 = vpop.f32.mrb[0].mxu0
    %v588 = vadd.f32 0.0, %v587
    %v589 = vpop.f32.mrb[0].mxu0
    %v590 = vadd.f32 0.0, %v589
    %591 = vmatprep.mubr.bf16.mxu0 0
    %592 = vmatmul.mubr.bf16.gmra.mrb[0].mxu0 %v461
    %v593 = vpop.f32.mrb[0].mxu0
    %v594 = vadd.f32 0.0, %v593
    %v595 = vpop.f32.mrb[0].mxu0
    %v596 = vadd.f32 0.0, %v595
    %v597 = vpop.f32.mrb[0].mxu0
    %v598 = vadd.f32 0.0, %v597
    %v599 = vpop.f32.mrb[0].mxu0
    %v600 = vadd.f32 0.0, %v599
    %601 = vmatprep.mubr.bf16.mxu0 0
    %602 = vmatmul.mubr.bf16.gmra.mrb[0].mxu0 %v464
    %v603 = vpop.f32.mrb[0].mxu0
    %v604 = vadd.f32 0.0, %v603
    %v605 = vpop.f32.mrb[0].mxu0
    %v606 = vadd.f32 0.0, %v605
    %v607 = vpop.f32.mrb[0].mxu0
    %v608 = vadd.f32 0.0, %v607
    %v609 = vpop.f32.mrb[0].mxu0
    %v610 = vadd.f32 0.0, %v609
    %611 = vdwg.mxu0
    %612 = vmatprep.subr.bf16.mxu0 %v430
    %613 = vmatpush1.bf16.msra.mxu0 %v429
    %614 = vmatprep.subr.bf16.mxu0 0
    %615 = vmatpush1.bf16.msra.mxu0 0
    %616 = vmatprep.subr.bf16.mxu0 0
    %617 = vmatpush1.bf16.msra.mxu0 0
    %618 = vmatprep.subr.bf16.mxu0 0
    %619 = vmatpush1.bf16.msra.mxu0 0
    %620 = vmatprep.subr.bf16.mxu0 0
    %621 = vmatpush1.bf16.msra.mxu0 0
    %622 = vmatprep.subr.bf16.mxu0 0
    %623 = vmatpush1.bf16.msra.mxu0 0
    %624 = vmatprep.subr.bf16.mxu0 0
    %625 = vmatpush1.bf16.msra.mxu0 0
    %626 = vmatprep.subr.bf16.mxu0 0
    %627 = vmatpush1.bf16.msra.mxu0 0
    %628 = vmatprep.subr.bf16.mxu0 0
    %629 = vmatpush1.bf16.msra.mxu0 0
    %630 = vmatprep.subr.bf16.mxu0 0
    %631 = vmatpush1.bf16.msra.mxu0 0
    %632 = vmatprep.subr.bf16.mxu0 0
    %633 = vmatpush1.bf16.msra.mxu0 0
    %634 = vmatprep.subr.bf16.mxu0 0
    %635 = vmatpush1.bf16.msra.mxu0 0
    %636 = vmatprep.subr.bf16.mxu0 0
    %637 = vmatpush1.bf16.msra.mxu0 0
    %638 = vmatprep.subr.bf16.mxu0 0
    %639 = vmatpush1.bf16.msra.mxu0 0
    %640 = vmatprep.subr.bf16.mxu0 0
    %641 = vmatpush1.bf16.msra.mxu0 0
    %642 = vmatprep.subr.bf16.mxu0 0
    %643 = vmatpush1.bf16.msra.mxu0 0
    %644 = vmatprep.mubr.bf16.mxu0 0
    %645 = vmatmul.mubr.bf16.gmra.mrb[0].mxu0 %v455
    %v646 = vpop.f32.mrb[0].mxu0
    %v647 = vadd.f32 0.0, %v646
    %v648 = vpop.f32.mrb[0].mxu0
    %v649 = vadd.f32 0.0, %v648
    %v650 = vpop.f32.mrb[0].mxu0
    %v651 = vadd.f32 0.0, %v650
    %v652 = vpop.f32.mrb[0].mxu0
    %v653 = vadd.f32 0.0, %v652
    %654 = vmatprep.mubr.bf16.mxu0 0
    %655 = vmatmul.mubr.bf16.gmra.mrb[0].mxu0 %v458
    %v656 = vpop.f32.mrb[0].mxu0
    %v657 = vadd.f32 0.0, %v656
    %v658 = vpop.f32.mrb[0].mxu0
    %v659 = vadd.f32 0.0, %v658
    %v660 = vpop.f32.mrb[0].mxu0
    %v661 = vadd.f32 0.0, %v660
    %v662 = vpop.f32.mrb[0].mxu0
    %v663 = vadd.f32 0.0, %v662
    %664 = vmatprep.mubr.bf16.mxu0 0
    %665 = vmatmul.mubr.bf16.gmra.mrb[0].mxu0 %v461
    %v666 = vpop.f32.mrb[0].mxu0
    %v667 = vadd.f32 0.0, %v666
    %v668 = vpop.f32.mrb[0].mxu0
    %v669 = vadd.f32 0.0, %v668
    %v670 = vpop.f32.mrb[0].mxu0
    %v671 = vadd.f32 0.0, %v670
    %v672 = vpop.f32.mrb[0].mxu0
    %v673 = vadd.f32 0.0, %v672
    %674 = vmatprep.mubr.bf16.mxu0 0
    %675 = vmatmul.mubr.bf16.gmra.mrb[0].mxu0 %v464
    %v676 = vpop.f32.mrb[0].mxu0
    %v677 = vadd.f32 0.0, %v676
    %v678 = vpop.f32.mrb[0].mxu0
    %v679 = vadd.f32 0.0, %v678
    %v680 = vpop.f32.mrb[0].mxu0
    %v681 = vadd.f32 0.0, %v680
    %v682 = vpop.f32.mrb[0].mxu0
    %v683 = vadd.f32 0.0, %v682
    %684 = vdwg.mxu0
    %685 = vmatprep.subr.bf16.mxu0 %v432
    %686 = vmatpush1.bf16.msra.mxu0 %v431
    %687 = vmatprep.subr.bf16.mxu0 0
    %688 = vmatpush1.bf16.msra.mxu0 0
    %689 = vmatprep.subr.bf16.mxu0 0
    %690 = vmatpush1.bf16.msra.mxu0 0
    %691 = vmatprep.subr.bf16.mxu0 0
    %692 = vmatpush1.bf16.msra.mxu0 0
    %693 = vmatprep.subr.bf16.mxu0 0
    %694 = vmatpush1.bf16.msra.mxu0 0
    %695 = vmatprep.subr.bf16.mxu0 0
    %696 = vmatpush1.bf16.msra.mxu0 0
    %697 = vmatprep.subr.bf16.mxu0 0
    %698 = vmatpush1.bf16.msra.mxu0 0
    %699 = vmatprep.subr.bf16.mxu0 0
    %700 = vmatpush1.bf16.msra.mxu0 0
    %701 = vmatprep.subr.bf16.mxu0 0
    %702 = vmatpush1.bf16.msra.mxu0 0
    %703 = vmatprep.subr.bf16.mxu0 0
    %704 = vmatpush1.bf16.msra.mxu0 0
    %705 = vmatprep.subr.bf16.mxu0 0
    %706 = vmatpush1.bf16.msra.mxu0 0
    %707 = vmatprep.subr.bf16.mxu0 0
    %708 = vmatpush1.bf16.msra.mxu0 0
    %709 = vmatprep.subr.bf16.mxu0 0
    %710 = vmatpush1.bf16.msra.mxu0 0
    %711 = vmatprep.subr.bf16.mxu0 0
    %712 = vmatpush1.bf16.msra.mxu0 0
    %713 = vmatprep.subr.bf16.mxu0 0
    %714 = vmatpush1.bf16.msra.mxu0 0
    %715 = vmatprep.subr.bf16.mxu0 0
    %716 = vmatpush1.bf16.msra.mxu0 0
    %717 = vmatprep.mubr.bf16.mxu0 0
    %718 = vmatmul.mubr.bf16.gmra.mrb[0].mxu0 %v455
    %v719 = vpop.f32.mrb[0].mxu0
    %v720 = vadd.f32 0.0, %v719
    %v721 = vpop.f32.mrb[0].mxu0
    %v722 = vadd.f32 0.0, %v721
    %v723 = vpop.f32.mrb[0].mxu0
    %v724 = vadd.f32 0.0, %v723
    %v725 = vpop.f32.mrb[0].mxu0
    %v726 = vadd.f32 0.0, %v725
    %727 = vmatprep.mubr.bf16.mxu0 0
    %728 = vmatmul.mubr.bf16.gmra.mrb[0].mxu0 %v458
    %v729 = vpop.f32.mrb[0].mxu0
    %v730 = vadd.f32 0.0, %v729
    %v731 = vpop.f32.mrb[0].mxu0
    %v732 = vadd.f32 0.0, %v731
    %v733 = vpop.f32.mrb[0].mxu0
    %v734 = vadd.f32 0.0, %v733
    %v735 = vpop.f32.mrb[0].mxu0
    %v736 = vadd.f32 0.0, %v735
    %737 = vmatprep.mubr.bf16.mxu0 0
    %738 = vmatmul.mubr.bf16.gmra.mrb[0].mxu0 %v461
    %v739 = vpop.f32.mrb[0].mxu0
    %v740 = vadd.f32 0.0, %v739
    %v741 = vpop.f32.mrb[0].mxu0
    %v742 = vadd.f32 0.0, %v741
    %v743 = vpop.f32.mrb[0].mxu0
    %v744 = vadd.f32 0.0, %v743
    %v745 = vpop.f32.mrb[0].mxu0
    %v746 = vadd.f32 0.0, %v745
    %747 = vmatprep.mubr.bf16.mxu0 0
    %748 = vmatmul.mubr.bf16.gmra.mrb[0].mxu0 %v464
    %v749 = vpop.f32.mrb[0].mxu0
    %v750 = vadd.f32 0.0, %v749
    %v751 = vpop.f32.mrb[0].mxu0
    %v752 = vadd.f32 0.0, %v751
    %v753 = vpop.f32.mrb[0].mxu0
    %v754 = vadd.f32 0.0, %v753
    %v755 = vpop.f32.mrb[0].mxu0
    %v756 = vadd.f32 0.0, %v755
    %757 = vdwg.mxu0
    %v758 = vpack.c.bf16 %v505, %v501
    %v759 = vpack.c.bf16 %v507, %v503
    %v760 = vpack.c.bf16 %v578, %v574
    %v761 = vpack.c.bf16 %v580, %v576
    %v762 = vpack.c.bf16 %v651, %v647
    %v763 = vpack.c.bf16 %v653, %v649
    %v764 = vpack.c.bf16 %v724, %v720
    %v765 = vpack.c.bf16 %v726, %v722
    %v766 = vpack.c.bf16 %v515, %v511
    %v767 = vpack.c.bf16 %v517, %v513
    %v768 = vpack.c.bf16 %v588, %v584
    %v769 = vpack.c.bf16 %v590, %v586
    %v770 = vpack.c.bf16 %v661, %v657
    %v771 = vpack.c.bf16 %v663, %v659
    %v772 = vpack.c.bf16 %v734, %v730
    %v773 = vpack.c.bf16 %v736, %v732
    %v774 = vpack.c.bf16 %v525, %v521
    %v775 = vpack.c.bf16 %v527, %v523
    %v776 = vpack.c.bf16 %v598, %v594
    %v777 = vpack.c.bf16 %v600, %v596
    %v778 = vpack.c.bf16 %v671, %v667
    %v779 = vpack.c.bf16 %v673, %v669
    %v780 = vpack.c.bf16 %v744, %v740
    %v781 = vpack.c.bf16 %v746, %v742
    %v782 = vpack.c.bf16 %v535, %v531
    %v783 = vpack.c.bf16 %v537, %v533
    %v784 = vpack.c.bf16 %v608, %v604
    %v785 = vpack.c.bf16 %v610, %v606
    %v786 = vpack.c.bf16 %v681, %v677
    %v787 = vpack.c.bf16 %v683, %v679
    %v788 = vpack.c.bf16 %v754, %v750
    %v789 = vpack.c.bf16 %v756, %v752
    %v790 = vld [vmem:[%s2] sm:$0xff]
    %v791 = vld [vmem:[%s2 + $0x8] sm:$0xff]
    %v792 = vld [vmem:[%s2 + $0x10] sm:$0xff]
    %v793 = vld [vmem:[%s2 + $0x18] sm:$0xff]
    %v794 = vld [vmem:[%s2 + $0x20] sm:$0xff]
    %v795 = vld [vmem:[%s2 + $0x28] sm:$0xff]
    %v796 = vld [vmem:[%s2 + $0x30] sm:$0xff]
    %v797 = vld [vmem:[%s2 + $0x38] sm:$0xff]
    %v798 = vpack.c.bf16 %v791, %v790
    %v799 = vpack.c.bf16 %v793, %v792
    %v800 = vpack.c.bf16 %v795, %v794
    %v801 = vpack.c.bf16 %v797, %v796
    %803 = vset.pattern.permute.xlu0 0
    %804 = vperm.xlu0 %803, %v798
    %v805 = vpop.permute.xlu0 %804
    %808 = vset.pattern.permute.xlu0 0
    %809 = vperm.xlu0 %808, %v799
    %v810 = vpop.permute.xlu0 %809
    %813 = vset.pattern.permute.xlu0 0
    %814 = vperm.xlu0 %813, %v800
    %v815 = vpop.permute.xlu0 %814
    %818 = vset.pattern.permute.xlu0 0
    %819 = vperm.xlu0 %818, %v801
    %v820 = vpop.permute.xlu0 %819
    %v822 = vadd.bf16 %v758, %v805
    %v823 = vadd.bf16 %v759, %v805
    %v824 = vadd.bf16 %v760, %v805
    %v825 = vadd.bf16 %v761, %v805
    %v826 = vadd.bf16 %v762, %v805
    %v827 = vadd.bf16 %v763, %v805
    %v828 = vadd.bf16 %v764, %v805
    %v829 = vadd.bf16 %v765, %v805
    %v830 = vadd.bf16 %v766, %v810
    %v831 = vadd.bf16 %v767, %v810
    %v832 = vadd.bf16 %v768, %v810
    %v833 = vadd.bf16 %v769, %v810
    %v834 = vadd.bf16 %v770, %v810
    %v835 = vadd.bf16 %v771, %v810
    %v836 = vadd.bf16 %v772, %v810
    %v837 = vadd.bf16 %v773, %v810
    %v838 = vadd.bf16 %v774, %v815
    %v839 = vadd.bf16 %v775, %v815
    %v840 = vadd.bf16 %v776, %v815
    %v841 = vadd.bf16 %v777, %v815
    %v842 = vadd.bf16 %v778, %v815
    %v843 = vadd.bf16 %v779, %v815
    %v844 = vadd.bf16 %v780, %v815
    %v845 = vadd.bf16 %v781, %v815
    %v846 = vadd.bf16 %v782, %v820
    %v847 = vadd.bf16 %v783, %v820
    %v848 = vadd.bf16 %v784, %v820
    %v849 = vadd.bf16 %v785, %v820
    %v850 = vadd.bf16 %v786, %v820
    %v851 = vadd.bf16 %v787, %v820
    %v852 = vadd.bf16 %v788, %v820
    %v853 = vadd.bf16 %v789, %v820
    %v854 = vmax.bf16 %v822, 0
    %v855 = vmax.bf16 %v823, 0
    %v856 = vmax.bf16 %v824, 0
    %v857 = vmax.bf16 %v825, 0
    %v858 = vmax.bf16 %v826, 0
    %v859 = vmax.bf16 %v827, 0
    %v860 = vmax.bf16 %v828, 0
    %v861 = vmax.bf16 %v829, 0
    %v862 = vmax.bf16 %v830, 0
    %v863 = vmax.bf16 %v831, 0
    %v864 = vmax.bf16 %v832, 0
    %v865 = vmax.bf16 %v833, 0
    %v866 = vmax.bf16 %v834, 0
    %v867 = vmax.bf16 %v835, 0
    %v868 = vmax.bf16 %v836, 0
    %v869 = vmax.bf16 %v837, 0
    %v870 = vmax.bf16 %v838, 0
    %v871 = vmax.bf16 %v839, 0
    %v872 = vmax.bf16 %v840, 0
    %v873 = vmax.bf16 %v841, 0
    %v874 = vmax.bf16 %v842, 0
    %v875 = vmax.bf16 %v843, 0
    %v876 = vmax.bf16 %v844, 0
    %v877 = vmax.bf16 %v845, 0
    %v878 = vmax.bf16 %v846, 0
    %v879 = vmax.bf16 %v847, 0
    %v880 = vmax.bf16 %v848, 0
    %v881 = vmax.bf16 %v849, 0
    %v882 = vmax.bf16 %v850, 0
    %v883 = vmax.bf16 %v851, 0
    %v884 = vmax.bf16 %v852, 0
    %v885 = vmax.bf16 %v853, 0
    %v886 = vld [vmem:[%s3] sm:$0xf]
    %v887 = vld [vmem:[%s3 + $0x4] sm:$0xf]
    %v888 = vld [vmem:[%s3 + $0x8] sm:$0xf]
    %v889 = vld [vmem:[%s3 + $0xc] sm:$0xf]
    %v894 = vunpack.c.l.b16 %v886
    %v895 = vunpack.c.l.b16 %v887
    %v896 = vunpack.c.l.b16 %v888
    %v897 = vunpack.c.l.b16 %v889
    %v898 = vpack.c.b16 %v895, %v894
    %v899 = vpack.c.b16 %v897, %v896
    %vm900 = vcmask 261120
    %v902 = vsel %vm900, %v898, 0
    %v905 = vsel %vm900, %v899, 0
    %907 = vmatprep.subr.bf16.mxu0 %v855
    %908 = vmatpush1.bf16.msra.mxu0 %v854
    %909 = vmatprep.subr.bf16.mxu0 %v863
    %910 = vmatpush1.bf16.msra.mxu0 %v862
    %911 = vmatprep.subr.bf16.mxu0 0
    %912 = vmatpush1.bf16.msra.mxu0 0
    %913 = vmatprep.subr.bf16.mxu0 0
    %914 = vmatpush1.bf16.msra.mxu0 0
    %915 = vmatprep.subr.bf16.mxu0 0
    %916 = vmatpush1.bf16.msra.mxu0 0
    %917 = vmatprep.subr.bf16.mxu0 0
    %918 = vmatpush1.bf16.msra.mxu0 0
    %919 = vmatprep.subr.bf16.mxu0 0
    %920 = vmatpush1.bf16.msra.mxu0 0
    %921 = vmatprep.subr.bf16.mxu0 0
    %922 = vmatpush1.bf16.msra.mxu0 0
    %923 = vmatprep.subr.bf16.mxu0 0
    %924 = vmatpush1.bf16.msra.mxu0 0
    %925 = vmatprep.subr.bf16.mxu0 0
    %926 = vmatpush1.bf16.msra.mxu0 0
    %927 = vmatprep.subr.bf16.mxu0 0
    %928 = vmatpush1.bf16.msra.mxu0 0
    %929 = vmatprep.subr.bf16.mxu0 0
    %930 = vmatpush1.bf16.msra.mxu0 0
    %931 = vmatprep.subr.bf16.mxu0 0
    %932 = vmatpush1.bf16.msra.mxu0 0
    %933 = vmatprep.subr.bf16.mxu0 0
    %934 = vmatpush1.bf16.msra.mxu0 0
    %935 = vmatprep.subr.bf16.mxu0 0
    %936 = vmatpush1.bf16.msra.mxu0 0
    %937 = vmatprep.subr.bf16.mxu0 0
    %938 = vmatpush1.bf16.msra.mxu0 0
    %939 = vmatprep.mubr.bf16.mxu0 0
    %940 = vmatmul.mubr.bf16.gmra.mrb[0].mxu0 %v902
    %v941 = vpop.f32.mrb[0].mxu0
    %v942 = vadd.f32 0.0, %v941
    %v943 = vpop.f32.mrb[0].mxu0
    %v944 = vadd.f32 0.0, %v943
    %v945 = vpop.f32.mrb[0].mxu0
    %v946 = vadd.f32 0.0, %v945
    %v947 = vpop.f32.mrb[0].mxu0
    %v948 = vadd.f32 0.0, %v947
    %949 = vmatprep.mubr.bf16.mxu0 0
    %950 = vmatmul.mubr.bf16.gmra.mrb[0].mxu0 %v905
    %v951 = vpop.f32.mrb[0].mxu0
    %v952 = vadd.f32 0.0, %v951
    %v953 = vpop.f32.mrb[0].mxu0
    %v954 = vadd.f32 0.0, %v953
    %v955 = vpop.f32.mrb[0].mxu0
    %v956 = vadd.f32 0.0, %v955
    %v957 = vpop.f32.mrb[0].mxu0
    %v958 = vadd.f32 0.0, %v957
    %959 = vdwg.mxu0
    %960 = vmatprep.subr.bf16.mxu0 %v857
    %961 = vmatpush1.bf16.msra.mxu0 %v856
    %962 = vmatprep.subr.bf16.mxu0 %v865
    %963 = vmatpush1.bf16.msra.mxu0 %v864
    %964 = vmatprep.subr.bf16.mxu0 0
    %965 = vmatpush1.bf16.msra.mxu0 0
    %966 = vmatprep.subr.bf16.mxu0 0
    %967 = vmatpush1.bf16.msra.mxu0 0
    %968 = vmatprep.subr.bf16.mxu0 0
    %969 = vmatpush1.bf16.msra.mxu0 0
    %970 = vmatprep.subr.bf16.mxu0 0
    %971 = vmatpush1.bf16.msra.mxu0 0
    %972 = vmatprep.subr.bf16.mxu0 0
    %973 = vmatpush1.bf16.msra.mxu0 0
    %974 = vmatprep.subr.bf16.mxu0 0
    %975 = vmatpush1.bf16.msra.mxu0 0
    %976 = vmatprep.subr.bf16.mxu0 0
    %977 = vmatpush1.bf16.msra.mxu0 0
    %978 = vmatprep.subr.bf16.mxu0 0
    %979 = vmatpush1.bf16.msra.mxu0 0
    %980 = vmatprep.subr.bf16.mxu0 0
    %981 = vmatpush1.bf16.msra.mxu0 0
    %982 = vmatprep.subr.bf16.mxu0 0
    %983 = vmatpush1.bf16.msra.mxu0 0
    %984 = vmatprep.subr.bf16.mxu0 0
    %985 = vmatpush1.bf16.msra.mxu0 0
    %986 = vmatprep.subr.bf16.mxu0 0
    %987 = vmatpush1.bf16.msra.mxu0 0
    %988 = vmatprep.subr.bf16.mxu0 0
    %989 = vmatpush1.bf16.msra.mxu0 0
    %990 = vmatprep.subr.bf16.mxu0 0
    %991 = vmatpush1.bf16.msra.mxu0 0
    %992 = vmatprep.mubr.bf16.mxu0 0
    %993 = vmatmul.mubr.bf16.gmra.mrb[0].mxu0 %v902
    %v994 = vpop.f32.mrb[0].mxu0
    %v995 = vadd.f32 0.0, %v994
    %v996 = vpop.f32.mrb[0].mxu0
    %v997 = vadd.f32 0.0, %v996
    %v998 = vpop.f32.mrb[0].mxu0
    %v999 = vadd.f32 0.0, %v998
    %v1000 = vpop.f32.mrb[0].mxu0
    %v1001 = vadd.f32 0.0, %v1000
    %1002 = vmatprep.mubr.bf16.mxu0 0
    %1003 = vmatmul.mubr.bf16.gmra.mrb[0].mxu0 %v905
    %v1004 = vpop.f32.mrb[0].mxu0
    %v1005 = vadd.f32 0.0, %v1004
    %v1006 = vpop.f32.mrb[0].mxu0
    %v1007 = vadd.f32 0.0, %v1006
    %v1008 = vpop.f32.mrb[0].mxu0
    %v1009 = vadd.f32 0.0, %v1008
    %v1010 = vpop.f32.mrb[0].mxu0
    %v1011 = vadd.f32 0.0, %v1010
    %1012 = vdwg.mxu0
    %1013 = vmatprep.subr.bf16.mxu0 %v859
    %1014 = vmatpush1.bf16.msra.mxu0 %v858
    %1015 = vmatprep.subr.bf16.mxu0 %v867
    %1016 = vmatpush1.bf16.msra.mxu0 %v866
    %1017 = vmatprep.subr.bf16.mxu0 0
    %1018 = vmatpush1.bf16.msra.mxu0 0
    %1019 = vmatprep.subr.bf16.mxu0 0
    %1020 = vmatpush1.bf16.msra.mxu0 0
    %1021 = vmatprep.subr.bf16.mxu0 0
    %1022 = vmatpush1.bf16.msra.mxu0 0
    %1023 = vmatprep.subr.bf16.mxu0 0
    %1024 = vmatpush1.bf16.msra.mxu0 0
    %1025 = vmatprep.subr.bf16.mxu0 0
    %1026 = vmatpush1.bf16.msra.mxu0 0
    %1027 = vmatprep.subr.bf16.mxu0 0
    %1028 = vmatpush1.bf16.msra.mxu0 0
    %1029 = vmatprep.subr.bf16.mxu0 0
    %1030 = vmatpush1.bf16.msra.mxu0 0
    %1031 = vmatprep.subr.bf16.mxu0 0
    %1032 = vmatpush1.bf16.msra.mxu0 0
    %1033 = vmatprep.subr.bf16.mxu0 0
    %1034 = vmatpush1.bf16.msra.mxu0 0
    %1035 = vmatprep.subr.bf16.mxu0 0
    %1036 = vmatpush1.bf16.msra.mxu0 0
    %1037 = vmatprep.subr.bf16.mxu0 0
    %1038 = vmatpush1.bf16.msra.mxu0 0
    %1039 = vmatprep.subr.bf16.mxu0 0
    %1040 = vmatpush1.bf16.msra.mxu0 0
    %1041 = vmatprep.subr.bf16.mxu0 0
    %1042 = vmatpush1.bf16.msra.mxu0 0
    %1043 = vmatprep.subr.bf16.mxu0 0
    %1044 = vmatpush1.bf16.msra.mxu0 0
    %1045 = vmatprep.mubr.bf16.mxu0 0
    %1046 = vmatmul.mubr.bf16.gmra.mrb[0].mxu0 %v902
    %v1047 = vpop.f32.mrb[0].mxu0
    %v1048 = vadd.f32 0.0, %v1047
    %v1049 = vpop.f32.mrb[0].mxu0
    %v1050 = vadd.f32 0.0, %v1049
    %v1051 = vpop.f32.mrb[0].mxu0
    %v1052 = vadd.f32 0.0, %v1051
    %v1053 = vpop.f32.mrb[0].mxu0
    %v1054 = vadd.f32 0.0, %v1053
    %1055 = vmatprep.mubr.bf16.mxu0 0
    %1056 = vmatmul.mubr.bf16.gmra.mrb[0].mxu0 %v905
    %v1057 = vpop.f32.mrb[0].mxu0
    %v1058 = vadd.f32 0.0, %v1057
    %v1059 = vpop.f32.mrb[0].mxu0
    %v1060 = vadd.f32 0.0, %v1059
    %v1061 = vpop.f32.mrb[0].mxu0
    %v1062 = vadd.f32 0.0, %v1061
    %v1063 = vpop.f32.mrb[0].mxu0
    %v1064 = vadd.f32 0.0, %v1063
    %1065 = vdwg.mxu0
    %1066 = vmatprep.subr.bf16.mxu0 %v861
    %1067 = vmatpush1.bf16.msra.mxu0 %v860
    %1068 = vmatprep.subr.bf16.mxu0 %v869
    %1069 = vmatpush1.bf16.msra.mxu0 %v868
    %1070 = vmatprep.subr.bf16.mxu0 0
    %1071 = vmatpush1.bf16.msra.mxu0 0
    %1072 = vmatprep.subr.bf16.mxu0 0
    %1073 = vmatpush1.bf16.msra.mxu0 0
    %1074 = vmatprep.subr.bf16.mxu0 0
    %1075 = vmatpush1.bf16.msra.mxu0 0
    %1076 = vmatprep.subr.bf16.mxu0 0
    %1077 = vmatpush1.bf16.msra.mxu0 0
    %1078 = vmatprep.subr.bf16.mxu0 0
    %1079 = vmatpush1.bf16.msra.mxu0 0
    %1080 = vmatprep.subr.bf16.mxu0 0
    %1081 = vmatpush1.bf16.msra.mxu0 0
    %1082 = vmatprep.subr.bf16.mxu0 0
    %1083 = vmatpush1.bf16.msra.mxu0 0
    %1084 = vmatprep.subr.bf16.mxu0 0
    %1085 = vmatpush1.bf16.msra.mxu0 0
    %1086 = vmatprep.subr.bf16.mxu0 0
    %1087 = vmatpush1.bf16.msra.mxu0 0
    %1088 = vmatprep.subr.bf16.mxu0 0
    %1089 = vmatpush1.bf16.msra.mxu0 0
    %1090 = vmatprep.subr.bf16.mxu0 0
    %1091 = vmatpush1.bf16.msra.mxu0 0
    %1092 = vmatprep.subr.bf16.mxu0 0
    %1093 = vmatpush1.bf16.msra.mxu0 0
    %1094 = vmatprep.subr.bf16.mxu0 0
    %1095 = vmatpush1.bf16.msra.mxu0 0
    %1096 = vmatprep.subr.bf16.mxu0 0
    %1097 = vmatpush1.bf16.msra.mxu0 0
    %1098 = vmatprep.mubr.bf16.mxu0 0
    %1099 = vmatmul.mubr.bf16.gmra.mrb[0].mxu0 %v902
    %v1100 = vpop.f32.mrb[0].mxu0
    %v1101 = vadd.f32 0.0, %v1100
    %v1102 = vpop.f32.mrb[0].mxu0
    %v1103 = vadd.f32 0.0, %v1102
    %v1104 = vpop.f32.mrb[0].mxu0
    %v1105 = vadd.f32 0.0, %v1104
    %v1106 = vpop.f32.mrb[0].mxu0
    %v1107 = vadd.f32 0.0, %v1106
    %1108 = vmatprep.mubr.bf16.mxu0 0
    %1109 = vmatmul.mubr.bf16.gmra.mrb[0].mxu0 %v905
    %v1110 = vpop.f32.mrb[0].mxu0
    %v1111 = vadd.f32 0.0, %v1110
    %v1112 = vpop.f32.mrb[0].mxu0
    %v1113 = vadd.f32 0.0, %v1112
    %v1114 = vpop.f32.mrb[0].mxu0
    %v1115 = vadd.f32 0.0, %v1114
    %v1116 = vpop.f32.mrb[0].mxu0
    %v1117 = vadd.f32 0.0, %v1116
    %1118 = vdwg.mxu0
    %v1119 = vpack.c.bf16 %v946, %v942
    %v1120 = vpack.c.bf16 %v948, %v944
    %v1121 = vpack.c.bf16 %v999, %v995
    %v1122 = vpack.c.bf16 %v1001, %v997
    %v1123 = vpack.c.bf16 %v1052, %v1048
    %v1124 = vpack.c.bf16 %v1054, %v1050
    %v1125 = vpack.c.bf16 %v1105, %v1101
    %v1126 = vpack.c.bf16 %v1107, %v1103
    %v1127 = vpack.c.bf16 %v956, %v952
    %v1128 = vpack.c.bf16 %v958, %v954
    %v1129 = vpack.c.bf16 %v1009, %v1005
    %v1130 = vpack.c.bf16 %v1011, %v1007
    %v1131 = vpack.c.bf16 %v1062, %v1058
    %v1132 = vpack.c.bf16 %v1064, %v1060
    %v1133 = vpack.c.bf16 %v1115, %v1111
    %v1134 = vpack.c.bf16 %v1117, %v1113
    %v1135 = vld [vmem:[%s4] sm:$0xff]
    %v1136 = vld [vmem:[%s4 + $0x8] sm:$0xff]
    %v1137 = vld [vmem:[%s4 + $0x10] sm:$0xff]
    %v1138 = vld [vmem:[%s4 + $0x18] sm:$0xff]
    %v1139 = vpack.c.bf16 %v1136, %v1135
    %v1140 = vpack.c.bf16 %v1138, %v1137
    %1142 = vset.pattern.permute.xlu0 0
    %1143 = vperm.xlu0 %1142, %v1139
    %v1144 = vpop.permute.xlu0 %1143
    %1147 = vset.pattern.permute.xlu0 0
    %1148 = vperm.xlu0 %1147, %v1140
    %v1149 = vpop.permute.xlu0 %1148
    %v1151 = vadd.bf16 %v1119, %v1144
    %v1152 = vadd.bf16 %v1120, %v1144
    %v1153 = vadd.bf16 %v1121, %v1144
    %v1154 = vadd.bf16 %v1122, %v1144
    %v1155 = vadd.bf16 %v1123, %v1144
    %v1156 = vadd.bf16 %v1124, %v1144
    %v1157 = vadd.bf16 %v1125, %v1144
    %v1158 = vadd.bf16 %v1126, %v1144
    %v1159 = vadd.bf16 %v1127, %v1149
    %v1160 = vadd.bf16 %v1128, %v1149
    %v1161 = vadd.bf16 %v1129, %v1149
    %v1162 = vadd.bf16 %v1130, %v1149
    %v1163 = vadd.bf16 %v1131, %v1149
    %v1164 = vadd.bf16 %v1132, %v1149
    %v1165 = vadd.bf16 %v1133, %v1149
    %v1166 = vadd.bf16 %v1134, %v1149
    %v1167 = vmax.bf16 %v1151, 0
    %v1168 = vmax.bf16 %v1152, 0
    %v1169 = vmax.bf16 %v1153, 0
    %v1170 = vmax.bf16 %v1154, 0
    %v1171 = vmax.bf16 %v1155, 0
    %v1172 = vmax.bf16 %v1156, 0
    %v1173 = vmax.bf16 %v1157, 0
    %v1174 = vmax.bf16 %v1158, 0
    %v1175 = vmax.bf16 %v1159, 0
    %v1176 = vmax.bf16 %v1160, 0
    %v1177 = vmax.bf16 %v1161, 0
    %v1178 = vmax.bf16 %v1162, 0
    %v1179 = vmax.bf16 %v1163, 0
    %v1180 = vmax.bf16 %v1164, 0
    %v1181 = vmax.bf16 %v1165, 0
    %v1182 = vmax.bf16 %v1166, 0
    %v1183 = vld [vmem:[%s5] sm:$0xf]
    %v1184 = vld [vmem:[%s5 + $0x4] sm:$0xf]
    %v1185 = vld [vmem:[%s5 + $0x8] sm:$0xf]
    %v1186 = vld [vmem:[%s5 + $0xc] sm:$0xf]
    %v1191 = vunpack.c.l.b16 %v1183
    %v1192 = vunpack.c.l.b16 %v1184
    %v1193 = vunpack.c.l.b16 %v1185
    %v1194 = vunpack.c.l.b16 %v1186
    %v1195 = vpack.c.b16 %v1192, %v1191
    %v1196 = vpack.c.b16 %v1194, %v1193
    %v1198 = vsel %vm900, %v1195, 0
    %v1201 = vsel %vm900, %v1196, 0
    %1203 = vmatprep.subr.bf16.mxu0 %v1168
    %1204 = vmatpush1.bf16.msra.mxu0 %v1167
    %1205 = vmatprep.subr.bf16.mxu0 %v1176
    %1206 = vmatpush1.bf16.msra.mxu0 %v1175
    %1207 = vmatprep.subr.bf16.mxu0 0
    %1208 = vmatpush1.bf16.msra.mxu0 0
    %1209 = vmatprep.subr.bf16.mxu0 0
    %1210 = vmatpush1.bf16.msra.mxu0 0
    %1211 = vmatprep.subr.bf16.mxu0 0
    %1212 = vmatpush1.bf16.msra.mxu0 0
    %1213 = vmatprep.subr.bf16.mxu0 0
    %1214 = vmatpush1.bf16.msra.mxu0 0
    %1215 = vmatprep.subr.bf16.mxu0 0
    %1216 = vmatpush1.bf16.msra.mxu0 0
    %1217 = vmatprep.subr.bf16.mxu0 0
    %1218 = vmatpush1.bf16.msra.mxu0 0
    %1219 = vmatprep.subr.bf16.mxu0 0
    %1220 = vmatpush1.bf16.msra.mxu0 0
    %1221 = vmatprep.subr.bf16.mxu0 0
    %1222 = vmatpush1.bf16.msra.mxu0 0
    %1223 = vmatprep.subr.bf16.mxu0 0
    %1224 = vmatpush1.bf16.msra.mxu0 0
    %1225 = vmatprep.subr.bf16.mxu0 0
    %1226 = vmatpush1.bf16.msra.mxu0 0
    %1227 = vmatprep.subr.bf16.mxu0 0
    %1228 = vmatpush1.bf16.msra.mxu0 0
    %1229 = vmatprep.subr.bf16.mxu0 0
    %1230 = vmatpush1.bf16.msra.mxu0 0
    %1231 = vmatprep.subr.bf16.mxu0 0
    %1232 = vmatpush1.bf16.msra.mxu0 0
    %1233 = vmatprep.subr.bf16.mxu0 0
    %1234 = vmatpush1.bf16.msra.mxu0 0
    %1235 = vmatprep.mubr.bf16.mxu0 0
    %1236 = vmatmul.mubr.bf16.gmra.mrb[0].mxu0 %v1198
    %v1237 = vpop.f32.mrb[0].mxu0
    %v1238 = vadd.f32 0.0, %v1237
    %v1239 = vpop.f32.mrb[0].mxu0
    %v1240 = vadd.f32 0.0, %v1239
    %v1241 = vpop.f32.mrb[0].mxu0
    %v1242 = vadd.f32 0.0, %v1241
    %v1243 = vpop.f32.mrb[0].mxu0
    %v1244 = vadd.f32 0.0, %v1243
    %1245 = vmatprep.mubr.bf16.mxu0 0
    %1246 = vmatmul.mubr.bf16.gmra.mrb[0].mxu0 %v1201
    %v1247 = vpop.f32.mrb[0].mxu0
    %v1248 = vadd.f32 0.0, %v1247
    %v1249 = vpop.f32.mrb[0].mxu0
    %v1250 = vadd.f32 0.0, %v1249
    %v1251 = vpop.f32.mrb[0].mxu0
    %v1252 = vadd.f32 0.0, %v1251
    %v1253 = vpop.f32.mrb[0].mxu0
    %v1254 = vadd.f32 0.0, %v1253
    %1255 = vdwg.mxu0
    %1256 = vmatprep.subr.bf16.mxu0 %v1170
    %1257 = vmatpush1.bf16.msra.mxu0 %v1169
    %1258 = vmatprep.subr.bf16.mxu0 %v1178
    %1259 = vmatpush1.bf16.msra.mxu0 %v1177
    %1260 = vmatprep.subr.bf16.mxu0 0
    %1261 = vmatpush1.bf16.msra.mxu0 0
    %1262 = vmatprep.subr.bf16.mxu0 0
    %1263 = vmatpush1.bf16.msra.mxu0 0
    %1264 = vmatprep.subr.bf16.mxu0 0
    %1265 = vmatpush1.bf16.msra.mxu0 0
    %1266 = vmatprep.subr.bf16.mxu0 0
    %1267 = vmatpush1.bf16.msra.mxu0 0
    %1268 = vmatprep.subr.bf16.mxu0 0
    %1269 = vmatpush1.bf16.msra.mxu0 0
    %1270 = vmatprep.subr.bf16.mxu0 0
    %1271 = vmatpush1.bf16.msra.mxu0 0
    %1272 = vmatprep.subr.bf16.mxu0 0
    %1273 = vmatpush1.bf16.msra.mxu0 0
    %1274 = vmatprep.subr.bf16.mxu0 0
    %1275 = vmatpush1.bf16.msra.mxu0 0
    %1276 = vmatprep.subr.bf16.mxu0 0
    %1277 = vmatpush1.bf16.msra.mxu0 0
    %1278 = vmatprep.subr.bf16.mxu0 0
    %1279 = vmatpush1.bf16.msra.mxu0 0
    %1280 = vmatprep.subr.bf16.mxu0 0
    %1281 = vmatpush1.bf16.msra.mxu0 0
    %1282 = vmatprep.subr.bf16.mxu0 0
    %1283 = vmatpush1.bf16.msra.mxu0 0
    %1284 = vmatprep.subr.bf16.mxu0 0
    %1285 = vmatpush1.bf16.msra.mxu0 0
    %1286 = vmatprep.subr.bf16.mxu0 0
    %1287 = vmatpush1.bf16.msra.mxu0 0
    %1288 = vmatprep.mubr.bf16.mxu0 0
    %1289 = vmatmul.mubr.bf16.gmra.mrb[0].mxu0 %v1198
    %v1290 = vpop.f32.mrb[0].mxu0
    %v1291 = vadd.f32 0.0, %v1290
    %v1292 = vpop.f32.mrb[0].mxu0
    %v1293 = vadd.f32 0.0, %v1292
    %v1294 = vpop.f32.mrb[0].mxu0
    %v1295 = vadd.f32 0.0, %v1294
    %v1296 = vpop.f32.mrb[0].mxu0
    %v1297 = vadd.f32 0.0, %v1296
    %1298 = vmatprep.mubr.bf16.mxu0 0
    %1299 = vmatmul.mubr.bf16.gmra.mrb[0].mxu0 %v1201
    %v1300 = vpop.f32.mrb[0].mxu0
    %v1301 = vadd.f32 0.0, %v1300
    %v1302 = vpop.f32.mrb[0].mxu0
    %v1303 = vadd.f32 0.0, %v1302
    %v1304 = vpop.f32.mrb[0].mxu0
    %v1305 = vadd.f32 0.0, %v1304
    %v1306 = vpop.f32.mrb[0].mxu0
    %v1307 = vadd.f32 0.0, %v1306
    %1308 = vdwg.mxu0
    %1309 = vmatprep.subr.bf16.mxu0 %v1172
    %1310 = vmatpush1.bf16.msra.mxu0 %v1171
    %1311 = vmatprep.subr.bf16.mxu0 %v1180
    %1312 = vmatpush1.bf16.msra.mxu0 %v1179
    %1313 = vmatprep.subr.bf16.mxu0 0
    %1314 = vmatpush1.bf16.msra.mxu0 0
    %1315 = vmatprep.subr.bf16.mxu0 0
    %1316 = vmatpush1.bf16.msra.mxu0 0
    %1317 = vmatprep.subr.bf16.mxu0 0
    %1318 = vmatpush1.bf16.msra.mxu0 0
    %1319 = vmatprep.subr.bf16.mxu0 0
    %1320 = vmatpush1.bf16.msra.mxu0 0
    %1321 = vmatprep.subr.bf16.mxu0 0
    %1322 = vmatpush1.bf16.msra.mxu0 0
    %1323 = vmatprep.subr.bf16.mxu0 0
    %1324 = vmatpush1.bf16.msra.mxu0 0
    %1325 = vmatprep.subr.bf16.mxu0 0
    %1326 = vmatpush1.bf16.msra.mxu0 0
    %1327 = vmatprep.subr.bf16.mxu0 0
    %1328 = vmatpush1.bf16.msra.mxu0 0
    %1329 = vmatprep.subr.bf16.mxu0 0
    %1330 = vmatpush1.bf16.msra.mxu0 0
    %1331 = vmatprep.subr.bf16.mxu0 0
    %1332 = vmatpush1.bf16.msra.mxu0 0
    %1333 = vmatprep.subr.bf16.mxu0 0
    %1334 = vmatpush1.bf16.msra.mxu0 0
    %1335 = vmatprep.subr.bf16.mxu0 0
    %1336 = vmatpush1.bf16.msra.mxu0 0
    %1337 = vmatprep.subr.bf16.mxu0 0
    %1338 = vmatpush1.bf16.msra.mxu0 0
    %1339 = vmatprep.subr.bf16.mxu0 0
    %1340 = vmatpush1.bf16.msra.mxu0 0
    %1341 = vmatprep.mubr.bf16.mxu0 0
    %1342 = vmatmul.mubr.bf16.gmra.mrb[0].mxu0 %v1198
    %v1343 = vpop.f32.mrb[0].mxu0
    %v1344 = vadd.f32 0.0, %v1343
    %v1345 = vpop.f32.mrb[0].mxu0
    %v1346 = vadd.f32 0.0, %v1345
    %v1347 = vpop.f32.mrb[0].mxu0
    %v1348 = vadd.f32 0.0, %v1347
    %v1349 = vpop.f32.mrb[0].mxu0
    %v1350 = vadd.f32 0.0, %v1349
    %1351 = vmatprep.mubr.bf16.mxu0 0
    %1352 = vmatmul.mubr.bf16.gmra.mrb[0].mxu0 %v1201
    %v1353 = vpop.f32.mrb[0].mxu0
    %v1354 = vadd.f32 0.0, %v1353
    %v1355 = vpop.f32.mrb[0].mxu0
    %v1356 = vadd.f32 0.0, %v1355
    %v1357 = vpop.f32.mrb[0].mxu0
    %v1358 = vadd.f32 0.0, %v1357
    %v1359 = vpop.f32.mrb[0].mxu0
    %v1360 = vadd.f32 0.0, %v1359
    %1361 = vdwg.mxu0
    %1362 = vmatprep.subr.bf16.mxu0 %v1174
    %1363 = vmatpush1.bf16.msra.mxu0 %v1173
    %1364 = vmatprep.subr.bf16.mxu0 %v1182
    %1365 = vmatpush1.bf16.msra.mxu0 %v1181
    %1366 = vmatprep.subr.bf16.mxu0 0
    %1367 = vmatpush1.bf16.msra.mxu0 0
    %1368 = vmatprep.subr.bf16.mxu0 0
    %1369 = vmatpush1.bf16.msra.mxu0 0
    %1370 = vmatprep.subr.bf16.mxu0 0
    %1371 = vmatpush1.bf16.msra.mxu0 0
    %1372 = vmatprep.subr.bf16.mxu0 0
    %1373 = vmatpush1.bf16.msra.mxu0 0
    %1374 = vmatprep.subr.bf16.mxu0 0
    %1375 = vmatpush1.bf16.msra.mxu0 0
    %1376 = vmatprep.subr.bf16.mxu0 0
    %1377 = vmatpush1.bf16.msra.mxu0 0
    %1378 = vmatprep.subr.bf16.mxu0 0
    %1379 = vmatpush1.bf16.msra.mxu0 0
    %1380 = vmatprep.subr.bf16.mxu0 0
    %1381 = vmatpush1.bf16.msra.mxu0 0
    %1382 = vmatprep.subr.bf16.mxu0 0
    %1383 = vmatpush1.bf16.msra.mxu0 0
    %1384 = vmatprep.subr.bf16.mxu0 0
    %1385 = vmatpush1.bf16.msra.mxu0 0
    %1386 = vmatprep.subr.bf16.mxu0 0
    %1387 = vmatpush1.bf16.msra.mxu0 0
    %1388 = vmatprep.subr.bf16.mxu0 0
    %1389 = vmatpush1.bf16.msra.mxu0 0
    %1390 = vmatprep.subr.bf16.mxu0 0
    %1391 = vmatpush1.bf16.msra.mxu0 0
    %1392 = vmatprep.subr.bf16.mxu0 0
    %1393 = vmatpush1.bf16.msra.mxu0 0
    %1394 = vmatprep.mubr.bf16.mxu0 0
    %1395 = vmatmul.mubr.bf16.gmra.mrb[0].mxu0 %v1198
    %v1396 = vpop.f32.mrb[0].mxu0
    %v1397 = vadd.f32 0.0, %v1396
    %v1398 = vpop.f32.mrb[0].mxu0
    %v1399 = vadd.f32 0.0, %v1398
    %v1400 = vpop.f32.mrb[0].mxu0
    %v1401 = vadd.f32 0.0, %v1400
    %v1402 = vpop.f32.mrb[0].mxu0
    %v1403 = vadd.f32 0.0, %v1402
    %1404 = vmatprep.mubr.bf16.mxu0 0
    %1405 = vmatmul.mubr.bf16.gmra.mrb[0].mxu0 %v1201
    %v1406 = vpop.f32.mrb[0].mxu0
    %v1407 = vadd.f32 0.0, %v1406
    %v1408 = vpop.f32.mrb[0].mxu0
    %v1409 = vadd.f32 0.0, %v1408
    %v1410 = vpop.f32.mrb[0].mxu0
    %v1411 = vadd.f32 0.0, %v1410
    %v1412 = vpop.f32.mrb[0].mxu0
    %v1413 = vadd.f32 0.0, %v1412
    %1414 = vdwg.mxu0
    %v1415 = vpack.c.bf16 %v1242, %v1238
    %v1416 = vpack.c.bf16 %v1244, %v1240
    %v1417 = vpack.c.bf16 %v1295, %v1291
    %v1418 = vpack.c.bf16 %v1297, %v1293
    %v1419 = vpack.c.bf16 %v1348, %v1344
    %v1420 = vpack.c.bf16 %v1350, %v1346
    %v1421 = vpack.c.bf16 %v1401, %v1397
    %v1422 = vpack.c.bf16 %v1403, %v1399
    %v1423 = vpack.c.bf16 %v1252, %v1248
    %v1424 = vpack.c.bf16 %v1254, %v1250
    %v1425 = vpack.c.bf16 %v1305, %v1301
    %v1426 = vpack.c.bf16 %v1307, %v1303
    %v1427 = vpack.c.bf16 %v1358, %v1354
    %v1428 = vpack.c.bf16 %v1360, %v1356
    %v1429 = vpack.c.bf16 %v1411, %v1407
    %v1430 = vpack.c.bf16 %v1413, %v1409
    %v1431 = vld [vmem:[%s6] sm:$0xff]
    %v1432 = vld [vmem:[%s6 + $0x8] sm:$0xff]
    %v1433 = vld [vmem:[%s6 + $0x10] sm:$0xff]
    %v1434 = vld [vmem:[%s6 + $0x18] sm:$0xff]
    %v1435 = vpack.c.bf16 %v1432, %v1431
    %v1436 = vpack.c.bf16 %v1434, %v1433
    %1438 = vset.pattern.permute.xlu0 0
    %1439 = vperm.xlu0 %1438, %v1435
    %v1440 = vpop.permute.xlu0 %1439
    %1443 = vset.pattern.permute.xlu0 0
    %1444 = vperm.xlu0 %1443, %v1436
    %v1445 = vpop.permute.xlu0 %1444
    %v1447 = vadd.bf16 %v1415, %v1440
    %v1448 = vadd.bf16 %v1416, %v1440
    %v1449 = vadd.bf16 %v1417, %v1440
    %v1450 = vadd.bf16 %v1418, %v1440
    %v1451 = vadd.bf16 %v1419, %v1440
    %v1452 = vadd.bf16 %v1420, %v1440
    %v1453 = vadd.bf16 %v1421, %v1440
    %v1454 = vadd.bf16 %v1422, %v1440
    %v1455 = vadd.bf16 %v1423, %v1445
    %v1456 = vadd.bf16 %v1424, %v1445
    %v1457 = vadd.bf16 %v1425, %v1445
    %v1458 = vadd.bf16 %v1426, %v1445
    %v1459 = vadd.bf16 %v1427, %v1445
    %v1460 = vadd.bf16 %v1428, %v1445
    %v1461 = vadd.bf16 %v1429, %v1445
    %v1462 = vadd.bf16 %v1430, %v1445
    %v1463 = vmax.bf16 %v1447, 0
    %v1464 = vmax.bf16 %v1448, 0
    %v1465 = vmax.bf16 %v1449, 0
    %v1466 = vmax.bf16 %v1450, 0
    %v1467 = vmax.bf16 %v1451, 0
    %v1468 = vmax.bf16 %v1452, 0
    %v1469 = vmax.bf16 %v1453, 0
    %v1470 = vmax.bf16 %v1454, 0
    %v1471 = vmax.bf16 %v1455, 0
    %v1472 = vmax.bf16 %v1456, 0
    %v1473 = vmax.bf16 %v1457, 0
    %v1474 = vmax.bf16 %v1458, 0
    %v1475 = vmax.bf16 %v1459, 0
    %v1476 = vmax.bf16 %v1460, 0
    %v1477 = vmax.bf16 %v1461, 0
    %v1478 = vmax.bf16 %v1462, 0
    %v1479 = vadd.bf16 %v1463, %v870
    %v1480 = vadd.bf16 %v1464, %v871
    %v1481 = vadd.bf16 %v1465, %v872
    %v1482 = vadd.bf16 %v1466, %v873
    %v1483 = vadd.bf16 %v1467, %v874
    %v1484 = vadd.bf16 %v1468, %v875
    %v1485 = vadd.bf16 %v1469, %v876
    %v1486 = vadd.bf16 %v1470, %v877
    %v1487 = vadd.bf16 %v1471, %v878
    %v1488 = vadd.bf16 %v1472, %v879
    %v1489 = vadd.bf16 %v1473, %v880
    %v1490 = vadd.bf16 %v1474, %v881
    %v1491 = vadd.bf16 %v1475, %v882
    %v1492 = vadd.bf16 %v1476, %v883
    %v1493 = vadd.bf16 %v1477, %v884
    %v1494 = vadd.bf16 %v1478, %v885
    %v1495 = vld [vmem:[%s7] sm:$0xf]
    %v1496 = vld [vmem:[%s7 + $0x4] sm:$0xf]
    %v1497 = vld [vmem:[%s7 + $0x8] sm:$0xf]
    %v1498 = vld [vmem:[%s7 + $0xc] sm:$0xf]
    %v1499 = vld [vmem:[%s7 + $0x10] sm:$0xf]
    %v1500 = vld [vmem:[%s7 + $0x14] sm:$0xf]
    %v1507 = vunpack.c.l.b16 %v1495
    %v1508 = vunpack.c.l.b16 %v1496
    %v1509 = vunpack.c.l.b16 %v1497
    %v1510 = vunpack.c.l.b16 %v1498
    %v1511 = vunpack.c.l.b16 %v1499
    %v1512 = vunpack.c.l.b16 %v1500
    %v1513 = vpack.c.b16 %v1508, %v1507
    %v1514 = vpack.c.b16 %v1510, %v1509
    %v1515 = vpack.c.b16 %v1512, %v1511
    %v1517 = vsel %vm900, %v1513, 0
    %v1520 = vsel %vm900, %v1514, 0
    %v1523 = vsel %vm900, %v1515, 0
    %1525 = vmatprep.subr.bf16.mxu0 %v1480
    %1526 = vmatpush1.bf16.msra.mxu0 %v1479
    %1527 = vmatprep.subr.bf16.mxu0 %v1488
    %1528 = vmatpush1.bf16.msra.mxu0 %v1487
    %1529 = vmatprep.subr.bf16.mxu0 0
    %1530 = vmatpush1.bf16.msra.mxu0 0
    %1531 = vmatprep.subr.bf16.mxu0 0
    %1532 = vmatpush1.bf16.msra.mxu0 0
    %1533 = vmatprep.subr.bf16.mxu0 0
    %1534 = vmatpush1.bf16.msra.mxu0 0
    %1535 = vmatprep.subr.bf16.mxu0 0
    %1536 = vmatpush1.bf16.msra.mxu0 0
    %1537 = vmatprep.subr.bf16.mxu0 0
    %1538 = vmatpush1.bf16.msra.mxu0 0
    %1539 = vmatprep.subr.bf16.mxu0 0
    %1540 = vmatpush1.bf16.msra.mxu0 0
    %1541 = vmatprep.subr.bf16.mxu0 0
    %1542 = vmatpush1.bf16.msra.mxu0 0
    %1543 = vmatprep.subr.bf16.mxu0 0
    %1544 = vmatpush1.bf16.msra.mxu0 0
    %1545 = vmatprep.subr.bf16.mxu0 0
    %1546 = vmatpush1.bf16.msra.mxu0 0
    %1547 = vmatprep.subr.bf16.mxu0 0
    %1548 = vmatpush1.bf16.msra.mxu0 0
    %1549 = vmatprep.subr.bf16.mxu0 0
    %1550 = vmatpush1.bf16.msra.mxu0 0
    %1551 = vmatprep.subr.bf16.mxu0 0
    %1552 = vmatpush1.bf16.msra.mxu0 0
    %1553 = vmatprep.subr.bf16.mxu0 0
    %1554 = vmatpush1.bf16.msra.mxu0 0
    %1555 = vmatprep.subr.bf16.mxu0 0
    %1556 = vmatpush1.bf16.msra.mxu0 0
    %1557 = vmatprep.mubr.bf16.mxu0 0
    %1558 = vmatmul.mubr.bf16.gmra.mrb[0].mxu0 %v1517
    %v1559 = vpop.f32.mrb[0].mxu0
    %v1560 = vadd.f32 0.0, %v1559
    %v1561 = vpop.f32.mrb[0].mxu0
    %v1562 = vadd.f32 0.0, %v1561
    %v1563 = vpop.f32.mrb[0].mxu0
    %v1564 = vadd.f32 0.0, %v1563
    %v1565 = vpop.f32.mrb[0].mxu0
    %v1566 = vadd.f32 0.0, %v1565
    %1567 = vmatprep.mubr.bf16.mxu0 0
    %1568 = vmatmul.mubr.bf16.gmra.mrb[0].mxu0 %v1520
    %v1569 = vpop.f32.mrb[0].mxu0
    %v1570 = vadd.f32 0.0, %v1569
    %v1571 = vpop.f32.mrb[0].mxu0
    %v1572 = vadd.f32 0.0, %v1571
    %v1573 = vpop.f32.mrb[0].mxu0
    %v1574 = vadd.f32 0.0, %v1573
    %v1575 = vpop.f32.mrb[0].mxu0
    %v1576 = vadd.f32 0.0, %v1575
    %1577 = vmatprep.mubr.bf16.mxu0 0
    %1578 = vmatmul.mubr.bf16.gmra.mrb[0].mxu0 %v1523
    %v1579 = vpop.f32.mrb[0].mxu0
    %v1580 = vadd.f32 0.0, %v1579
    %v1581 = vpop.f32.mrb[0].mxu0
    %v1582 = vadd.f32 0.0, %v1581
    %v1583 = vpop.f32.mrb[0].mxu0
    %v1584 = vadd.f32 0.0, %v1583
    %v1585 = vpop.f32.mrb[0].mxu0
    %v1586 = vadd.f32 0.0, %v1585
    %1587 = vdwg.mxu0
    %1588 = vmatprep.subr.bf16.mxu0 %v1482
    %1589 = vmatpush1.bf16.msra.mxu0 %v1481
    %1590 = vmatprep.subr.bf16.mxu0 %v1490
    %1591 = vmatpush1.bf16.msra.mxu0 %v1489
    %1592 = vmatprep.subr.bf16.mxu0 0
    %1593 = vmatpush1.bf16.msra.mxu0 0
    %1594 = vmatprep.subr.bf16.mxu0 0
    %1595 = vmatpush1.bf16.msra.mxu0 0
    %1596 = vmatprep.subr.bf16.mxu0 0
    %1597 = vmatpush1.bf16.msra.mxu0 0
    %1598 = vmatprep.subr.bf16.mxu0 0
    %1599 = vmatpush1.bf16.msra.mxu0 0
    %1600 = vmatprep.subr.bf16.mxu0 0
    %1601 = vmatpush1.bf16.msra.mxu0 0
    %1602 = vmatprep.subr.bf16.mxu0 0
    %1603 = vmatpush1.bf16.msra.mxu0 0
    %1604 = vmatprep.subr.bf16.mxu0 0
    %1605 = vmatpush1.bf16.msra.mxu0 0
    %1606 = vmatprep.subr.bf16.mxu0 0
    %1607 = vmatpush1.bf16.msra.mxu0 0
    %1608 = vmatprep.subr.bf16.mxu0 0
    %1609 = vmatpush1.bf16.msra.mxu0 0
    %1610 = vmatprep.subr.bf16.mxu0 0
    %1611 = vmatpush1.bf16.msra.mxu0 0
    %1612 = vmatprep.subr.bf16.mxu0 0
    %1613 = vmatpush1.bf16.msra.mxu0 0
    %1614 = vmatprep.subr.bf16.mxu0 0
    %1615 = vmatpush1.bf16.msra.mxu0 0
    %1616 = vmatprep.subr.bf16.mxu0 0
    %1617 = vmatpush1.bf16.msra.mxu0 0
    %1618 = vmatprep.subr.bf16.mxu0 0
    %1619 = vmatpush1.bf16.msra.mxu0 0
    %1620 = vmatprep.mubr.bf16.mxu0 0
    %1621 = vmatmul.mubr.bf16.gmra.mrb[0].mxu0 %v1517
    %v1622 = vpop.f32.mrb[0].mxu0
    %v1623 = vadd.f32 0.0, %v1622
    %v1624 = vpop.f32.mrb[0].mxu0
    %v1625 = vadd.f32 0.0, %v1624
    %v1626 = vpop.f32.mrb[0].mxu0
    %v1627 = vadd.f32 0.0, %v1626
    %v1628 = vpop.f32.mrb[0].mxu0
    %v1629 = vadd.f32 0.0, %v1628
    %1630 = vmatprep.mubr.bf16.mxu0 0
    %1631 = vmatmul.mubr.bf16.gmra.mrb[0].mxu0 %v1520
    %v1632 = vpop.f32.mrb[0].mxu0
    %v1633 = vadd.f32 0.0, %v1632
    %v1634 = vpop.f32.mrb[0].mxu0
    %v1635 = vadd.f32 0.0, %v1634
    %v1636 = vpop.f32.mrb[0].mxu0
    %v1637 = vadd.f32 0.0, %v1636
    %v1638 = vpop.f32.mrb[0].mxu0
    %v1639 = vadd.f32 0.0, %v1638
    %1640 = vmatprep.mubr.bf16.mxu0 0
    %1641 = vmatmul.mubr.bf16.gmra.mrb[0].mxu0 %v1523
    %v1642 = vpop.f32.mrb[0].mxu0
    %v1643 = vadd.f32 0.0, %v1642
    %v1644 = vpop.f32.mrb[0].mxu0
    %v1645 = vadd.f32 0.0, %v1644
    %v1646 = vpop.f32.mrb[0].mxu0
    %v1647 = vadd.f32 0.0, %v1646
    %v1648 = vpop.f32.mrb[0].mxu0
    %v1649 = vadd.f32 0.0, %v1648
    %1650 = vdwg.mxu0
    %1651 = vmatprep.subr.bf16.mxu0 %v1484
    %1652 = vmatpush1.bf16.msra.mxu0 %v1483
    %1653 = vmatprep.subr.bf16.mxu0 %v1492
    %1654 = vmatpush1.bf16.msra.mxu0 %v1491
    %1655 = vmatprep.subr.bf16.mxu0 0
    %1656 = vmatpush1.bf16.msra.mxu0 0
    %1657 = vmatprep.subr.bf16.mxu0 0
    %1658 = vmatpush1.bf16.msra.mxu0 0
    %1659 = vmatprep.subr.bf16.mxu0 0
    %1660 = vmatpush1.bf16.msra.mxu0 0
    %1661 = vmatprep.subr.bf16.mxu0 0
    %1662 = vmatpush1.bf16.msra.mxu0 0
    %1663 = vmatprep.subr.bf16.mxu0 0
    %1664 = vmatpush1.bf16.msra.mxu0 0
    %1665 = vmatprep.subr.bf16.mxu0 0
    %1666 = vmatpush1.bf16.msra.mxu0 0
    %1667 = vmatprep.subr.bf16.mxu0 0
    %1668 = vmatpush1.bf16.msra.mxu0 0
    %1669 = vmatprep.subr.bf16.mxu0 0
    %1670 = vmatpush1.bf16.msra.mxu0 0
    %1671 = vmatprep.subr.bf16.mxu0 0
    %1672 = vmatpush1.bf16.msra.mxu0 0
    %1673 = vmatprep.subr.bf16.mxu0 0
    %1674 = vmatpush1.bf16.msra.mxu0 0
    %1675 = vmatprep.subr.bf16.mxu0 0
    %1676 = vmatpush1.bf16.msra.mxu0 0
    %1677 = vmatprep.subr.bf16.mxu0 0
    %1678 = vmatpush1.bf16.msra.mxu0 0
    %1679 = vmatprep.subr.bf16.mxu0 0
    %1680 = vmatpush1.bf16.msra.mxu0 0
    %1681 = vmatprep.subr.bf16.mxu0 0
    %1682 = vmatpush1.bf16.msra.mxu0 0
    %1683 = vmatprep.mubr.bf16.mxu0 0
    %1684 = vmatmul.mubr.bf16.gmra.mrb[0].mxu0 %v1517
    %v1685 = vpop.f32.mrb[0].mxu0
    %v1686 = vadd.f32 0.0, %v1685
    %v1687 = vpop.f32.mrb[0].mxu0
    %v1688 = vadd.f32 0.0, %v1687
    %v1689 = vpop.f32.mrb[0].mxu0
    %v1690 = vadd.f32 0.0, %v1689
    %v1691 = vpop.f32.mrb[0].mxu0
    %v1692 = vadd.f32 0.0, %v1691
    %1693 = vmatprep.mubr.bf16.mxu0 0
    %1694 = vmatmul.mubr.bf16.gmra.mrb[0].mxu0 %v1520
    %v1695 = vpop.f32.mrb[0].mxu0
    %v1696 = vadd.f32 0.0, %v1695
    %v1697 = vpop.f32.mrb[0].mxu0
    %v1698 = vadd.f32 0.0, %v1697
    %v1699 = vpop.f32.mrb[0].mxu0
    %v1700 = vadd.f32 0.0, %v1699
    %v1701 = vpop.f32.mrb[0].mxu0
    %v1702 = vadd.f32 0.0, %v1701
    %1703 = vmatprep.mubr.bf16.mxu0 0
    %1704 = vmatmul.mubr.bf16.gmra.mrb[0].mxu0 %v1523
    %v1705 = vpop.f32.mrb[0].mxu0
    %v1706 = vadd.f32 0.0, %v1705
    %v1707 = vpop.f32.mrb[0].mxu0
    %v1708 = vadd.f32 0.0, %v1707
    %v1709 = vpop.f32.mrb[0].mxu0
    %v1710 = vadd.f32 0.0, %v1709
    %v1711 = vpop.f32.mrb[0].mxu0
    %v1712 = vadd.f32 0.0, %v1711
    %1713 = vdwg.mxu0
    %1714 = vmatprep.subr.bf16.mxu0 %v1486
    %1715 = vmatpush1.bf16.msra.mxu0 %v1485
    %1716 = vmatprep.subr.bf16.mxu0 %v1494
    %1717 = vmatpush1.bf16.msra.mxu0 %v1493
    %1718 = vmatprep.subr.bf16.mxu0 0
    %1719 = vmatpush1.bf16.msra.mxu0 0
    %1720 = vmatprep.subr.bf16.mxu0 0
    %1721 = vmatpush1.bf16.msra.mxu0 0
    %1722 = vmatprep.subr.bf16.mxu0 0
    %1723 = vmatpush1.bf16.msra.mxu0 0
    %1724 = vmatprep.subr.bf16.mxu0 0
    %1725 = vmatpush1.bf16.msra.mxu0 0
    %1726 = vmatprep.subr.bf16.mxu0 0
    %1727 = vmatpush1.bf16.msra.mxu0 0
    %1728 = vmatprep.subr.bf16.mxu0 0
    %1729 = vmatpush1.bf16.msra.mxu0 0
    %1730 = vmatprep.subr.bf16.mxu0 0
    %1731 = vmatpush1.bf16.msra.mxu0 0
    %1732 = vmatprep.subr.bf16.mxu0 0
    %1733 = vmatpush1.bf16.msra.mxu0 0
    %1734 = vmatprep.subr.bf16.mxu0 0
    %1735 = vmatpush1.bf16.msra.mxu0 0
    %1736 = vmatprep.subr.bf16.mxu0 0
    %1737 = vmatpush1.bf16.msra.mxu0 0
    %1738 = vmatprep.subr.bf16.mxu0 0
    %1739 = vmatpush1.bf16.msra.mxu0 0
    %1740 = vmatprep.subr.bf16.mxu0 0
    %1741 = vmatpush1.bf16.msra.mxu0 0
    %1742 = vmatprep.subr.bf16.mxu0 0
    %1743 = vmatpush1.bf16.msra.mxu0 0
    %1744 = vmatprep.subr.bf16.mxu0 0
    %1745 = vmatpush1.bf16.msra.mxu0 0
    %1746 = vmatprep.mubr.bf16.mxu0 0
    %1747 = vmatmul.mubr.bf16.gmra.mrb[0].mxu0 %v1517
    %v1748 = vpop.f32.mrb[0].mxu0
    %v1749 = vadd.f32 0.0, %v1748
    %v1750 = vpop.f32.mrb[0].mxu0
    %v1751 = vadd.f32 0.0, %v1750
    %v1752 = vpop.f32.mrb[0].mxu0
    %v1753 = vadd.f32 0.0, %v1752
    %v1754 = vpop.f32.mrb[0].mxu0
    %v1755 = vadd.f32 0.0, %v1754
    %1756 = vmatprep.mubr.bf16.mxu0 0
    %1757 = vmatmul.mubr.bf16.gmra.mrb[0].mxu0 %v1520
    %v1758 = vpop.f32.mrb[0].mxu0
    %v1759 = vadd.f32 0.0, %v1758
    %v1760 = vpop.f32.mrb[0].mxu0
    %v1761 = vadd.f32 0.0, %v1760
    %v1762 = vpop.f32.mrb[0].mxu0
    %v1763 = vadd.f32 0.0, %v1762
    %v1764 = vpop.f32.mrb[0].mxu0
    %v1765 = vadd.f32 0.0, %v1764
    %1766 = vmatprep.mubr.bf16.mxu0 0
    %1767 = vmatmul.mubr.bf16.gmra.mrb[0].mxu0 %v1523
    %v1768 = vpop.f32.mrb[0].mxu0
    %v1769 = vadd.f32 0.0, %v1768
    %v1770 = vpop.f32.mrb[0].mxu0
    %v1771 = vadd.f32 0.0, %v1770
    %v1772 = vpop.f32.mrb[0].mxu0
    %v1773 = vadd.f32 0.0, %v1772
    %v1774 = vpop.f32.mrb[0].mxu0
    %v1775 = vadd.f32 0.0, %v1774
    %1776 = vdwg.mxu0
    %v1777 = vpack.c.bf16 %v1564, %v1560
    %v1778 = vpack.c.bf16 %v1566, %v1562
    %v1779 = vpack.c.bf16 %v1627, %v1623
    %v1780 = vpack.c.bf16 %v1629, %v1625
    %v1781 = vpack.c.bf16 %v1690, %v1686
    %v1782 = vpack.c.bf16 %v1692, %v1688
    %v1783 = vpack.c.bf16 %v1753, %v1749
    %v1784 = vpack.c.bf16 %v1755, %v1751
    %v1785 = vpack.c.bf16 %v1574, %v1570
    %v1786 = vpack.c.bf16 %v1576, %v1572
    %v1787 = vpack.c.bf16 %v1637, %v1633
    %v1788 = vpack.c.bf16 %v1639, %v1635
    %v1789 = vpack.c.bf16 %v1700, %v1696
    %v1790 = vpack.c.bf16 %v1702, %v1698
    %v1791 = vpack.c.bf16 %v1763, %v1759
    %v1792 = vpack.c.bf16 %v1765, %v1761
    %v1793 = vpack.c.bf16 %v1584, %v1580
    %v1794 = vpack.c.bf16 %v1586, %v1582
    %v1795 = vpack.c.bf16 %v1647, %v1643
    %v1796 = vpack.c.bf16 %v1649, %v1645
    %v1797 = vpack.c.bf16 %v1710, %v1706
    %v1798 = vpack.c.bf16 %v1712, %v1708
    %v1799 = vpack.c.bf16 %v1773, %v1769
    %v1800 = vpack.c.bf16 %v1775, %v1771
    %v1801 = vld [vmem:[%s8] sm:$0xff]
    %v1802 = vld [vmem:[%s8 + $0x8] sm:$0xff]
    %v1803 = vld [vmem:[%s8 + $0x10] sm:$0xff]
    %v1804 = vld [vmem:[%s8 + $0x18] sm:$0xff]
    %v1805 = vld [vmem:[%s8 + $0x20] sm:$0xff]
    %v1806 = vld [vmem:[%s8 + $0x28] sm:$0xff]
    %v1807 = vpack.c.bf16 %v1802, %v1801
    %v1808 = vpack.c.bf16 %v1804, %v1803
    %v1809 = vpack.c.bf16 %v1806, %v1805
    %1811 = vset.pattern.permute.xlu0 0
    %1812 = vperm.xlu0 %1811, %v1807
    %v1813 = vpop.permute.xlu0 %1812
    %1816 = vset.pattern.permute.xlu0 0
    %1817 = vperm.xlu0 %1816, %v1808
    %v1818 = vpop.permute.xlu0 %1817
    %1821 = vset.pattern.permute.xlu0 0
    %1822 = vperm.xlu0 %1821, %v1809
    %v1823 = vpop.permute.xlu0 %1822
    %v1825 = vadd.bf16 %v1777, %v1813
    %v1826 = vadd.bf16 %v1778, %v1813
    %v1827 = vadd.bf16 %v1779, %v1813
    %v1828 = vadd.bf16 %v1780, %v1813
    %v1829 = vadd.bf16 %v1781, %v1813
    %v1830 = vadd.bf16 %v1782, %v1813
    %v1831 = vadd.bf16 %v1783, %v1813
    %v1832 = vadd.bf16 %v1784, %v1813
    %v1833 = vadd.bf16 %v1785, %v1818
    %v1834 = vadd.bf16 %v1786, %v1818
    %v1835 = vadd.bf16 %v1787, %v1818
    %v1836 = vadd.bf16 %v1788, %v1818
    %v1837 = vadd.bf16 %v1789, %v1818
    %v1838 = vadd.bf16 %v1790, %v1818
    %v1839 = vadd.bf16 %v1791, %v1818
    %v1840 = vadd.bf16 %v1792, %v1818
    %v1841 = vadd.bf16 %v1793, %v1823
    %v1842 = vadd.bf16 %v1794, %v1823
    %v1843 = vadd.bf16 %v1795, %v1823
    %v1844 = vadd.bf16 %v1796, %v1823
    %v1845 = vadd.bf16 %v1797, %v1823
    %v1846 = vadd.bf16 %v1798, %v1823
    %v1847 = vadd.bf16 %v1799, %v1823
    %v1848 = vadd.bf16 %v1800, %v1823
    %v1849 = vmax.bf16 %v1825, 0
    %v1850 = vmax.bf16 %v1826, 0
    %v1851 = vmax.bf16 %v1827, 0
    %v1852 = vmax.bf16 %v1828, 0
    %v1853 = vmax.bf16 %v1829, 0
    %v1854 = vmax.bf16 %v1830, 0
    %v1855 = vmax.bf16 %v1831, 0
    %v1856 = vmax.bf16 %v1832, 0
    %v1857 = vmax.bf16 %v1833, 0
    %v1858 = vmax.bf16 %v1834, 0
    %v1859 = vmax.bf16 %v1835, 0
    %v1860 = vmax.bf16 %v1836, 0
    %v1861 = vmax.bf16 %v1837, 0
    %v1862 = vmax.bf16 %v1838, 0
    %v1863 = vmax.bf16 %v1839, 0
    %v1864 = vmax.bf16 %v1840, 0
    %v1865 = vmax.bf16 %v1841, 0
    %v1866 = vmax.bf16 %v1842, 0
    %v1867 = vmax.bf16 %v1843, 0
    %v1868 = vmax.bf16 %v1844, 0
    %v1869 = vmax.bf16 %v1845, 0
    %v1870 = vmax.bf16 %v1846, 0
    %v1871 = vmax.bf16 %v1847, 0
    %v1872 = vmax.bf16 %v1848, 0
    %v1873 = vunpack.c.l.bf16 %v1849
    %v1874 = vunpack.c.l.bf16 %v1850
    %v1875 = vunpack.c.l.bf16 %v1851
    %v1876 = vunpack.c.l.bf16 %v1852
    %v1877 = vunpack.c.l.bf16 %v1853
    %v1878 = vunpack.c.l.bf16 %v1854
    %v1879 = vunpack.c.l.bf16 %v1855
    %v1880 = vunpack.c.l.bf16 %v1856
    %v1881 = vunpack.c.h.bf16 %v1849
    %v1882 = vunpack.c.h.bf16 %v1850
    %v1883 = vunpack.c.h.bf16 %v1851
    %v1884 = vunpack.c.h.bf16 %v1852
    %v1885 = vunpack.c.h.bf16 %v1853
    %v1886 = vunpack.c.h.bf16 %v1854
    %v1887 = vunpack.c.h.bf16 %v1855
    %v1888 = vunpack.c.h.bf16 %v1856
    %v1889 = vunpack.c.l.bf16 %v1857
    %v1890 = vunpack.c.l.bf16 %v1858
    %v1891 = vunpack.c.l.bf16 %v1859
    %v1892 = vunpack.c.l.bf16 %v1860
    %v1893 = vunpack.c.l.bf16 %v1861
    %v1894 = vunpack.c.l.bf16 %v1862
    %v1895 = vunpack.c.l.bf16 %v1863
    %v1896 = vunpack.c.l.bf16 %v1864
    %v1897 = vunpack.c.h.bf16 %v1857
    %v1898 = vunpack.c.h.bf16 %v1858
    %v1899 = vunpack.c.h.bf16 %v1859
    %v1900 = vunpack.c.h.bf16 %v1860
    %v1901 = vunpack.c.h.bf16 %v1861
    %v1902 = vunpack.c.h.bf16 %v1862
    %v1903 = vunpack.c.h.bf16 %v1863
    %v1904 = vunpack.c.h.bf16 %v1864
    %v1905 = vunpack.c.l.bf16 %v1865
    %v1906 = vunpack.c.l.bf16 %v1866
    %v1907 = vunpack.c.l.bf16 %v1867
    %v1908 = vunpack.c.l.bf16 %v1868
    %v1909 = vunpack.c.l.bf16 %v1869
    %v1910 = vunpack.c.l.bf16 %v1870
    %v1911 = vunpack.c.l.bf16 %v1871
    %v1912 = vunpack.c.l.bf16 %v1872
    %v1913 = vunpack.c.h.bf16 %v1865
    %v1914 = vunpack.c.h.bf16 %v1866
    %v1915 = vunpack.c.h.bf16 %v1867
    %v1916 = vunpack.c.h.bf16 %v1868
    %v1917 = vunpack.c.h.bf16 %v1869
    %v1918 = vunpack.c.h.bf16 %v1870
    %v1919 = vunpack.c.h.bf16 %v1871
    %v1920 = vunpack.c.h.bf16 %v1872
    %1921 = vxpose.xlu0.b32.start [1/16] %v1873, 128
    %1922 = vxpose.xlu0.b32.cont [2/16] %v1881, 128
    %1923 = vxpose.xlu0.b32.cont [3/16] %v1889, 128
    %1924 = vxpose.xlu0.b32.cont [4/16] %v1897, 128
    %1925 = vxpose.xlu0.b32.cont [5/16] %v1905, 128
    %1926 = vxpose.xlu0.b32.cont [6/16] %v1913, 128
    %1927 = vxpose.xlu0.b32.cont [7/16] 0.0, 128
    %1928 = vxpose.xlu0.b32.cont [8/16] 0.0, 128
    %1929 = vxpose.xlu0.b32.cont [9/16] 0.0, 128
    %1930 = vxpose.xlu0.b32.cont [10/16] 0.0, 128
    %1931 = vxpose.xlu0.b32.cont [11/16] 0.0, 128
    %1932 = vxpose.xlu0.b32.cont [12/16] 0.0, 128
    %1933 = vxpose.xlu0.b32.cont [13/16] 0.0, 128
    %1934 = vxpose.xlu0.b32.cont [14/16] 0.0, 128
    %1935 = vxpose.xlu0.b32.cont [15/16] 0.0, 128
    %1936 = vxpose.xlu0.b32.end [16/16] 0.0, 128
    %v1937 = vpop.trf.xlu0
    %v1938 = vpop.trf.xlu0
    %v1939 = vpop.trf.xlu0
    %v1940 = vpop.trf.xlu0
    %v1941 = vpop.trf.xlu0
    %v1942 = vpop.trf.xlu0
    %v1943 = vpop.trf.xlu0
    %v1944 = vpop.trf.xlu0
    %v1945 = vpop.trf.xlu0
    %v1946 = vpop.trf.xlu0
    %v1947 = vpop.trf.xlu0
    %v1948 = vpop.trf.xlu0
    %v1949 = vpop.trf.xlu0
    %v1950 = vpop.trf.xlu0
    %v1951 = vpop.trf.xlu0
    %v1952 = vpop.trf.xlu0
    %1953 = vxpose.xlu0.b32.start [1/16] %v1874, 128
    %1954 = vxpose.xlu0.b32.cont [2/16] %v1882, 128
    %1955 = vxpose.xlu0.b32.cont [3/16] %v1890, 128
    %1956 = vxpose.xlu0.b32.cont [4/16] %v1898, 128
    %1957 = vxpose.xlu0.b32.cont [5/16] %v1906, 128
    %1958 = vxpose.xlu0.b32.cont [6/16] %v1914, 128
    %1959 = vxpose.xlu0.b32.cont [7/16] 0.0, 128
    %1960 = vxpose.xlu0.b32.cont [8/16] 0.0, 128
    %1961 = vxpose.xlu0.b32.cont [9/16] 0.0, 128
    %1962 = vxpose.xlu0.b32.cont [10/16] 0.0, 128
    %1963 = vxpose.xlu0.b32.cont [11/16] 0.0, 128
    %1964 = vxpose.xlu0.b32.cont [12/16] 0.0, 128
    %1965 = vxpose.xlu0.b32.cont [13/16] 0.0, 128
    %1966 = vxpose.xlu0.b32.cont [14/16] 0.0, 128
    %1967 = vxpose.xlu0.b32.cont [15/16] 0.0, 128
    %1968 = vxpose.xlu0.b32.end [16/16] 0.0, 128
    %v1969 = vpop.trf.xlu0
    %v1970 = vpop.trf.xlu0
    %v1971 = vpop.trf.xlu0
    %v1972 = vpop.trf.xlu0
    %v1973 = vpop.trf.xlu0
    %v1974 = vpop.trf.xlu0
    %v1975 = vpop.trf.xlu0
    %v1976 = vpop.trf.xlu0
    %v1977 = vpop.trf.xlu0
    %v1978 = vpop.trf.xlu0
    %v1979 = vpop.trf.xlu0
    %v1980 = vpop.trf.xlu0
    %v1981 = vpop.trf.xlu0
    %v1982 = vpop.trf.xlu0
    %v1983 = vpop.trf.xlu0
    %v1984 = vpop.trf.xlu0
    %1985 = vxpose.xlu0.b32.start [1/16] %v1875, 128
    %1986 = vxpose.xlu0.b32.cont [2/16] %v1883, 128
    %1987 = vxpose.xlu0.b32.cont [3/16] %v1891, 128
    %1988 = vxpose.xlu0.b32.cont [4/16] %v1899, 128
    %1989 = vxpose.xlu0.b32.cont [5/16] %v1907, 128
    %1990 = vxpose.xlu0.b32.cont [6/16] %v1915, 128
    %1991 = vxpose.xlu0.b32.cont [7/16] 0.0, 128
    %1992 = vxpose.xlu0.b32.cont [8/16] 0.0, 128
    %1993 = vxpose.xlu0.b32.cont [9/16] 0.0, 128
    %1994 = vxpose.xlu0.b32.cont [10/16] 0.0, 128
    %1995 = vxpose.xlu0.b32.cont [11/16] 0.0, 128
    %1996 = vxpose.xlu0.b32.cont [12/16] 0.0, 128
    %1997 = vxpose.xlu0.b32.cont [13/16] 0.0, 128
    %1998 = vxpose.xlu0.b32.cont [14/16] 0.0, 128
    %1999 = vxpose.xlu0.b32.cont [15/16] 0.0, 128
    %2000 = vxpose.xlu0.b32.end [16/16] 0.0, 128
    %v2001 = vpop.trf.xlu0
    %v2002 = vpop.trf.xlu0
    %v2003 = vpop.trf.xlu0
    %v2004 = vpop.trf.xlu0
    %v2005 = vpop.trf.xlu0
    %v2006 = vpop.trf.xlu0
    %v2007 = vpop.trf.xlu0
    %v2008 = vpop.trf.xlu0
    %v2009 = vpop.trf.xlu0
    %v2010 = vpop.trf.xlu0
    %v2011 = vpop.trf.xlu0
    %v2012 = vpop.trf.xlu0
    %v2013 = vpop.trf.xlu0
    %v2014 = vpop.trf.xlu0
    %v2015 = vpop.trf.xlu0
    %v2016 = vpop.trf.xlu0
    %2017 = vxpose.xlu0.b32.start [1/16] %v1876, 128
    %2018 = vxpose.xlu0.b32.cont [2/16] %v1884, 128
    %2019 = vxpose.xlu0.b32.cont [3/16] %v1892, 128
    %2020 = vxpose.xlu0.b32.cont [4/16] %v1900, 128
    %2021 = vxpose.xlu0.b32.cont [5/16] %v1908, 128
    %2022 = vxpose.xlu0.b32.cont [6/16] %v1916, 128
    %2023 = vxpose.xlu0.b32.cont [7/16] 0.0, 128
    %2024 = vxpose.xlu0.b32.cont [8/16] 0.0, 128
    %2025 = vxpose.xlu0.b32.cont [9/16] 0.0, 128
    %2026 = vxpose.xlu0.b32.cont [10/16] 0.0, 128
    %2027 = vxpose.xlu0.b32.cont [11/16] 0.0, 128
    %2028 = vxpose.xlu0.b32.cont [12/16] 0.0, 128
    %2029 = vxpose.xlu0.b32.cont [13/16] 0.0, 128
    %2030 = vxpose.xlu0.b32.cont [14/16] 0.0, 128
    %2031 = vxpose.xlu0.b32.cont [15/16] 0.0, 128
    %2032 = vxpose.xlu0.b32.end [16/16] 0.0, 128
    %v2033 = vpop.trf.xlu0
    %v2034 = vpop.trf.xlu0
    %v2035 = vpop.trf.xlu0
    %v2036 = vpop.trf.xlu0
    %v2037 = vpop.trf.xlu0
    %v2038 = vpop.trf.xlu0
    %v2039 = vpop.trf.xlu0
    %v2040 = vpop.trf.xlu0
    %v2041 = vpop.trf.xlu0
    %v2042 = vpop.trf.xlu0
    %v2043 = vpop.trf.xlu0
    %v2044 = vpop.trf.xlu0
    %v2045 = vpop.trf.xlu0
    %v2046 = vpop.trf.xlu0
    %v2047 = vpop.trf.xlu0
    %v2048 = vpop.trf.xlu0
    %2049 = vxpose.xlu0.b32.start [1/16] %v1877, 128
    %2050 = vxpose.xlu0.b32.cont [2/16] %v1885, 128
    %2051 = vxpose.xlu0.b32.cont [3/16] %v1893, 128
    %2052 = vxpose.xlu0.b32.cont [4/16] %v1901, 128
    %2053 = vxpose.xlu0.b32.cont [5/16] %v1909, 128
    %2054 = vxpose.xlu0.b32.cont [6/16] %v1917, 128
    %2055 = vxpose.xlu0.b32.cont [7/16] 0.0, 128
    %2056 = vxpose.xlu0.b32.cont [8/16] 0.0, 128
    %2057 = vxpose.xlu0.b32.cont [9/16] 0.0, 128
    %2058 = vxpose.xlu0.b32.cont [10/16] 0.0, 128
    %2059 = vxpose.xlu0.b32.cont [11/16] 0.0, 128
    %2060 = vxpose.xlu0.b32.cont [12/16] 0.0, 128
    %2061 = vxpose.xlu0.b32.cont [13/16] 0.0, 128
    %2062 = vxpose.xlu0.b32.cont [14/16] 0.0, 128
    %2063 = vxpose.xlu0.b32.cont [15/16] 0.0, 128
    %2064 = vxpose.xlu0.b32.end [16/16] 0.0, 128
    %v2065 = vpop.trf.xlu0
    %v2066 = vpop.trf.xlu0
    %v2067 = vpop.trf.xlu0
    %v2068 = vpop.trf.xlu0
    %v2069 = vpop.trf.xlu0
    %v2070 = vpop.trf.xlu0
    %v2071 = vpop.trf.xlu0
    %v2072 = vpop.trf.xlu0
    %v2073 = vpop.trf.xlu0
    %v2074 = vpop.trf.xlu0
    %v2075 = vpop.trf.xlu0
    %v2076 = vpop.trf.xlu0
    %v2077 = vpop.trf.xlu0
    %v2078 = vpop.trf.xlu0
    %v2079 = vpop.trf.xlu0
    %v2080 = vpop.trf.xlu0
    %2081 = vxpose.xlu0.b32.start [1/16] %v1878, 128
    %2082 = vxpose.xlu0.b32.cont [2/16] %v1886, 128
    %2083 = vxpose.xlu0.b32.cont [3/16] %v1894, 128
    %2084 = vxpose.xlu0.b32.cont [4/16] %v1902, 128
    %2085 = vxpose.xlu0.b32.cont [5/16] %v1910, 128
    %2086 = vxpose.xlu0.b32.cont [6/16] %v1918, 128
    %2087 = vxpose.xlu0.b32.cont [7/16] 0.0, 128
    %2088 = vxpose.xlu0.b32.cont [8/16] 0.0, 128
    %2089 = vxpose.xlu0.b32.cont [9/16] 0.0, 128
    %2090 = vxpose.xlu0.b32.cont [10/16] 0.0, 128
    %2091 = vxpose.xlu0.b32.cont [11/16] 0.0, 128
    %2092 = vxpose.xlu0.b32.cont [12/16] 0.0, 128
    %2093 = vxpose.xlu0.b32.cont [13/16] 0.0, 128
    %2094 = vxpose.xlu0.b32.cont [14/16] 0.0, 128
    %2095 = vxpose.xlu0.b32.cont [15/16] 0.0, 128
    %2096 = vxpose.xlu0.b32.end [16/16] 0.0, 128
    %v2097 = vpop.trf.xlu0
    %v2098 = vpop.trf.xlu0
    %v2099 = vpop.trf.xlu0
    %v2100 = vpop.trf.xlu0
    %v2101 = vpop.trf.xlu0
    %v2102 = vpop.trf.xlu0
    %v2103 = vpop.trf.xlu0
    %v2104 = vpop.trf.xlu0
    %v2105 = vpop.trf.xlu0
    %v2106 = vpop.trf.xlu0
    %v2107 = vpop.trf.xlu0
    %v2108 = vpop.trf.xlu0
    %v2109 = vpop.trf.xlu0
    %v2110 = vpop.trf.xlu0
    %v2111 = vpop.trf.xlu0
    %v2112 = vpop.trf.xlu0
    %2113 = vxpose.xlu0.b32.start [1/16] %v1879, 128
    %2114 = vxpose.xlu0.b32.cont [2/16] %v1887, 128
    %2115 = vxpose.xlu0.b32.cont [3/16] %v1895, 128
    %2116 = vxpose.xlu0.b32.cont [4/16] %v1903, 128
    %2117 = vxpose.xlu0.b32.cont [5/16] %v1911, 128
    %2118 = vxpose.xlu0.b32.cont [6/16] %v1919, 128
    %2119 = vxpose.xlu0.b32.cont [7/16] 0.0, 128
    %2120 = vxpose.xlu0.b32.cont [8/16] 0.0, 128
    %2121 = vxpose.xlu0.b32.cont [9/16] 0.0, 128
    %2122 = vxpose.xlu0.b32.cont [10/16] 0.0, 128
    %2123 = vxpose.xlu0.b32.cont [11/16] 0.0, 128
    %2124 = vxpose.xlu0.b32.cont [12/16] 0.0, 128
    %2125 = vxpose.xlu0.b32.cont [13/16] 0.0, 128
    %2126 = vxpose.xlu0.b32.cont [14/16] 0.0, 128
    %2127 = vxpose.xlu0.b32.cont [15/16] 0.0, 128
    %2128 = vxpose.xlu0.b32.end [16/16] 0.0, 128
    %v2129 = vpop.trf.xlu0
    %v2130 = vpop.trf.xlu0
    %v2131 = vpop.trf.xlu0
    %v2132 = vpop.trf.xlu0
    %v2133 = vpop.trf.xlu0
    %v2134 = vpop.trf.xlu0
    %v2135 = vpop.trf.xlu0
    %v2136 = vpop.trf.xlu0
    %v2137 = vpop.trf.xlu0
    %v2138 = vpop.trf.xlu0
    %v2139 = vpop.trf.xlu0
    %v2140 = vpop.trf.xlu0
    %v2141 = vpop.trf.xlu0
    %v2142 = vpop.trf.xlu0
    %v2143 = vpop.trf.xlu0
    %v2144 = vpop.trf.xlu0
    %2145 = vxpose.xlu0.b32.start [1/16] %v1880, 128
    %2146 = vxpose.xlu0.b32.cont [2/16] %v1888, 128
    %2147 = vxpose.xlu0.b32.cont [3/16] %v1896, 128
    %2148 = vxpose.xlu0.b32.cont [4/16] %v1904, 128
    %2149 = vxpose.xlu0.b32.cont [5/16] %v1912, 128
    %2150 = vxpose.xlu0.b32.cont [6/16] %v1920, 128
    %2151 = vxpose.xlu0.b32.cont [7/16] 0.0, 128
    %2152 = vxpose.xlu0.b32.cont [8/16] 0.0, 128
    %2153 = vxpose.xlu0.b32.cont [9/16] 0.0, 128
    %2154 = vxpose.xlu0.b32.cont [10/16] 0.0, 128
    %2155 = vxpose.xlu0.b32.cont [11/16] 0.0, 128
    %2156 = vxpose.xlu0.b32.cont [12/16] 0.0, 128
    %2157 = vxpose.xlu0.b32.cont [13/16] 0.0, 128
    %2158 = vxpose.xlu0.b32.cont [14/16] 0.0, 128
    %2159 = vxpose.xlu0.b32.cont [15/16] 0.0, 128
    %2160 = vxpose.xlu0.b32.end [16/16] 0.0, 128
    %v2161 = vpop.trf.xlu0
    %v2162 = vpop.trf.xlu0
    %v2163 = vpop.trf.xlu0
    %v2164 = vpop.trf.xlu0
    %v2165 = vpop.trf.xlu0
    %v2166 = vpop.trf.xlu0
    %v2167 = vpop.trf.xlu0
    %v2168 = vpop.trf.xlu0
    %v2169 = vpop.trf.xlu0
    %v2170 = vpop.trf.xlu0
    %v2171 = vpop.trf.xlu0
    %v2172 = vpop.trf.xlu0
    %v2173 = vpop.trf.xlu0
    %v2174 = vpop.trf.xlu0
    %v2175 = vpop.trf.xlu0
    %v2176 = vpop.trf.xlu0
    %vm2177 = vcmask 392192
    %2178 = vst.msk [vmem:[#allocation2] sm:$0xff] %vm2177, %v1937
    %2179 = vst.msk [vmem:[#allocation2 + $0x8] sm:$0xff] %vm2177, %v1938
    %2180 = vst.msk [vmem:[#allocation2 + $0x10] sm:$0xff] %vm2177, %v1939
    %2181 = vst.msk [vmem:[#allocation2 + $0x18] sm:$0xff] %vm2177, %v1940
    %2182 = vst.msk [vmem:[#allocation2 + $0x20] sm:$0xff] %vm2177, %v1941
    %2183 = vst.msk [vmem:[#allocation2 + $0x28] sm:$0xff] %vm2177, %v1942
    %2184 = vst.msk [vmem:[#allocation2 + $0x30] sm:$0xff] %vm2177, %v1943
    %2185 = vst.msk [vmem:[#allocation2 + $0x38] sm:$0xff] %vm2177, %v1944
    %2186 = vst.msk [vmem:[#allocation2 + $0x40] sm:$0xff] %vm2177, %v1945
    %2187 = vst.msk [vmem:[#allocation2 + $0x48] sm:$0xff] %vm2177, %v1946
    %2188 = vst.msk [vmem:[#allocation2 + $0x50] sm:$0xff] %vm2177, %v1947
    %2189 = vst.msk [vmem:[#allocation2 + $0x58] sm:$0xff] %vm2177, %v1948
    %2190 = vst.msk [vmem:[#allocation2 + $0x60] sm:$0xff] %vm2177, %v1949
    %2191 = vst.msk [vmem:[#allocation2 + $0x68] sm:$0xff] %vm2177, %v1950
    %2192 = vst.msk [vmem:[#allocation2 + $0x70] sm:$0xff] %vm2177, %v1951
    %2193 = vst.msk [vmem:[#allocation2 + $0x78] sm:$0xff] %vm2177, %v1952
    %2194 = vst.msk [vmem:[#allocation2 + $0x80] sm:$0xff] %vm2177, %v1969
    %2195 = vst.msk [vmem:[#allocation2 + $0x88] sm:$0xff] %vm2177, %v1970
    %2196 = vst.msk [vmem:[#allocation2 + $0x90] sm:$0xff] %vm2177, %v1971
    %2197 = vst.msk [vmem:[#allocation2 + $0x98] sm:$0xff] %vm2177, %v1972
    %2198 = vst.msk [vmem:[#allocation2 + $0xa0] sm:$0xff] %vm2177, %v1973
    %2199 = vst.msk [vmem:[#allocation2 + $0xa8] sm:$0xff] %vm2177, %v1974
    %2200 = vst.msk [vmem:[#allocation2 + $0xb0] sm:$0xff] %vm2177, %v1975
    %2201 = vst.msk [vmem:[#allocation2 + $0xb8] sm:$0xff] %vm2177, %v1976
    %2202 = vst.msk [vmem:[#allocation2 + $0xc0] sm:$0xff] %vm2177, %v1977
    %2203 = vst.msk [vmem:[#allocation2 + $0xc8] sm:$0xff] %vm2177, %v1978
    %2204 = vst.msk [vmem:[#allocation2 + $0xd0] sm:$0xff] %vm2177, %v1979
    %2205 = vst.msk [vmem:[#allocation2 + $0xd8] sm:$0xff] %vm2177, %v1980
    %2206 = vst.msk [vmem:[#allocation2 + $0xe0] sm:$0xff] %vm2177, %v1981
    %2207 = vst.msk [vmem:[#allocation2 + $0xe8] sm:$0xff] %vm2177, %v1982
    %2208 = vst.msk [vmem:[#allocation2 + $0xf0] sm:$0xff] %vm2177, %v1983
    %2209 = vst.msk [vmem:[#allocation2 + $0xf8] sm:$0xff] %vm2177, %v1984
    %2210 = vst.msk [vmem:[#allocation2 + $0x100] sm:$0xff] %vm2177, %v2001
    %2211 = vst.msk [vmem:[#allocation2 + $0x108] sm:$0xff] %vm2177, %v2002
    %2212 = vst.msk [vmem:[#allocation2 + $0x110] sm:$0xff] %vm2177, %v2003
    %2213 = vst.msk [vmem:[#allocation2 + $0x118] sm:$0xff] %vm2177, %v2004
    %2214 = vst.msk [vmem:[#allocation2 + $0x120] sm:$0xff] %vm2177, %v2005
    %2215 = vst.msk [vmem:[#allocation2 + $0x128] sm:$0xff] %vm2177, %v2006
    %2216 = vst.msk [vmem:[#allocation2 + $0x130] sm:$0xff] %vm2177, %v2007
    %2217 = vst.msk [vmem:[#allocation2 + $0x138] sm:$0xff] %vm2177, %v2008
    %2218 = vst.msk [vmem:[#allocation2 + $0x140] sm:$0xff] %vm2177, %v2009
    %2219 = vst.msk [vmem:[#allocation2 + $0x148] sm:$0xff] %vm2177, %v2010
    %2220 = vst.msk [vmem:[#allocation2 + $0x150] sm:$0xff] %vm2177, %v2011
    %2221 = vst.msk [vmem:[#allocation2 + $0x158] sm:$0xff] %vm2177, %v2012
    %2222 = vst.msk [vmem:[#allocation2 + $0x160] sm:$0xff] %vm2177, %v2013
    %2223 = vst.msk [vmem:[#allocation2 + $0x168] sm:$0xff] %vm2177, %v2014
    %2224 = vst.msk [vmem:[#allocation2 + $0x170] sm:$0xff] %vm2177, %v2015
    %2225 = vst.msk [vmem:[#allocation2 + $0x178] sm:$0xff] %vm2177, %v2016
    %2226 = vst.msk [vmem:[#allocation2 + $0x180] sm:$0xff] %vm2177, %v2033
    %2227 = vst.msk [vmem:[#allocation2 + $0x188] sm:$0xff] %vm2177, %v2034
    %2228 = vst.msk [vmem:[#allocation2 + $0x190] sm:$0xff] %vm2177, %v2035
    %2229 = vst.msk [vmem:[#allocation2 + $0x198] sm:$0xff] %vm2177, %v2036
    %2230 = vst.msk [vmem:[#allocation2 + $0x1a0] sm:$0xff] %vm2177, %v2037
    %2231 = vst.msk [vmem:[#allocation2 + $0x1a8] sm:$0xff] %vm2177, %v2038
    %2232 = vst.msk [vmem:[#allocation2 + $0x1b0] sm:$0xff] %vm2177, %v2039
    %2233 = vst.msk [vmem:[#allocation2 + $0x1b8] sm:$0xff] %vm2177, %v2040
    %2234 = vst.msk [vmem:[#allocation2 + $0x1c0] sm:$0xff] %vm2177, %v2041
    %2235 = vst.msk [vmem:[#allocation2 + $0x1c8] sm:$0xff] %vm2177, %v2042
    %2236 = vst.msk [vmem:[#allocation2 + $0x1d0] sm:$0xff] %vm2177, %v2043
    %2237 = vst.msk [vmem:[#allocation2 + $0x1d8] sm:$0xff] %vm2177, %v2044
    %2238 = vst.msk [vmem:[#allocation2 + $0x1e0] sm:$0xff] %vm2177, %v2045
    %2239 = vst.msk [vmem:[#allocation2 + $0x1e8] sm:$0xff] %vm2177, %v2046
    %2240 = vst.msk [vmem:[#allocation2 + $0x1f0] sm:$0xff] %vm2177, %v2047
    %2241 = vst.msk [vmem:[#allocation2 + $0x1f8] sm:$0xff] %vm2177, %v2048
    %2242 = vst.msk [vmem:[#allocation2 + $0x200] sm:$0xff] %vm2177, %v2065
    %2243 = vst.msk [vmem:[#allocation2 + $0x208] sm:$0xff] %vm2177, %v2066
    %2244 = vst.msk [vmem:[#allocation2 + $0x210] sm:$0xff] %vm2177, %v2067
    %2245 = vst.msk [vmem:[#allocation2 + $0x218] sm:$0xff] %vm2177, %v2068
    %2246 = vst.msk [vmem:[#allocation2 + $0x220] sm:$0xff] %vm2177, %v2069
    %2247 = vst.msk [vmem:[#allocation2 + $0x228] sm:$0xff] %vm2177, %v2070
    %2248 = vst.msk [vmem:[#allocation2 + $0x230] sm:$0xff] %vm2177, %v2071
    %2249 = vst.msk [vmem:[#allocation2 + $0x238] sm:$0xff] %vm2177, %v2072
    %2250 = vst.msk [vmem:[#allocation2 + $0x240] sm:$0xff] %vm2177, %v2073
    %2251 = vst.msk [vmem:[#allocation2 + $0x248] sm:$0xff] %vm2177, %v2074
    %2252 = vst.msk [vmem:[#allocation2 + $0x250] sm:$0xff] %vm2177, %v2075
    %2253 = vst.msk [vmem:[#allocation2 + $0x258] sm:$0xff] %vm2177, %v2076
    %2254 = vst.msk [vmem:[#allocation2 + $0x260] sm:$0xff] %vm2177, %v2077
    %2255 = vst.msk [vmem:[#allocation2 + $0x268] sm:$0xff] %vm2177, %v2078
    %2256 = vst.msk [vmem:[#allocation2 + $0x270] sm:$0xff] %vm2177, %v2079
    %2257 = vst.msk [vmem:[#allocation2 + $0x278] sm:$0xff] %vm2177, %v2080
    %2258 = vst.msk [vmem:[#allocation2 + $0x280] sm:$0xff] %vm2177, %v2097
    %2259 = vst.msk [vmem:[#allocation2 + $0x288] sm:$0xff] %vm2177, %v2098
    %2260 = vst.msk [vmem:[#allocation2 + $0x290] sm:$0xff] %vm2177, %v2099
    %2261 = vst.msk [vmem:[#allocation2 + $0x298] sm:$0xff] %vm2177, %v2100
    %2262 = vst.msk [vmem:[#allocation2 + $0x2a0] sm:$0xff] %vm2177, %v2101
    %2263 = vst.msk [vmem:[#allocation2 + $0x2a8] sm:$0xff] %vm2177, %v2102
    %2264 = vst.msk [vmem:[#allocation2 + $0x2b0] sm:$0xff] %vm2177, %v2103
    %2265 = vst.msk [vmem:[#allocation2 + $0x2b8] sm:$0xff] %vm2177, %v2104
    %2266 = vst.msk [vmem:[#allocation2 + $0x2c0] sm:$0xff] %vm2177, %v2105
    %2267 = vst.msk [vmem:[#allocation2 + $0x2c8] sm:$0xff] %vm2177, %v2106
    %2268 = vst.msk [vmem:[#allocation2 + $0x2d0] sm:$0xff] %vm2177, %v2107
    %2269 = vst.msk [vmem:[#allocation2 + $0x2d8] sm:$0xff] %vm2177, %v2108
    %2270 = vst.msk [vmem:[#allocation2 + $0x2e0] sm:$0xff] %vm2177, %v2109
    %2271 = vst.msk [vmem:[#allocation2 + $0x2e8] sm:$0xff] %vm2177, %v2110
    %2272 = vst.msk [vmem:[#allocation2 + $0x2f0] sm:$0xff] %vm2177, %v2111
    %2273 = vst.msk [vmem:[#allocation2 + $0x2f8] sm:$0xff] %vm2177, %v2112
    %2274 = vst.msk [vmem:[#allocation2 + $0x300] sm:$0xff] %vm2177, %v2129
    %2275 = vst.msk [vmem:[#allocation2 + $0x308] sm:$0xff] %vm2177, %v2130
    %2276 = vst.msk [vmem:[#allocation2 + $0x310] sm:$0xff] %vm2177, %v2131
    %2277 = vst.msk [vmem:[#allocation2 + $0x318] sm:$0xff] %vm2177, %v2132
    %2278 = vst.msk [vmem:[#allocation2 + $0x320] sm:$0xff] %vm2177, %v2133
    %2279 = vst.msk [vmem:[#allocation2 + $0x328] sm:$0xff] %vm2177, %v2134
    %2280 = vst.msk [vmem:[#allocation2 + $0x330] sm:$0xff] %vm2177, %v2135
    %2281 = vst.msk [vmem:[#allocation2 + $0x338] sm:$0xff] %vm2177, %v2136
    %2282 = vst.msk [vmem:[#allocation2 + $0x340] sm:$0xff] %vm2177, %v2137
    %2283 = vst.msk [vmem:[#allocation2 + $0x348] sm:$0xff] %vm2177, %v2138
    %2284 = vst.msk [vmem:[#allocation2 + $0x350] sm:$0xff] %vm2177, %v2139
    %2285 = vst.msk [vmem:[#allocation2 + $0x358] sm:$0xff] %vm2177, %v2140
    %2286 = vst.msk [vmem:[#allocation2 + $0x360] sm:$0xff] %vm2177, %v2141
    %2287 = vst.msk [vmem:[#allocation2 + $0x368] sm:$0xff] %vm2177, %v2142
    %2288 = vst.msk [vmem:[#allocation2 + $0x370] sm:$0xff] %vm2177, %v2143
    %2289 = vst.msk [vmem:[#allocation2 + $0x378] sm:$0xff] %vm2177, %v2144
    %2290 = vst.msk [vmem:[#allocation2 + $0x380] sm:$0xff] %vm2177, %v2161
    %2291 = vst.msk [vmem:[#allocation2 + $0x388] sm:$0xff] %vm2177, %v2162
    %2292 = vst.msk [vmem:[#allocation2 + $0x390] sm:$0xff] %vm2177, %v2163
    %2293 = vst.msk [vmem:[#allocation2 + $0x398] sm:$0xff] %vm2177, %v2164
    %2294 = vst.msk [vmem:[#allocation2 + $0x3a0] sm:$0xff] %vm2177, %v2165
    %2295 = vst.msk [vmem:[#allocation2 + $0x3a8] sm:$0xff] %vm2177, %v2166
    %2296 = vst.msk [vmem:[#allocation2 + $0x3b0] sm:$0xff] %vm2177, %v2167
    %2297 = vst.msk [vmem:[#allocation2 + $0x3b8] sm:$0xff] %vm2177, %v2168
    %2298 = vst.msk [vmem:[#allocation2 + $0x3c0] sm:$0xff] %vm2177, %v2169
    %2299 = vst.msk [vmem:[#allocation2 + $0x3c8] sm:$0xff] %vm2177, %v2170
    %2300 = vst.msk [vmem:[#allocation2 + $0x3d0] sm:$0xff] %vm2177, %v2171
    %2301 = vst.msk [vmem:[#allocation2 + $0x3d8] sm:$0xff] %vm2177, %v2172
    %2302 = vst.msk [vmem:[#allocation2 + $0x3e0] sm:$0xff] %vm2177, %v2173
    %2303 = vst.msk [vmem:[#allocation2 + $0x3e8] sm:$0xff] %vm2177, %v2174
    %2304 = vst.msk [vmem:[#allocation2 + $0x3f0] sm:$0xff] %vm2177, %v2175
    %2305 = vst.msk [vmem:[#allocation2 + $0x3f8] sm:$0xff] %vm2177, %v2176
    // Predicated region
    $region38: #{tpu_custom_call.1} parent=1 // pred_check
      _
    $region39: #{tpu_custom_call.1} parent=1 // pred_check_branch
      %2307 = sbr.rel (0) target = $region41
    $region40: #{tpu_custom_call.1} parent=1 // pred_region
      // Predicated region
      $region42: #{tpu_custom_call.1} parent=40 // pred_check
        _
      $region43: #{tpu_custom_call.1} parent=40 // pred_check_branch
        %2309 = sbr.rel (0) target = $region45
      $region44: #{tpu_custom_call.1} parent=40 // pred_region
        // Predicated region
        $region46: #{tpu_custom_call.1} parent=44 // pred_check
          _
        $region47: #{tpu_custom_call.1} parent=44 // pred_check_branch
          %2311 = sbr.rel (0) target = $region49
        $region48: #{tpu_custom_call.1} parent=44 // pred_region
          // Predicated region
          $region61: #{tpu_custom_call.1} parent=48 // pred_check
            _
          $region62: #{tpu_custom_call.1} parent=48 // pred_check_branch
            %2574 = sbr.rel (0) target = $region64
          $region63: #{tpu_custom_call.1} parent=48 // pred_region
            loop: start=0, step=1, limit=1
            $region65: #{tpu_custom_call.1} parent=63 // loop_pre_header
              _
            $region66: #{tpu_custom_call.1} parent=63 // loop_header
              %s2576 = sphi 0, %s2580
              %p2577 = scmp.ge.s32.totalorder %s2576, 1
              %s2581 = sphi [#allocation2], [#allocation2]
              %s2582 = sphi %s9, %s9
            $region67: #{tpu_custom_call.1} parent=63 // loop_header_branch
              %2579 = sbr.rel (%p2577) target = $region71
            $region68: #{tpu_custom_call.1} parent=63 // loop_body
              %v2583 = vld [vmem:[%s2581] sm:$0xff]
              %2584 = vst [vmem:[%s2582] sm:$0xff] %v2583
              %v2585 = vld [vmem:[%s2581 + $0x8] sm:$0xff]
              %2586 = vst [vmem:[%s2582 + $0x8] sm:$0xff] %v2585
              %v2587 = vld [vmem:[%s2581 + $0x10] sm:$0xff]
              %2588 = vst [vmem:[%s2582 + $0x10] sm:$0xff] %v2587
              %v2589 = vld [vmem:[%s2581 + $0x18] sm:$0xff]
              %2590 = vst [vmem:[%s2582 + $0x18] sm:$0xff] %v2589
              %v2591 = vld [vmem:[%s2581 + $0x20] sm:$0xff]
              %2592 = vst [vmem:[%s2582 + $0x20] sm:$0xff] %v2591
              %v2593 = vld [vmem:[%s2581 + $0x28] sm:$0xff]
              %2594 = vst [vmem:[%s2582 + $0x28] sm:$0xff] %v2593
              %v2595 = vld [vmem:[%s2581 + $0x30] sm:$0xff]
              %2596 = vst [vmem:[%s2582 + $0x30] sm:$0xff] %v2595
              %v2597 = vld [vmem:[%s2581 + $0x38] sm:$0xff]
              %2598 = vst [vmem:[%s2582 + $0x38] sm:$0xff] %v2597
              %v2599 = vld [vmem:[%s2581 + $0x40] sm:$0xff]
              %2600 = vst [vmem:[%s2582 + $0x40] sm:$0xff] %v2599
              %v2601 = vld [vmem:[%s2581 + $0x48] sm:$0xff]
              %2602 = vst [vmem:[%s2582 + $0x48] sm:$0xff] %v2601
              %v2603 = vld [vmem:[%s2581 + $0x50] sm:$0xff]
              %2604 = vst [vmem:[%s2582 + $0x50] sm:$0xff] %v2603
              %v2605 = vld [vmem:[%s2581 + $0x58] sm:$0xff]
              %2606 = vst [vmem:[%s2582 + $0x58] sm:$0xff] %v2605
              %v2607 = vld [vmem:[%s2581 + $0x60] sm:$0xff]
              %2608 = vst [vmem:[%s2582 + $0x60] sm:$0xff] %v2607
              %v2609 = vld [vmem:[%s2581 + $0x68] sm:$0xff]
              %2610 = vst [vmem:[%s2582 + $0x68] sm:$0xff] %v2609
              %v2611 = vld [vmem:[%s2581 + $0x70] sm:$0xff]
              %2612 = vst [vmem:[%s2582 + $0x70] sm:$0xff] %v2611
              %v2613 = vld [vmem:[%s2581 + $0x78] sm:$0xff]
              %2614 = vst [vmem:[%s2582 + $0x78] sm:$0xff] %v2613
              %v2615 = vld [vmem:[%s2581 + $0x80] sm:$0xff]
              %2616 = vst [vmem:[%s2582 + $0x80] sm:$0xff] %v2615
              %v2617 = vld [vmem:[%s2581 + $0x88] sm:$0xff]
              %2618 = vst [vmem:[%s2582 + $0x88] sm:$0xff] %v2617
              %v2619 = vld [vmem:[%s2581 + $0x90] sm:$0xff]
              %2620 = vst [vmem:[%s2582 + $0x90] sm:$0xff] %v2619
              %v2621 = vld [vmem:[%s2581 + $0x98] sm:$0xff]
              %2622 = vst [vmem:[%s2582 + $0x98] sm:$0xff] %v2621
              %v2623 = vld [vmem:[%s2581 + $0xa0] sm:$0xff]
              %2624 = vst [vmem:[%s2582 + $0xa0] sm:$0xff] %v2623
              %v2625 = vld [vmem:[%s2581 + $0xa8] sm:$0xff]
              %2626 = vst [vmem:[%s2582 + $0xa8] sm:$0xff] %v2625
              %v2627 = vld [vmem:[%s2581 + $0xb0] sm:$0xff]
              %2628 = vst [vmem:[%s2582 + $0xb0] sm:$0xff] %v2627
              %v2629 = vld [vmem:[%s2581 + $0xb8] sm:$0xff]
              %2630 = vst [vmem:[%s2582 + $0xb8] sm:$0xff] %v2629
              %v2631 = vld [vmem:[%s2581 + $0xc0] sm:$0xff]
              %2632 = vst [vmem:[%s2582 + $0xc0] sm:$0xff] %v2631
              %v2633 = vld [vmem:[%s2581 + $0xc8] sm:$0xff]
              %2634 = vst [vmem:[%s2582 + $0xc8] sm:$0xff] %v2633
              %v2635 = vld [vmem:[%s2581 + $0xd0] sm:$0xff]
              %2636 = vst [vmem:[%s2582 + $0xd0] sm:$0xff] %v2635
              %v2637 = vld [vmem:[%s2581 + $0xd8] sm:$0xff]
              %2638 = vst [vmem:[%s2582 + $0xd8] sm:$0xff] %v2637
              %v2639 = vld [vmem:[%s2581 + $0xe0] sm:$0xff]
              %2640 = vst [vmem:[%s2582 + $0xe0] sm:$0xff] %v2639
              %v2641 = vld [vmem:[%s2581 + $0xe8] sm:$0xff]
              %2642 = vst [vmem:[%s2582 + $0xe8] sm:$0xff] %v2641
              %v2643 = vld [vmem:[%s2581 + $0xf0] sm:$0xff]
              %2644 = vst [vmem:[%s2582 + $0xf0] sm:$0xff] %v2643
              %v2645 = vld [vmem:[%s2581 + $0xf8] sm:$0xff]
              %2646 = vst [vmem:[%s2582 + $0xf8] sm:$0xff] %v2645
              %v2647 = vld [vmem:[%s2581 + $0x100] sm:$0xff]
              %2648 = vst [vmem:[%s2582 + $0x100] sm:$0xff] %v2647
              %v2649 = vld [vmem:[%s2581 + $0x108] sm:$0xff]
              %2650 = vst [vmem:[%s2582 + $0x108] sm:$0xff] %v2649
              %v2651 = vld [vmem:[%s2581 + $0x110] sm:$0xff]
              %2652 = vst [vmem:[%s2582 + $0x110] sm:$0xff] %v2651
              %v2653 = vld [vmem:[%s2581 + $0x118] sm:$0xff]
              %2654 = vst [vmem:[%s2582 + $0x118] sm:$0xff] %v2653
              %v2655 = vld [vmem:[%s2581 + $0x120] sm:$0xff]
              %2656 = vst [vmem:[%s2582 + $0x120] sm:$0xff] %v2655
              %v2657 = vld [vmem:[%s2581 + $0x128] sm:$0xff]
              %2658 = vst [vmem:[%s2582 + $0x128] sm:$0xff] %v2657
              %v2659 = vld [vmem:[%s2581 + $0x130] sm:$0xff]
              %2660 = vst [vmem:[%s2582 + $0x130] sm:$0xff] %v2659
              %v2661 = vld [vmem:[%s2581 + $0x138] sm:$0xff]
              %2662 = vst [vmem:[%s2582 + $0x138] sm:$0xff] %v2661
              %v2663 = vld [vmem:[%s2581 + $0x140] sm:$0xff]
              %2664 = vst [vmem:[%s2582 + $0x140] sm:$0xff] %v2663
              %v2665 = vld [vmem:[%s2581 + $0x148] sm:$0xff]
              %2666 = vst [vmem:[%s2582 + $0x148] sm:$0xff] %v2665
              %v2667 = vld [vmem:[%s2581 + $0x150] sm:$0xff]
              %2668 = vst [vmem:[%s2582 + $0x150] sm:$0xff] %v2667
              %v2669 = vld [vmem:[%s2581 + $0x158] sm:$0xff]
              %2670 = vst [vmem:[%s2582 + $0x158] sm:$0xff] %v2669
              %v2671 = vld [vmem:[%s2581 + $0x160] sm:$0xff]
              %2672 = vst [vmem:[%s2582 + $0x160] sm:$0xff] %v2671
              %v2673 = vld [vmem:[%s2581 + $0x168] sm:$0xff]
              %2674 = vst [vmem:[%s2582 + $0x168] sm:$0xff] %v2673
              %v2675 = vld [vmem:[%s2581 + $0x170] sm:$0xff]
              %2676 = vst [vmem:[%s2582 + $0x170] sm:$0xff] %v2675
              %v2677 = vld [vmem:[%s2581 + $0x178] sm:$0xff]
              %2678 = vst [vmem:[%s2582 + $0x178] sm:$0xff] %v2677
              %v2679 = vld [vmem:[%s2581 + $0x180] sm:$0xff]
              %2680 = vst [vmem:[%s2582 + $0x180] sm:$0xff] %v2679
              %v2681 = vld [vmem:[%s2581 + $0x188] sm:$0xff]
              %2682 = vst [vmem:[%s2582 + $0x188] sm:$0xff] %v2681
              %v2683 = vld [vmem:[%s2581 + $0x190] sm:$0xff]
              %2684 = vst [vmem:[%s2582 + $0x190] sm:$0xff] %v2683
              %v2685 = vld [vmem:[%s2581 + $0x198] sm:$0xff]
              %2686 = vst [vmem:[%s2582 + $0x198] sm:$0xff] %v2685
              %v2687 = vld [vmem:[%s2581 + $0x1a0] sm:$0xff]
              %2688 = vst [vmem:[%s2582 + $0x1a0] sm:$0xff] %v2687
              %v2689 = vld [vmem:[%s2581 + $0x1a8] sm:$0xff]
              %2690 = vst [vmem:[%s2582 + $0x1a8] sm:$0xff] %v2689
              %v2691 = vld [vmem:[%s2581 + $0x1b0] sm:$0xff]
              %2692 = vst [vmem:[%s2582 + $0x1b0] sm:$0xff] %v2691
              %v2693 = vld [vmem:[%s2581 + $0x1b8] sm:$0xff]
              %2694 = vst [vmem:[%s2582 + $0x1b8] sm:$0xff] %v2693
              %v2695 = vld [vmem:[%s2581 + $0x1c0] sm:$0xff]
              %2696 = vst [vmem:[%s2582 + $0x1c0] sm:$0xff] %v2695
              %v2697 = vld [vmem:[%s2581 + $0x1c8] sm:$0xff]
              %2698 = vst [vmem:[%s2582 + $0x1c8] sm:$0xff] %v2697
              %v2699 = vld [vmem:[%s2581 + $0x1d0] sm:$0xff]
              %2700 = vst [vmem:[%s2582 + $0x1d0] sm:$0xff] %v2699
              %v2701 = vld [vmem:[%s2581 + $0x1d8] sm:$0xff]
              %2702 = vst [vmem:[%s2582 + $0x1d8] sm:$0xff] %v2701
              %v2703 = vld [vmem:[%s2581 + $0x1e0] sm:$0xff]
              %2704 = vst [vmem:[%s2582 + $0x1e0] sm:$0xff] %v2703
              %v2705 = vld [vmem:[%s2581 + $0x1e8] sm:$0xff]
              %2706 = vst [vmem:[%s2582 + $0x1e8] sm:$0xff] %v2705
              %v2707 = vld [vmem:[%s2581 + $0x1f0] sm:$0xff]
              %2708 = vst [vmem:[%s2582 + $0x1f0] sm:$0xff] %v2707
              %v2709 = vld [vmem:[%s2581 + $0x1f8] sm:$0xff]
              %2710 = vst [vmem:[%s2582 + $0x1f8] sm:$0xff] %v2709
              %v2711 = vld [vmem:[%s2581 + $0x200] sm:$0xff]
              %2712 = vst [vmem:[%s2582 + $0x200] sm:$0xff] %v2711
              %v2713 = vld [vmem:[%s2581 + $0x208] sm:$0xff]
              %2714 = vst [vmem:[%s2582 + $0x208] sm:$0xff] %v2713
              %v2715 = vld [vmem:[%s2581 + $0x210] sm:$0xff]
              %2716 = vst [vmem:[%s2582 + $0x210] sm:$0xff] %v2715
              %v2717 = vld [vmem:[%s2581 + $0x218] sm:$0xff]
              %2718 = vst [vmem:[%s2582 + $0x218] sm:$0xff] %v2717
              %v2719 = vld [vmem:[%s2581 + $0x220] sm:$0xff]
              %2720 = vst [vmem:[%s2582 + $0x220] sm:$0xff] %v2719
              %v2721 = vld [vmem:[%s2581 + $0x228] sm:$0xff]
              %2722 = vst [vmem:[%s2582 + $0x228] sm:$0xff] %v2721
              %v2723 = vld [vmem:[%s2581 + $0x230] sm:$0xff]
              %2724 = vst [vmem:[%s2582 + $0x230] sm:$0xff] %v2723
              %v2725 = vld [vmem:[%s2581 + $0x238] sm:$0xff]
              %2726 = vst [vmem:[%s2582 + $0x238] sm:$0xff] %v2725
              %v2727 = vld [vmem:[%s2581 + $0x240] sm:$0xff]
              %2728 = vst [vmem:[%s2582 + $0x240] sm:$0xff] %v2727
              %v2729 = vld [vmem:[%s2581 + $0x248] sm:$0xff]
              %2730 = vst [vmem:[%s2582 + $0x248] sm:$0xff] %v2729
              %v2731 = vld [vmem:[%s2581 + $0x250] sm:$0xff]
              %2732 = vst [vmem:[%s2582 + $0x250] sm:$0xff] %v2731
              %v2733 = vld [vmem:[%s2581 + $0x258] sm:$0xff]
              %2734 = vst [vmem:[%s2582 + $0x258] sm:$0xff] %v2733
              %v2735 = vld [vmem:[%s2581 + $0x260] sm:$0xff]
              %2736 = vst [vmem:[%s2582 + $0x260] sm:$0xff] %v2735
              %v2737 = vld [vmem:[%s2581 + $0x268] sm:$0xff]
              %2738 = vst [vmem:[%s2582 + $0x268] sm:$0xff] %v2737
              %v2739 = vld [vmem:[%s2581 + $0x270] sm:$0xff]
              %2740 = vst [vmem:[%s2582 + $0x270] sm:$0xff] %v2739
              %v2741 = vld [vmem:[%s2581 + $0x278] sm:$0xff]
              %2742 = vst [vmem:[%s2582 + $0x278] sm:$0xff] %v2741
              %v2743 = vld [vmem:[%s2581 + $0x280] sm:$0xff]
              %2744 = vst [vmem:[%s2582 + $0x280] sm:$0xff] %v2743
              %v2745 = vld [vmem:[%s2581 + $0x288] sm:$0xff]
              %2746 = vst [vmem:[%s2582 + $0x288] sm:$0xff] %v2745
              %v2747 = vld [vmem:[%s2581 + $0x290] sm:$0xff]
              %2748 = vst [vmem:[%s2582 + $0x290] sm:$0xff] %v2747
              %v2749 = vld [vmem:[%s2581 + $0x298] sm:$0xff]
              %2750 = vst [vmem:[%s2582 + $0x298] sm:$0xff] %v2749
              %v2751 = vld [vmem:[%s2581 + $0x2a0] sm:$0xff]
              %2752 = vst [vmem:[%s2582 + $0x2a0] sm:$0xff] %v2751
              %v2753 = vld [vmem:[%s2581 + $0x2a8] sm:$0xff]
              %2754 = vst [vmem:[%s2582 + $0x2a8] sm:$0xff] %v2753
              %v2755 = vld [vmem:[%s2581 + $0x2b0] sm:$0xff]
              %2756 = vst [vmem:[%s2582 + $0x2b0] sm:$0xff] %v2755
              %v2757 = vld [vmem:[%s2581 + $0x2b8] sm:$0xff]
              %2758 = vst [vmem:[%s2582 + $0x2b8] sm:$0xff] %v2757
              %v2759 = vld [vmem:[%s2581 + $0x2c0] sm:$0xff]
              %2760 = vst [vmem:[%s2582 + $0x2c0] sm:$0xff] %v2759
              %v2761 = vld [vmem:[%s2581 + $0x2c8] sm:$0xff]
              %2762 = vst [vmem:[%s2582 + $0x2c8] sm:$0xff] %v2761
              %v2763 = vld [vmem:[%s2581 + $0x2d0] sm:$0xff]
              %2764 = vst [vmem:[%s2582 + $0x2d0] sm:$0xff] %v2763
              %v2765 = vld [vmem:[%s2581 + $0x2d8] sm:$0xff]
              %2766 = vst [vmem:[%s2582 + $0x2d8] sm:$0xff] %v2765
              %v2767 = vld [vmem:[%s2581 + $0x2e0] sm:$0xff]
              %2768 = vst [vmem:[%s2582 + $0x2e0] sm:$0xff] %v2767
              %v2769 = vld [vmem:[%s2581 + $0x2e8] sm:$0xff]
              %2770 = vst [vmem:[%s2582 + $0x2e8] sm:$0xff] %v2769
              %v2771 = vld [vmem:[%s2581 + $0x2f0] sm:$0xff]
              %2772 = vst [vmem:[%s2582 + $0x2f0] sm:$0xff] %v2771
              %v2773 = vld [vmem:[%s2581 + $0x2f8] sm:$0xff]
              %2774 = vst [vmem:[%s2582 + $0x2f8] sm:$0xff] %v2773
              %v2775 = vld [vmem:[%s2581 + $0x300] sm:$0xff]
              %2776 = vst [vmem:[%s2582 + $0x300] sm:$0xff] %v2775
              %v2777 = vld [vmem:[%s2581 + $0x308] sm:$0xff]
              %2778 = vst [vmem:[%s2582 + $0x308] sm:$0xff] %v2777
              %v2779 = vld [vmem:[%s2581 + $0x310] sm:$0xff]
              %2780 = vst [vmem:[%s2582 + $0x310] sm:$0xff] %v2779
              %v2781 = vld [vmem:[%s2581 + $0x318] sm:$0xff]
              %2782 = vst [vmem:[%s2582 + $0x318] sm:$0xff] %v2781
              %v2783 = vld [vmem:[%s2581 + $0x320] sm:$0xff]
              %2784 = vst [vmem:[%s2582 + $0x320] sm:$0xff] %v2783
              %v2785 = vld [vmem:[%s2581 + $0x328] sm:$0xff]
              %2786 = vst [vmem:[%s2582 + $0x328] sm:$0xff] %v2785
              %v2787 = vld [vmem:[%s2581 + $0x330] sm:$0xff]
              %2788 = vst [vmem:[%s2582 + $0x330] sm:$0xff] %v2787
              %v2789 = vld [vmem:[%s2581 + $0x338] sm:$0xff]
              %2790 = vst [vmem:[%s2582 + $0x338] sm:$0xff] %v2789
              %v2791 = vld [vmem:[%s2581 + $0x340] sm:$0xff]
              %2792 = vst [vmem:[%s2582 + $0x340] sm:$0xff] %v2791
              %v2793 = vld [vmem:[%s2581 + $0x348] sm:$0xff]
              %2794 = vst [vmem:[%s2582 + $0x348] sm:$0xff] %v2793
              %v2795 = vld [vmem:[%s2581 + $0x350] sm:$0xff]
              %2796 = vst [vmem:[%s2582 + $0x350] sm:$0xff] %v2795
              %v2797 = vld [vmem:[%s2581 + $0x358] sm:$0xff]
              %2798 = vst [vmem:[%s2582 + $0x358] sm:$0xff] %v2797
              %v2799 = vld [vmem:[%s2581 + $0x360] sm:$0xff]
              %2800 = vst [vmem:[%s2582 + $0x360] sm:$0xff] %v2799
              %v2801 = vld [vmem:[%s2581 + $0x368] sm:$0xff]
              %2802 = vst [vmem:[%s2582 + $0x368] sm:$0xff] %v2801
              %v2803 = vld [vmem:[%s2581 + $0x370] sm:$0xff]
              %2804 = vst [vmem:[%s2582 + $0x370] sm:$0xff] %v2803
              %v2805 = vld [vmem:[%s2581 + $0x378] sm:$0xff]
              %2806 = vst [vmem:[%s2582 + $0x378] sm:$0xff] %v2805
              %v2807 = vld [vmem:[%s2581 + $0x380] sm:$0xff]
              %2808 = vst [vmem:[%s2582 + $0x380] sm:$0xff] %v2807
              %v2809 = vld [vmem:[%s2581 + $0x388] sm:$0xff]
              %2810 = vst [vmem:[%s2582 + $0x388] sm:$0xff] %v2809
              %v2811 = vld [vmem:[%s2581 + $0x390] sm:$0xff]
              %2812 = vst [vmem:[%s2582 + $0x390] sm:$0xff] %v2811
              %v2813 = vld [vmem:[%s2581 + $0x398] sm:$0xff]
              %2814 = vst [vmem:[%s2582 + $0x398] sm:$0xff] %v2813
              %v2815 = vld [vmem:[%s2581 + $0x3a0] sm:$0xff]
              %2816 = vst [vmem:[%s2582 + $0x3a0] sm:$0xff] %v2815
              %v2817 = vld [vmem:[%s2581 + $0x3a8] sm:$0xff]
              %2818 = vst [vmem:[%s2582 + $0x3a8] sm:$0xff] %v2817
              %v2819 = vld [vmem:[%s2581 + $0x3b0] sm:$0xff]
              %2820 = vst [vmem:[%s2582 + $0x3b0] sm:$0xff] %v2819
              %v2821 = vld [vmem:[%s2581 + $0x3b8] sm:$0xff]
              %2822 = vst [vmem:[%s2582 + $0x3b8] sm:$0xff] %v2821
              %v2823 = vld [vmem:[%s2581 + $0x3c0] sm:$0xff]
              %2824 = vst [vmem:[%s2582 + $0x3c0] sm:$0xff] %v2823
              %v2825 = vld [vmem:[%s2581 + $0x3c8] sm:$0xff]
              %2826 = vst [vmem:[%s2582 + $0x3c8] sm:$0xff] %v2825
              %v2827 = vld [vmem:[%s2581 + $0x3d0] sm:$0xff]
              %2828 = vst [vmem:[%s2582 + $0x3d0] sm:$0xff] %v2827
              %v2829 = vld [vmem:[%s2581 + $0x3d8] sm:$0xff]
              %2830 = vst [vmem:[%s2582 + $0x3d8] sm:$0xff] %v2829
              %v2831 = vld [vmem:[%s2581 + $0x3e0] sm:$0xff]
              %2832 = vst [vmem:[%s2582 + $0x3e0] sm:$0xff] %v2831
            $region69: #{tpu_custom_call.1} parent=63 // loop_footer
              %s2580 = sadd.s32 1, %s2576
            $region70: #{tpu_custom_call.1} parent=63 // loop_footer_branch
              %2575 = sbr.rel target = $region66
            $region71: #{tpu_custom_call.1} parent=63 // loop_exit
              _
          $region64: #{tpu_custom_call.1} parent=48 // pred_fallthru
            _
          // Predicated region
          $region72: #{tpu_custom_call.1} parent=48 // pred_check
            _
          $region73: #{tpu_custom_call.1} parent=48 // pred_check_branch
            %2834 = sbr.rel target = $region75
          $region74: #{tpu_custom_call.1} parent=48 // pred_region
            _
          $region75: #{tpu_custom_call.1} parent=48 // pred_fallthru
            _
        $region49: #{tpu_custom_call.1} parent=44 // pred_fallthru
          _
        // Predicated region
        $region50: #{tpu_custom_call.1} parent=44 // pred_check
          _
        $region51: #{tpu_custom_call.1} parent=44 // pred_check_branch
          %2313 = sbr.rel target = $region53
        $region52: #{tpu_custom_call.1} parent=44 // pred_region
          loop: start=0, step=1, limit=1
          $region54: #{tpu_custom_call.1} parent=52 // loop_pre_header
            _
          $region55: #{tpu_custom_call.1} parent=52 // loop_header
            %s2316 = sphi 0, %s2320
            %p2317 = scmp.ge.s32.totalorder %s2316, 1
            %s2321 = sphi [#allocation2], [#allocation2]
            %s2322 = sphi %s9, %s9
          $region56: #{tpu_custom_call.1} parent=52 // loop_header_branch
            %2319 = sbr.rel (%p2317) target = $region60
          $region57: #{tpu_custom_call.1} parent=52 // loop_body
            %v2323 = vld [vmem:[%s2321] sm:$0xff]
            %2324 = vst [vmem:[%s2322] sm:$0xff] %v2323
            %v2325 = vld [vmem:[%s2321 + $0x8] sm:$0xff]
            %2326 = vst [vmem:[%s2322 + $0x8] sm:$0xff] %v2325
            %v2327 = vld [vmem:[%s2321 + $0x10] sm:$0xff]
            %2328 = vst [vmem:[%s2322 + $0x10] sm:$0xff] %v2327
            %v2329 = vld [vmem:[%s2321 + $0x18] sm:$0xff]
            %2330 = vst [vmem:[%s2322 + $0x18] sm:$0xff] %v2329
            %v2331 = vld [vmem:[%s2321 + $0x20] sm:$0xff]
            %2332 = vst [vmem:[%s2322 + $0x20] sm:$0xff] %v2331
            %v2333 = vld [vmem:[%s2321 + $0x28] sm:$0xff]
            %2334 = vst [vmem:[%s2322 + $0x28] sm:$0xff] %v2333
            %v2335 = vld [vmem:[%s2321 + $0x30] sm:$0xff]
            %2336 = vst [vmem:[%s2322 + $0x30] sm:$0xff] %v2335
            %v2337 = vld [vmem:[%s2321 + $0x38] sm:$0xff]
            %2338 = vst [vmem:[%s2322 + $0x38] sm:$0xff] %v2337
            %v2339 = vld [vmem:[%s2321 + $0x40] sm:$0xff]
            %2340 = vst [vmem:[%s2322 + $0x40] sm:$0xff] %v2339
            %v2341 = vld [vmem:[%s2321 + $0x48] sm:$0xff]
            %2342 = vst [vmem:[%s2322 + $0x48] sm:$0xff] %v2341
            %v2343 = vld [vmem:[%s2321 + $0x50] sm:$0xff]
            %2344 = vst [vmem:[%s2322 + $0x50] sm:$0xff] %v2343
            %v2345 = vld [vmem:[%s2321 + $0x58] sm:$0xff]
            %2346 = vst [vmem:[%s2322 + $0x58] sm:$0xff] %v2345
            %v2347 = vld [vmem:[%s2321 + $0x60] sm:$0xff]
            %2348 = vst [vmem:[%s2322 + $0x60] sm:$0xff] %v2347
            %v2349 = vld [vmem:[%s2321 + $0x68] sm:$0xff]
            %2350 = vst [vmem:[%s2322 + $0x68] sm:$0xff] %v2349
            %v2351 = vld [vmem:[%s2321 + $0x70] sm:$0xff]
            %2352 = vst [vmem:[%s2322 + $0x70] sm:$0xff] %v2351
            %v2353 = vld [vmem:[%s2321 + $0x78] sm:$0xff]
            %2354 = vst [vmem:[%s2322 + $0x78] sm:$0xff] %v2353
            %v2355 = vld [vmem:[%s2321 + $0x80] sm:$0xff]
            %2356 = vst [vmem:[%s2322 + $0x80] sm:$0xff] %v2355
            %v2357 = vld [vmem:[%s2321 + $0x88] sm:$0xff]
            %2358 = vst [vmem:[%s2322 + $0x88] sm:$0xff] %v2357
            %v2359 = vld [vmem:[%s2321 + $0x90] sm:$0xff]
            %2360 = vst [vmem:[%s2322 + $0x90] sm:$0xff] %v2359
            %v2361 = vld [vmem:[%s2321 + $0x98] sm:$0xff]
            %2362 = vst [vmem:[%s2322 + $0x98] sm:$0xff] %v2361
            %v2363 = vld [vmem:[%s2321 + $0xa0] sm:$0xff]
            %2364 = vst [vmem:[%s2322 + $0xa0] sm:$0xff] %v2363
            %v2365 = vld [vmem:[%s2321 + $0xa8] sm:$0xff]
            %2366 = vst [vmem:[%s2322 + $0xa8] sm:$0xff] %v2365
            %v2367 = vld [vmem:[%s2321 + $0xb0] sm:$0xff]
            %2368 = vst [vmem:[%s2322 + $0xb0] sm:$0xff] %v2367
            %v2369 = vld [vmem:[%s2321 + $0xb8] sm:$0xff]
            %2370 = vst [vmem:[%s2322 + $0xb8] sm:$0xff] %v2369
            %v2371 = vld [vmem:[%s2321 + $0xc0] sm:$0xff]
            %2372 = vst [vmem:[%s2322 + $0xc0] sm:$0xff] %v2371
            %v2373 = vld [vmem:[%s2321 + $0xc8] sm:$0xff]
            %2374 = vst [vmem:[%s2322 + $0xc8] sm:$0xff] %v2373
            %v2375 = vld [vmem:[%s2321 + $0xd0] sm:$0xff]
            %2376 = vst [vmem:[%s2322 + $0xd0] sm:$0xff] %v2375
            %v2377 = vld [vmem:[%s2321 + $0xd8] sm:$0xff]
            %2378 = vst [vmem:[%s2322 + $0xd8] sm:$0xff] %v2377
            %v2379 = vld [vmem:[%s2321 + $0xe0] sm:$0xff]
            %2380 = vst [vmem:[%s2322 + $0xe0] sm:$0xff] %v2379
            %v2381 = vld [vmem:[%s2321 + $0xe8] sm:$0xff]
            %2382 = vst [vmem:[%s2322 + $0xe8] sm:$0xff] %v2381
            %v2383 = vld [vmem:[%s2321 + $0xf0] sm:$0xff]
            %2384 = vst [vmem:[%s2322 + $0xf0] sm:$0xff] %v2383
            %v2385 = vld [vmem:[%s2321 + $0xf8] sm:$0xff]
            %2386 = vst [vmem:[%s2322 + $0xf8] sm:$0xff] %v2385
            %v2387 = vld [vmem:[%s2321 + $0x100] sm:$0xff]
            %2388 = vst [vmem:[%s2322 + $0x100] sm:$0xff] %v2387
            %v2389 = vld [vmem:[%s2321 + $0x108] sm:$0xff]
            %2390 = vst [vmem:[%s2322 + $0x108] sm:$0xff] %v2389
            %v2391 = vld [vmem:[%s2321 + $0x110] sm:$0xff]
            %2392 = vst [vmem:[%s2322 + $0x110] sm:$0xff] %v2391
            %v2393 = vld [vmem:[%s2321 + $0x118] sm:$0xff]
            %2394 = vst [vmem:[%s2322 + $0x118] sm:$0xff] %v2393
            %v2395 = vld [vmem:[%s2321 + $0x120] sm:$0xff]
            %2396 = vst [vmem:[%s2322 + $0x120] sm:$0xff] %v2395
            %v2397 = vld [vmem:[%s2321 + $0x128] sm:$0xff]
            %2398 = vst [vmem:[%s2322 + $0x128] sm:$0xff] %v2397
            %v2399 = vld [vmem:[%s2321 + $0x130] sm:$0xff]
            %2400 = vst [vmem:[%s2322 + $0x130] sm:$0xff] %v2399
            %v2401 = vld [vmem:[%s2321 + $0x138] sm:$0xff]
            %2402 = vst [vmem:[%s2322 + $0x138] sm:$0xff] %v2401
            %v2403 = vld [vmem:[%s2321 + $0x140] sm:$0xff]
            %2404 = vst [vmem:[%s2322 + $0x140] sm:$0xff] %v2403
            %v2405 = vld [vmem:[%s2321 + $0x148] sm:$0xff]
            %2406 = vst [vmem:[%s2322 + $0x148] sm:$0xff] %v2405
            %v2407 = vld [vmem:[%s2321 + $0x150] sm:$0xff]
            %2408 = vst [vmem:[%s2322 + $0x150] sm:$0xff] %v2407
            %v2409 = vld [vmem:[%s2321 + $0x158] sm:$0xff]
            %2410 = vst [vmem:[%s2322 + $0x158] sm:$0xff] %v2409
            %v2411 = vld [vmem:[%s2321 + $0x160] sm:$0xff]
            %2412 = vst [vmem:[%s2322 + $0x160] sm:$0xff] %v2411
            %v2413 = vld [vmem:[%s2321 + $0x168] sm:$0xff]
            %2414 = vst [vmem:[%s2322 + $0x168] sm:$0xff] %v2413
            %v2415 = vld [vmem:[%s2321 + $0x170] sm:$0xff]
            %2416 = vst [vmem:[%s2322 + $0x170] sm:$0xff] %v2415
            %v2417 = vld [vmem:[%s2321 + $0x178] sm:$0xff]
            %2418 = vst [vmem:[%s2322 + $0x178] sm:$0xff] %v2417
            %v2419 = vld [vmem:[%s2321 + $0x180] sm:$0xff]
            %2420 = vst [vmem:[%s2322 + $0x180] sm:$0xff] %v2419
            %v2421 = vld [vmem:[%s2321 + $0x188] sm:$0xff]
            %2422 = vst [vmem:[%s2322 + $0x188] sm:$0xff] %v2421
            %v2423 = vld [vmem:[%s2321 + $0x190] sm:$0xff]
            %2424 = vst [vmem:[%s2322 + $0x190] sm:$0xff] %v2423
            %v2425 = vld [vmem:[%s2321 + $0x198] sm:$0xff]
            %2426 = vst [vmem:[%s2322 + $0x198] sm:$0xff] %v2425
            %v2427 = vld [vmem:[%s2321 + $0x1a0] sm:$0xff]
            %2428 = vst [vmem:[%s2322 + $0x1a0] sm:$0xff] %v2427
            %v2429 = vld [vmem:[%s2321 + $0x1a8] sm:$0xff]
            %2430 = vst [vmem:[%s2322 + $0x1a8] sm:$0xff] %v2429
            %v2431 = vld [vmem:[%s2321 + $0x1b0] sm:$0xff]
            %2432 = vst [vmem:[%s2322 + $0x1b0] sm:$0xff] %v2431
            %v2433 = vld [vmem:[%s2321 + $0x1b8] sm:$0xff]
            %2434 = vst [vmem:[%s2322 + $0x1b8] sm:$0xff] %v2433
            %v2435 = vld [vmem:[%s2321 + $0x1c0] sm:$0xff]
            %2436 = vst [vmem:[%s2322 + $0x1c0] sm:$0xff] %v2435
            %v2437 = vld [vmem:[%s2321 + $0x1c8] sm:$0xff]
            %2438 = vst [vmem:[%s2322 + $0x1c8] sm:$0xff] %v2437
            %v2439 = vld [vmem:[%s2321 + $0x1d0] sm:$0xff]
            %2440 = vst [vmem:[%s2322 + $0x1d0] sm:$0xff] %v2439
            %v2441 = vld [vmem:[%s2321 + $0x1d8] sm:$0xff]
            %2442 = vst [vmem:[%s2322 + $0x1d8] sm:$0xff] %v2441
            %v2443 = vld [vmem:[%s2321 + $0x1e0] sm:$0xff]
            %2444 = vst [vmem:[%s2322 + $0x1e0] sm:$0xff] %v2443
            %v2445 = vld [vmem:[%s2321 + $0x1e8] sm:$0xff]
            %2446 = vst [vmem:[%s2322 + $0x1e8] sm:$0xff] %v2445
            %v2447 = vld [vmem:[%s2321 + $0x1f0] sm:$0xff]
            %2448 = vst [vmem:[%s2322 + $0x1f0] sm:$0xff] %v2447
            %v2449 = vld [vmem:[%s2321 + $0x1f8] sm:$0xff]
            %2450 = vst [vmem:[%s2322 + $0x1f8] sm:$0xff] %v2449
            %v2451 = vld [vmem:[%s2321 + $0x200] sm:$0xff]
            %2452 = vst [vmem:[%s2322 + $0x200] sm:$0xff] %v2451
            %v2453 = vld [vmem:[%s2321 + $0x208] sm:$0xff]
            %2454 = vst [vmem:[%s2322 + $0x208] sm:$0xff] %v2453
            %v2455 = vld [vmem:[%s2321 + $0x210] sm:$0xff]
            %2456 = vst [vmem:[%s2322 + $0x210] sm:$0xff] %v2455
            %v2457 = vld [vmem:[%s2321 + $0x218] sm:$0xff]
            %2458 = vst [vmem:[%s2322 + $0x218] sm:$0xff] %v2457
            %v2459 = vld [vmem:[%s2321 + $0x220] sm:$0xff]
            %2460 = vst [vmem:[%s2322 + $0x220] sm:$0xff] %v2459
            %v2461 = vld [vmem:[%s2321 + $0x228] sm:$0xff]
            %2462 = vst [vmem:[%s2322 + $0x228] sm:$0xff] %v2461
            %v2463 = vld [vmem:[%s2321 + $0x230] sm:$0xff]
            %2464 = vst [vmem:[%s2322 + $0x230] sm:$0xff] %v2463
            %v2465 = vld [vmem:[%s2321 + $0x238] sm:$0xff]
            %2466 = vst [vmem:[%s2322 + $0x238] sm:$0xff] %v2465
            %v2467 = vld [vmem:[%s2321 + $0x240] sm:$0xff]
            %2468 = vst [vmem:[%s2322 + $0x240] sm:$0xff] %v2467
            %v2469 = vld [vmem:[%s2321 + $0x248] sm:$0xff]
            %2470 = vst [vmem:[%s2322 + $0x248] sm:$0xff] %v2469
            %v2471 = vld [vmem:[%s2321 + $0x250] sm:$0xff]
            %2472 = vst [vmem:[%s2322 + $0x250] sm:$0xff] %v2471
            %v2473 = vld [vmem:[%s2321 + $0x258] sm:$0xff]
            %2474 = vst [vmem:[%s2322 + $0x258] sm:$0xff] %v2473
            %v2475 = vld [vmem:[%s2321 + $0x260] sm:$0xff]
            %2476 = vst [vmem:[%s2322 + $0x260] sm:$0xff] %v2475
            %v2477 = vld [vmem:[%s2321 + $0x268] sm:$0xff]
            %2478 = vst [vmem:[%s2322 + $0x268] sm:$0xff] %v2477
            %v2479 = vld [vmem:[%s2321 + $0x270] sm:$0xff]
            %2480 = vst [vmem:[%s2322 + $0x270] sm:$0xff] %v2479
            %v2481 = vld [vmem:[%s2321 + $0x278] sm:$0xff]
            %2482 = vst [vmem:[%s2322 + $0x278] sm:$0xff] %v2481
            %v2483 = vld [vmem:[%s2321 + $0x280] sm:$0xff]
            %2484 = vst [vmem:[%s2322 + $0x280] sm:$0xff] %v2483
            %v2485 = vld [vmem:[%s2321 + $0x288] sm:$0xff]
            %2486 = vst [vmem:[%s2322 + $0x288] sm:$0xff] %v2485
            %v2487 = vld [vmem:[%s2321 + $0x290] sm:$0xff]
            %2488 = vst [vmem:[%s2322 + $0x290] sm:$0xff] %v2487
            %v2489 = vld [vmem:[%s2321 + $0x298] sm:$0xff]
            %2490 = vst [vmem:[%s2322 + $0x298] sm:$0xff] %v2489
            %v2491 = vld [vmem:[%s2321 + $0x2a0] sm:$0xff]
            %2492 = vst [vmem:[%s2322 + $0x2a0] sm:$0xff] %v2491
            %v2493 = vld [vmem:[%s2321 + $0x2a8] sm:$0xff]
            %2494 = vst [vmem:[%s2322 + $0x2a8] sm:$0xff] %v2493
            %v2495 = vld [vmem:[%s2321 + $0x2b0] sm:$0xff]
            %2496 = vst [vmem:[%s2322 + $0x2b0] sm:$0xff] %v2495
            %v2497 = vld [vmem:[%s2321 + $0x2b8] sm:$0xff]
            %2498 = vst [vmem:[%s2322 + $0x2b8] sm:$0xff] %v2497
            %v2499 = vld [vmem:[%s2321 + $0x2c0] sm:$0xff]
            %2500 = vst [vmem:[%s2322 + $0x2c0] sm:$0xff] %v2499
            %v2501 = vld [vmem:[%s2321 + $0x2c8] sm:$0xff]
            %2502 = vst [vmem:[%s2322 + $0x2c8] sm:$0xff] %v2501
            %v2503 = vld [vmem:[%s2321 + $0x2d0] sm:$0xff]
            %2504 = vst [vmem:[%s2322 + $0x2d0] sm:$0xff] %v2503
            %v2505 = vld [vmem:[%s2321 + $0x2d8] sm:$0xff]
            %2506 = vst [vmem:[%s2322 + $0x2d8] sm:$0xff] %v2505
            %v2507 = vld [vmem:[%s2321 + $0x2e0] sm:$0xff]
            %2508 = vst [vmem:[%s2322 + $0x2e0] sm:$0xff] %v2507
            %v2509 = vld [vmem:[%s2321 + $0x2e8] sm:$0xff]
            %2510 = vst [vmem:[%s2322 + $0x2e8] sm:$0xff] %v2509
            %v2511 = vld [vmem:[%s2321 + $0x2f0] sm:$0xff]
            %2512 = vst [vmem:[%s2322 + $0x2f0] sm:$0xff] %v2511
            %v2513 = vld [vmem:[%s2321 + $0x2f8] sm:$0xff]
            %2514 = vst [vmem:[%s2322 + $0x2f8] sm:$0xff] %v2513
            %v2515 = vld [vmem:[%s2321 + $0x300] sm:$0xff]
            %2516 = vst [vmem:[%s2322 + $0x300] sm:$0xff] %v2515
            %v2517 = vld [vmem:[%s2321 + $0x308] sm:$0xff]
            %2518 = vst [vmem:[%s2322 + $0x308] sm:$0xff] %v2517
            %v2519 = vld [vmem:[%s2321 + $0x310] sm:$0xff]
            %2520 = vst [vmem:[%s2322 + $0x310] sm:$0xff] %v2519
            %v2521 = vld [vmem:[%s2321 + $0x318] sm:$0xff]
            %2522 = vst [vmem:[%s2322 + $0x318] sm:$0xff] %v2521
            %v2523 = vld [vmem:[%s2321 + $0x320] sm:$0xff]
            %2524 = vst [vmem:[%s2322 + $0x320] sm:$0xff] %v2523
            %v2525 = vld [vmem:[%s2321 + $0x328] sm:$0xff]
            %2526 = vst [vmem:[%s2322 + $0x328] sm:$0xff] %v2525
            %v2527 = vld [vmem:[%s2321 + $0x330] sm:$0xff]
            %2528 = vst [vmem:[%s2322 + $0x330] sm:$0xff] %v2527
            %v2529 = vld [vmem:[%s2321 + $0x338] sm:$0xff]
            %2530 = vst [vmem:[%s2322 + $0x338] sm:$0xff] %v2529
            %v2531 = vld [vmem:[%s2321 + $0x340] sm:$0xff]
            %2532 = vst [vmem:[%s2322 + $0x340] sm:$0xff] %v2531
            %v2533 = vld [vmem:[%s2321 + $0x348] sm:$0xff]
            %2534 = vst [vmem:[%s2322 + $0x348] sm:$0xff] %v2533
            %v2535 = vld [vmem:[%s2321 + $0x350] sm:$0xff]
            %2536 = vst [vmem:[%s2322 + $0x350] sm:$0xff] %v2535
            %v2537 = vld [vmem:[%s2321 + $0x358] sm:$0xff]
            %2538 = vst [vmem:[%s2322 + $0x358] sm:$0xff] %v2537
            %v2539 = vld [vmem:[%s2321 + $0x360] sm:$0xff]
            %2540 = vst [vmem:[%s2322 + $0x360] sm:$0xff] %v2539
            %v2541 = vld [vmem:[%s2321 + $0x368] sm:$0xff]
            %2542 = vst [vmem:[%s2322 + $0x368] sm:$0xff] %v2541
            %v2543 = vld [vmem:[%s2321 + $0x370] sm:$0xff]
            %2544 = vst [vmem:[%s2322 + $0x370] sm:$0xff] %v2543
            %v2545 = vld [vmem:[%s2321 + $0x378] sm:$0xff]
            %2546 = vst [vmem:[%s2322 + $0x378] sm:$0xff] %v2545
            %v2547 = vld [vmem:[%s2321 + $0x380] sm:$0xff]
            %2548 = vst [vmem:[%s2322 + $0x380] sm:$0xff] %v2547
            %v2549 = vld [vmem:[%s2321 + $0x388] sm:$0xff]
            %2550 = vst [vmem:[%s2322 + $0x388] sm:$0xff] %v2549
            %v2551 = vld [vmem:[%s2321 + $0x390] sm:$0xff]
            %2552 = vst [vmem:[%s2322 + $0x390] sm:$0xff] %v2551
            %v2553 = vld [vmem:[%s2321 + $0x398] sm:$0xff]
            %2554 = vst [vmem:[%s2322 + $0x398] sm:$0xff] %v2553
            %v2555 = vld [vmem:[%s2321 + $0x3a0] sm:$0xff]
            %2556 = vst [vmem:[%s2322 + $0x3a0] sm:$0xff] %v2555
            %v2557 = vld [vmem:[%s2321 + $0x3a8] sm:$0xff]
            %2558 = vst [vmem:[%s2322 + $0x3a8] sm:$0xff] %v2557
            %v2559 = vld [vmem:[%s2321 + $0x3b0] sm:$0xff]
            %2560 = vst [vmem:[%s2322 + $0x3b0] sm:$0xff] %v2559
            %v2561 = vld [vmem:[%s2321 + $0x3b8] sm:$0xff]
            %2562 = vst [vmem:[%s2322 + $0x3b8] sm:$0xff] %v2561
            %v2563 = vld [vmem:[%s2321 + $0x3c0] sm:$0xff]
            %2564 = vst [vmem:[%s2322 + $0x3c0] sm:$0xff] %v2563
            %v2565 = vld [vmem:[%s2321 + $0x3c8] sm:$0xff]
            %2566 = vst [vmem:[%s2322 + $0x3c8] sm:$0xff] %v2565
            %v2567 = vld [vmem:[%s2321 + $0x3d0] sm:$0xff]
            %2568 = vst [vmem:[%s2322 + $0x3d0] sm:$0xff] %v2567
            %v2569 = vld [vmem:[%s2321 + $0x3d8] sm:$0xff]
            %2570 = vst [vmem:[%s2322 + $0x3d8] sm:$0xff] %v2569
            %v2571 = vld [vmem:[%s2321 + $0x3e0] sm:$0xff]
            %2572 = vst [vmem:[%s2322 + $0x3e0] sm:$0xff] %v2571
          $region58: #{tpu_custom_call.1} parent=52 // loop_footer
            %s2320 = sadd.s32 1, %s2316
          $region59: #{tpu_custom_call.1} parent=52 // loop_footer_branch
            %2315 = sbr.rel target = $region55
          $region60: #{tpu_custom_call.1} parent=52 // loop_exit
            _
        $region53: #{tpu_custom_call.1} parent=44 // pred_fallthru
          _
      $region45: #{tpu_custom_call.1} parent=40 // pred_fallthru
        _
      %2835 = vnop
    $region41: #{tpu_custom_call.1} parent=1 // pred_fallthru
      _
    // Predicated region
    $region76: #{tpu_custom_call.1} parent=1 // pred_check
      _
    $region77: #{tpu_custom_call.1} parent=1 // pred_check_branch
      %2837 = sbr.rel (0) target = $region79
    $region78: #{tpu_custom_call.1} parent=1 // pred_region
      _
    $region79: #{tpu_custom_call.1} parent=1 // pred_fallthru
      _

</llo_original>
